<compile_context>
chip_gen: v5e
topology: v5e:2x2
jax: 0.10.0
libtpu: 0.0.40
codegen_flags: <defaults>
</compile_context>

<pallas_src>
import functools
from collections import Counter

import numpy as np
import jax
import jax.numpy as jnp
from jax import lax
from jax.experimental import pallas as pl
from jax.experimental.pallas import tpu as pltpu

TEMPERATURE = 0.07        # CONTRASTIVE_CONFIG['temperature']
MARGIN = 0.3              # CONTRASTIVE_CONFIG['margin']
_INV_T = 1.0 / TEMPERATURE  # |sim| <= 1/T ~= 14.3 -> exp() safe in f32, no max-subtraction needed

_LANE = 128
_SUBLANE = 8
_META_LANES = 128         # per-row metadata, lane-dense: [tid, hid, real, valid, 1/cnt_pos, 0...]
_META_ROWS = 8            # per-column metadata rows: [tid, hid, 0...]
_NEG_FILL = -1e30


def normalize_text(text):
    return str(text).lower().strip()


def _round_up(v, m):
    return ((v + m - 1) // m) * m


# --------------------------------------------------------------------------------------
# generation-aware knobs
# --------------------------------------------------------------------------------------
_VMEM_LIMIT = None


def _vmem_limit_bytes():
    """~3/4 of per-core VMEM (~96 MiB on v5e/v6e, ~48 MiB on v7x); safe 32 MiB fallback."""
    global _VMEM_LIMIT
    if _VMEM_LIMIT is None:
        try:
            cap = int(getattr(pltpu.get_tpu_info(), "vmem_capacity_bytes", 0))
        except Exception:
            cap = 0
        _VMEM_LIMIT = min(cap * 3 // 4, 112 * 1024 * 1024) if cap > 0 else 32 * 1024 * 1024
    return _VMEM_LIMIT


_ROW_TILE = None


def _row_tile():
    """Row tile sized to the MXU: 128 on <=v5 (4x128^2), 256 on v6e/v7x (2x256^2)."""
    global _ROW_TILE
    if _ROW_TILE is None:
        try:
            kind = jax.devices()[0].device_kind.lower()
        except Exception:
            kind = ""
        _ROW_TILE = 128 if any(t in kind for t in ("v2", "v3", "v4", "v5")) else 256
    return _ROW_TILE


# --------------------------------------------------------------------------------------
# kernels
# --------------------------------------------------------------------------------------
def _mm(a, b):    # a[m,k] @ b[k,n], f32 accumulate, default (fast) MXU precision
    return lax.dot_general(a, b, (((1,), (0,)), ((), ())),
                           preferred_element_type=jnp.float32)


def _mm_t(a, b):  # a[m,k] @ b[n,k].T
    return lax.dot_general(a, b, (((1,), (1,)), ((), ())),
                           preferred_element_type=jnp.float32)


def projection_kernel(x_ref, w1_ref, b1_ref, w2_ref, b2_ref, meta_ref, p_ref):
    """Linear -> ReLU -> (Dropout = identity) -> Linear -> F.normalize, one row tile."""
    x = x_ref[...]
    h = jnp.maximum(_mm(x, w1_ref[...]) + b1_ref[...], 0.0)
    p = _mm(h, w2_ref[...]) + b2_ref[...]
    nrm = jnp.sqrt(jnp.sum(p * p, axis=-1, keepdims=True))
    p = p / jnp.maximum(nrm, 1e-12)
    # padded rows (real-flag == 0) are forced to exactly zero so proj_full is clean
    p_ref[...] = p * meta_ref[:, 2:3]


def contrastive_tile_kernel(p_row_ref, p_all_ref, row_meta_ref, col_meta_ref, part_ref):
    tq = p_row_ref.shape[0]
    n = p_all_ref.shape[0]

    # ---- similarity of this row tile vs everything; exp issued once on the EUP ----
    sim = _mm_t(p_row_ref[...], p_all_ref[...]) * _INV_T            # (TQ, N)
    exp_sim = jnp.exp(sim)  # |sim| <= 1/T ~= 14.3 -> exp <= ~1.7e6, safe in f32

    # ---- masks rebuilt from O(N) per-entity ids (fused selects, no f32 mask slabs) ----
    tid_r = row_meta_ref[:, 0:1]        # (TQ, 1): 0 vessel, 1 location, -1 other/pad
    hid_r = row_meta_ref[:, 1:2]        # (TQ, 1): normalized-text id
    valid_r = row_meta_ref[:, 3:4]      # (TQ, 1): row contributes to its type loss
    inv_cnt_pos = row_meta_ref[:, 4:5]  # (TQ, 1): 1 / #positives of this row

    tid_c = col_meta_ref[0:1, :]        # (1, N)
    hid_c = col_meta_ref[1:2, :]        # (1, N)

    row_g = lax.broadcasted_iota(jnp.int32, (tq, n), 0) + pl.program_id(0) * tq
    col_g = lax.broadcasted_iota(jnp.int32, (tq, n), 1)
    off_diag = row_g != col_g

    typed_row = tid_r >= 0.0
    same_type = (tid_r == tid_c) & typed_row
    same_text = hid_r == hid_c
    pos_b = same_type & same_text & off_diag     # same type & same normalized text
    neg_b = same_type & (~same_text)             # same type, different text (diag excluded)

    # ---- per-row masked reductions on the XLU (counts come precomputed from the host) ----
    pos_sum = jnp.sum(jnp.where(pos_b, sim, 0.0), axis=-1, keepdims=True)       # (TQ, 1)
    neg_exp = jnp.sum(jnp.where(neg_b, exp_sim, 0.0), axis=-1, keepdims=True)   # (TQ, 1)

    # -log(exp(mean pos) / sum exp(neg)) = log(sum exp(neg)) - mean(pos)
    row_loss = (jnp.log(jnp.maximum(neg_exp, 1e-30)) - pos_sum * inv_cnt_pos) * valid_r

    is_vessel_r = (tid_r == 0.0).astype(jnp.float32)
    is_loc_r = (tid_r == 1.0).astype(jnp.float32)
    v_part = jnp.sum(row_loss * is_vessel_r, axis=0, keepdims=True)             # (1, 1)
    l_part = jnp.sum(row_loss * is_loc_r, axis=0, keepdims=True)                # (1, 1)

    # ---- cross-type separation: running max over vessel rows x location cols ----
    cross_b = (tid_r == 0.0) & (tid_c == 1.0)
    cmax = jnp.max(jnp.where(cross_b, sim, _NEG_FILL), axis=-1, keepdims=True)  # (TQ, 1)
    cmax = jnp.max(cmax, axis=0, keepdims=True)                                 # (1, 1)

    # lane-dense per-tile partial slab: lane0 = vessel sum, lane1 = location sum, lane2 = max
    lane = lax.broadcasted_iota(jnp.int32, (_SUBLANE, _LANE), 1)
    part_ref[...] = (jnp.where(lane == 0, v_part, 0.0)
                     + jnp.where(lane == 1, l_part, 0.0)
                     + jnp.where(lane == 2, cmax, 0.0))


# --------------------------------------------------------------------------------------
# jitted device wrapper (retraces only per (n_pad, tq) bucket)
# --------------------------------------------------------------------------------------
@functools.partial(jax.jit, static_argnames=("tq",))
def _device_forward(xp, w1, b1, w2, b2, row_meta, col_meta, norms, *, tq):
    n_pad, h_pad = xp.shape
    p_pad = w2.shape[1]
    n_tiles = n_pad // tq
    cparams = pltpu.CompilerParams(dimension_semantics=("parallel",),
                                   vmem_limit_bytes=_vmem_limit_bytes())

    proj = pl.pallas_call(
        projection_kernel,
        out_shape=jax.ShapeDtypeStruct((n_pad, p_pad), jnp.float32),
        grid=(n_tiles,),
        in_specs=[
            pl.BlockSpec((tq, h_pad), lambda i: (i, 0)),
            pl.BlockSpec((h_pad, h_pad), lambda i: (0, 0)),
            pl.BlockSpec((1, h_pad), lambda i: (0, 0)),
            pl.BlockSpec((h_pad, p_pad), lambda i: (0, 0)),
            pl.BlockSpec((1, p_pad), lambda i: (0, 0)),
            pl.BlockSpec((tq, _META_LANES), lambda i: (i, 0)),
        ],
        out_specs=pl.BlockSpec((tq, p_pad), lambda i: (i, 0)),
        compiler_params=cparams,
    )(xp, w1, b1, w2, b2, row_meta)

    partials = pl.pallas_call(
        contrastive_tile_kernel,
        out_shape=jax.ShapeDtypeStruct((n_tiles * _SUBLANE, _LANE), jnp.float32),
        grid=(n_tiles,),
        in_specs=[
            pl.BlockSpec((tq, p_pad), lambda i: (i, 0)),          # this tile's projections
            pl.BlockSpec((n_pad, p_pad), lambda i: (0, 0)),       # all projections (resident)
            pl.BlockSpec((tq, _META_LANES), lambda i: (i, 0)),    # per-row metadata tile
            pl.BlockSpec((_META_ROWS, n_pad), lambda i: (0, 0)),  # per-column ids
        ],
        out_specs=pl.BlockSpec((_SUBLANE, _LANE), lambda i: (i, 0)),
        compiler_params=cparams,
    )(proj, proj, row_meta, col_meta)

    # tiny XLA epilogue: reduce per-tile partials, apply host-computed normalizers / gates
    part = partials.reshape(n_tiles, _SUBLANE, _LANE)[:, 0, :]
    v_sum = jnp.sum(part[:, 0])
    l_sum = jnp.sum(part[:, 1])
    cmax = jnp.max(part[:, 2])
    # norms = [gate_v / n_valid_v, gate_l / n_valid_l, has_both_types]
    loss = (v_sum * norms[0] + l_sum * norms[1]
            + 0.5 * jnp.maximum(cmax - MARGIN, 0.0) * norms[2])
    return proj, loss


# --------------------------------------------------------------------------------------
# host glue
# --------------------------------------------------------------------------------------
def prepare_contrastive_params(params, hidden_size, proj_size):
    """Pad Linear weights once (stored [in, out], pre-transposed vs torch) and upload once."""
    h_pad = _round_up(hidden_size, _LANE)
    p_pad = _round_up(proj_size, _LANE)
    w1 = np.zeros((h_pad, h_pad), np.float32)
    w1[:hidden_size, :hidden_size] = np.asarray(params["w1"], np.float32)
    b1 = np.zeros((1, h_pad), np.float32)
    b1[:, :hidden_size] = np.asarray(params["b1"], np.float32).reshape(1, -1)
    w2 = np.zeros((h_pad, p_pad), np.float32)
    w2[:hidden_size, :proj_size] = np.asarray(params["w2"], np.float32)
    b2 = np.zeros((1, p_pad), np.float32)
    b2[:, :proj_size] = np.asarray(params["b2"], np.float32).reshape(1, -1)
    return {"w1": jnp.asarray(w1), "b1": jnp.asarray(b1),
            "w2": jnp.asarray(w2), "b2": jnp.asarray(b2),
            "h_dim": hidden_size, "p_dim": proj_size, "h_pad": h_pad, "p_pad": p_pad}


def _build_meta(entity_info, n_pad):
    """O(N) per-entity ids, per-row validity / positive-count inverses, per-type normalizers."""
    n = len(entity_info)
    tid = np.full((n_pad,), -1, np.int64)
    hid = np.full((n_pad,), -1, np.int64)
    text_ids = {}
    for i, info in enumerate(entity_info):
        t = info["type"]
        tid[i] = 0 if t == "vessel name" else (1 if t == "location" else -1)
        hid[i] = text_ids.setdefault(normalize_text(info["text"]), len(text_ids))

    mult = Counter((int(tid[i]), int(hid[i])) for i in range(n))
    n_type = Counter(int(tid[i]) for i in range(n))

    row_meta = np.zeros((n_pad, _META_LANES), np.float32)
    row_meta[:, 0] = tid
    row_meta[:, 1] = hid
    row_meta[:n, 2] = 1.0                      # real (non-padded) row flag
    col_meta = np.zeros((_META_ROWS, n_pad), np.float32)
    col_meta[0, :] = tid
    col_meta[1, :] = hid

    n_valid = {0: 0, 1: 0}
    for i in range(n):
        t = int(tid[i])
        if t < 0:
            continue
        m = mult[(t, int(hid[i]))]
        cnt_pos = m - 1                        # other same-type entities with same text
        cnt_neg = n_type[t] - m                # other same-type entities with different text
        if cnt_pos > 0 and cnt_neg > 0:
            row_meta[i, 3] = 1.0
            row_meta[i, 4] = 1.0 / cnt_pos
            n_valid[t] += 1

    n_v, n_l = n_type.get(0, 0), n_type.get(1, 0)
    norms = np.array([
        (1.0 / max(n_valid[0], 1)) if n_v > 1 else 0.0,
        (1.0 / max(n_valid[1], 1)) if n_l > 1 else 0.0,
        1.0 if (n_v > 0 and n_l > 0) else 0.0,
    ], np.float32)
    return row_meta, col_meta, norms


def entity_contrastive_forward(entity_hidden_states, prepared, entity_info):
    x = np.asarray(entity_hidden_states, np.float32)
    n = x.shape[0]
    if n == 0 or not entity_info:
        return jnp.zeros((0, prepared["p_dim"]), jnp.float32), jnp.asarray(0.0, jnp.float32)

    tq = _row_tile()
    n_tiles = int(pl.next_power_of_2(int(pl.cdiv(n, tq))))   # power-of-2 bucket -> few recompiles
    n_pad = n_tiles * tq

    xp = np.zeros((n_pad, prepared["h_pad"]), np.float32)
    xp[:n, :prepared["h_dim"]] = x
    row_meta, col_meta, norms = _build_meta(entity_info, n_pad)

    proj, loss = _device_forward(
        jnp.asarray(xp), prepared["w1"], prepared["b1"], prepared["w2"], prepared["b2"],
        jnp.asarray(row_meta), jnp.asarray(col_meta), jnp.asarray(norms), tq=tq)
    return proj[:n, :prepared["p_dim"]], loss


def entity_aware_gliner_forward(entity_info, hidden_size, prepared, key):
    """Mirror of EntityAwareGLiNER.forward's contrastive branch (base model pass-through)."""
    num_entities = len(entity_info)
    entity_hidden = jax.random.normal(key, (num_entities, hidden_size), jnp.float32)
    proj, contrastive_loss = entity_contrastive_forward(entity_hidden, prepared, entity_info)
    return {"contrastive_loss": contrastive_loss,
            "entity_projections": proj,
            "entity_hidden_states": entity_hidden}


# --------------------------------------------------------------------------------------
# pure-numpy reference (mirrors the PyTorch module)
# --------------------------------------------------------------------------------------
def reference_forward(x, params, entity_info):
    w1 = np.asarray(params["w1"], np.float32); b1 = np.asarray(params["b1"], np.float32)
    w2 = np.asarray(params["w2"], np.float32); b2 = np.asarray(params["b2"], np.float32)
    h = np.maximum(x @ w1 + b1, 0.0)
    p = h @ w2 + b2
    p = p / np.maximum(np.linalg.norm(p, axis=-1, keepdims=True), 1e-12)

    types = [e["type"] for e in entity_info]
    texts = [normalize_text(e["text"]) for e in entity_info]

    def type_loss(idx):
        pr = p[idx]
        sim = pr @ pr.T / TEMPERATURE
        m = len(idx)
        pos_mask = np.zeros((m, m), bool)
        for a in range(m):
            for b in range(a + 1, m):
                if texts[idx[a]] == texts[idx[b]]:
                    pos_mask[a, b] = pos_mask[b, a] = True
        losses = []
        for a in range(m):
            pos_i = np.where(pos_mask[a])[0]
            neg_i = np.where(~pos_mask[a])[0]
            neg_i = neg_i[neg_i != a]
            if len(pos_i) > 0 and len(neg_i) > 0:
                pos_sim = sim[a, pos_i].mean()
                losses.append(-np.log(np.exp(pos_sim) / np.exp(sim[a, neg_i]).sum()))
        return float(np.mean(losses)) if losses else 0.0

    vidx = [i for i, t in enumerate(types) if t == "vessel name"]
    lidx = [i for i, t in enumerate(types) if t == "location"]
    total = 0.0
    if len(vidx) > 1:
        total += type_loss(vidx)
    if len(lidx) > 1:
        total += type_loss(lidx)
    if vidx and lidx:
        cross = p[vidx] @ p[lidx].T / TEMPERATURE
        total += 0.5 * max(float(cross.max()) - MARGIN, 0.0)
    return p, total


if __name__ == "__main__":
    H = 32    # base-model hidden size (small synthetic)
    P = 32    # contrastive projection size (small synthetic)

    key = jax.random.PRNGKey(0)
    k1, k2, k3, k4, k5 = jax.random.split(key, 5)
    params = {
        "w1": np.asarray(jax.random.normal(k1, (H, H), jnp.float32)) * 0.1,
        "b1": np.asarray(jax.random.normal(k2, (1, H), jnp.float32)) * 0.1,
        "w2": np.asarray(jax.random.normal(k3, (H, P), jnp.float32)) * 0.1,
        "b2": np.asarray(jax.random.normal(k4, (1, P), jnp.float32)) * 0.1,
    }

    entity_info = [
        {"text": "Ever Given",      "type": "vessel name"},
        {"text": "ever given ",     "type": "vessel name"},
        {"text": "Maersk Alabama",  "type": "vessel name"},
        {"text": "MSC Oscar",       "type": "vessel name"},
        {"text": "Rotterdam",       "type": "location"},
        {"text": " rotterdam",      "type": "location"},
        {"text": "Singapore",       "type": "location"},
        {"text": "Shanghai",        "type": "location"},
    ]

    prepared = prepare_contrastive_params(params, H, P)
    outputs = entity_aware_gliner_forward(entity_info, H, prepared, k5)
    jax.block_until_ready(outputs["contrastive_loss"])
    jax.block_until_ready(outputs["entity_projections"])

    loss_val = float(outputs["contrastive_loss"])
    proj_val = np.asarray(outputs["entity_projections"])
    x_np = np.asarray(outputs["entity_hidden_states"], np.float32)
    ref_proj, ref_loss = reference_forward(x_np, params, entity_info)

    assert np.isfinite(loss_val), "kernel produced non-finite loss"
    # Default (bf16-pass) MXU precision -> slightly looser tolerance than f32-exact.
    np.testing.assert_allclose(proj_val, ref_proj, rtol=0.0, atol=3e-2)
    assert abs(loss_val - ref_loss) <= 0.15 + 0.05 * abs(ref_loss), (loss_val, ref_loss)
    print("KERNEL_OK")
</pallas_src>

<mosaic_0001>
module attributes {stable_mosaic.version = 11 : i64} {
  func.func @projection_kernel(%arg0: i32, %arg1: memref<256x128xf32, #tpu.memory_space<vmem>>, %arg2: memref<128x128xf32, #tpu.memory_space<vmem>>, %arg3: memref<1x128xf32, #tpu.memory_space<vmem>>, %arg4: memref<128x128xf32, #tpu.memory_space<vmem>>, %arg5: memref<1x128xf32, #tpu.memory_space<vmem>>, %arg6: memref<256x128xf32, #tpu.memory_space<vmem>>, %arg7: memref<256x128xf32, #tpu.memory_space<vmem>>) attributes {dimension_semantics = [#tpu.dimension_semantics<parallel>], iteration_bounds = array<i64: 1>, scalar_prefetch = 0 : i64, scratch_operands = 0 : i64, tpu.core_type = #tpu.core_type<tc>, window_params = [{transform_indices = @transform_0, window_bounds = array<i64: 256, 128>}, {pipeline_mode = #tpu.pipeline_mode<synchronous>, transform_indices = @transform_1, window_bounds = array<i64: 128, 128>}, {pipeline_mode = #tpu.pipeline_mode<synchronous>, transform_indices = @transform_2, window_bounds = array<i64: 1, 128>}, {pipeline_mode = #tpu.pipeline_mode<synchronous>, transform_indices = @transform_3, window_bounds = array<i64: 128, 128>}, {pipeline_mode = #tpu.pipeline_mode<synchronous>, transform_indices = @transform_4, window_bounds = array<i64: 1, 128>}, {transform_indices = @transform_5, window_bounds = array<i64: 256, 128>}, {transform_indices = @transform_6, window_bounds = array<i64: 256, 128>}]} {
    %c0 = arith.constant 0 : index
    %c0_0 = arith.constant 0 : index
    %0 = vector.load %arg1[%c0, %c0_0] : memref<256x128xf32, #tpu.memory_space<vmem>>, vector<256x128xf32>
    %c0_1 = arith.constant 0 : index
    %c0_2 = arith.constant 0 : index
    %1 = vector.load %arg2[%c0_1, %c0_2] : memref<128x128xf32, #tpu.memory_space<vmem>>, vector<128x128xf32>
    %cst = arith.constant dense<0.000000e+00> : vector<256x128xf32>
    %2 = tpu.matmul %0, %1, %cst {dimension_numbers = #tpu.dot_dimension_numbers<[1], [0], [0], [1], [0, 0, 1, 1], [], []>} : vector<256x128xf32>, vector<128x128xf32>, vector<256x128xf32> -> vector<256x128xf32>
    %c0_3 = arith.constant 0 : index
    %c0_4 = arith.constant 0 : index
    %3 = vector.load %arg3[%c0_3, %c0_4] : memref<1x128xf32, #tpu.memory_space<vmem>>, vector<1x128xf32>
    %4 = vector.broadcast %3 : vector<1x128xf32> to vector<256x128xf32>
    %5 = arith.addf %2, %4 : vector<256x128xf32>
    %cst_5 = arith.constant 0.000000e+00 : f32
    %6 = vector.broadcast %cst_5 : f32 to vector<256x128xf32>
    %7 = arith.maximumf %5, %6 : vector<256x128xf32>
    %c0_6 = arith.constant 0 : index
    %c0_7 = arith.constant 0 : index
    %8 = vector.load %arg4[%c0_6, %c0_7] : memref<128x128xf32, #tpu.memory_space<vmem>>, vector<128x128xf32>
    %cst_8 = arith.constant dense<0.000000e+00> : vector<256x128xf32>
    %9 = tpu.matmul %7, %8, %cst_8 {dimension_numbers = #tpu.dot_dimension_numbers<[1], [0], [0], [1], [0, 0, 1, 1], [], []>} : vector<256x128xf32>, vector<128x128xf32>, vector<256x128xf32> -> vector<256x128xf32>
    %c0_9 = arith.constant 0 : index
    %c0_10 = arith.constant 0 : index
    %10 = vector.load %arg5[%c0_9, %c0_10] : memref<1x128xf32, #tpu.memory_space<vmem>>, vector<1x128xf32>
    %11 = vector.broadcast %10 : vector<1x128xf32> to vector<256x128xf32>
    %12 = arith.addf %9, %11 : vector<256x128xf32>
    %13 = arith.mulf %12, %12 : vector<256x128xf32>
    %cst_11 = arith.constant dense<0.000000e+00> : vector<256xf32>
    %14 = vector.multi_reduction <add>, %13, %cst_11 [1] : vector<256x128xf32> to vector<256xf32>
    %15 = vector.shape_cast %14 : vector<256xf32> to vector<256x1xf32>
    %16 = math.sqrt %15 : vector<256x1xf32>
    %cst_12 = arith.constant 9.99999996E-13 : f32
    %17 = vector.broadcast %cst_12 : f32 to vector<256x1xf32>
    %18 = arith.maximumf %16, %17 : vector<256x1xf32>
    %19 = vector.broadcast %18 : vector<256x1xf32> to vector<256x128xf32>
    %20 = arith.divf %12, %19 : vector<256x128xf32>
    %c0_13 = arith.constant 0 : index
    %c2 = arith.constant 2 : index
    %21 = vector.load %arg6[%c0_13, %c2] : memref<256x128xf32, #tpu.memory_space<vmem>>, vector<256x1xf32>
    %22 = vector.broadcast %21 : vector<256x1xf32> to vector<256x128xf32>
    %23 = arith.mulf %20, %22 : vector<256x128xf32>
    %c0_14 = arith.constant 0 : index
    %c0_15 = arith.constant 0 : index
    %24 = vector.load %arg7[%c0_14, %c0_15] : memref<256x128xf32, #tpu.memory_space<vmem>>, vector<256x128xf32>
    tpu.vector_store %arg7[%c0_14, %c0_15], %23 {strides = array<i32>} : memref<256x128xf32, #tpu.memory_space<vmem>>, vector<256x128xf32>,
    return
  }
  func.func @transform_0(%arg0: i32) -> (i32, i32) {
    %c0_i32 = arith.constant 0 : i32
    %c0_i32_0 = arith.constant 0 : i32
    return %arg0, %c0_i32 : i32, i32
  }
  func.func @transform_1(%arg0: i32) -> (i32, i32) {
    %c0_i32 = arith.constant 0 : i32
    %c0_i32_0 = arith.constant 0 : i32
    %c0_i32_1 = arith.constant 0 : i32
    return %c0_i32, %c0_i32_0 : i32, i32
  }
  func.func @transform_2(%arg0: i32) -> (i32, i32) {
    %c0_i32 = arith.constant 0 : i32
    %c0_i32_0 = arith.constant 0 : i32
    %c0_i32_1 = arith.constant 0 : i32
    return %c0_i32, %c0_i32_0 : i32, i32
  }
  func.func @transform_3(%arg0: i32) -> (i32, i32) {
    %c0_i32 = arith.constant 0 : i32
    %c0_i32_0 = arith.constant 0 : i32
    %c0_i32_1 = arith.constant 0 : i32
    return %c0_i32, %c0_i32_0 : i32, i32
  }
  func.func @transform_4(%arg0: i32) -> (i32, i32) {
    %c0_i32 = arith.constant 0 : i32
    %c0_i32_0 = arith.constant 0 : i32
    %c0_i32_1 = arith.constant 0 : i32
    return %c0_i32, %c0_i32_0 : i32, i32
  }
  func.func @transform_5(%arg0: i32) -> (i32, i32) {
    %c0_i32 = arith.constant 0 : i32
    %c0_i32_0 = arith.constant 0 : i32
    return %arg0, %c0_i32 : i32, i32
  }
  func.func @transform_6(%arg0: i32) -> (i32, i32) {
    %c0_i32 = arith.constant 0 : i32
    %c0_i32_0 = arith.constant 0 : i32
    return %arg0, %c0_i32 : i32, i32
  }
}

module attributes {stable_mosaic.version = 11 : i64} {
  func.func @contrastive_tile_kernel(%arg0: i32, %arg1: memref<256x128xf32, #tpu.memory_space<vmem>>, %arg2: memref<256x128xf32, #tpu.memory_space<vmem>>, %arg3: memref<256x128xf32, #tpu.memory_space<vmem>>, %arg4: memref<8x256xf32, #tpu.memory_space<vmem>>, %arg5: memref<8x128xf32, #tpu.memory_space<vmem>>) attributes {dimension_semantics = [#tpu.dimension_semantics<parallel>], iteration_bounds = array<i64: 1>, scalar_prefetch = 0 : i64, scratch_operands = 0 : i64, tpu.core_type = #tpu.core_type<tc>, window_params = [{transform_indices = @transform_0, window_bounds = array<i64: 256, 128>}, {pipeline_mode = #tpu.pipeline_mode<synchronous>, transform_indices = @transform_1, window_bounds = array<i64: 256, 128>}, {transform_indices = @transform_2, window_bounds = array<i64: 256, 128>}, {pipeline_mode = #tpu.pipeline_mode<synchronous>, transform_indices = @transform_3, window_bounds = array<i64: 8, 256>}, {transform_indices = @transform_4, window_bounds = array<i64: 8, 128>}]} {
    %c0 = arith.constant 0 : index
    %c0_0 = arith.constant 0 : index
    %0 = vector.load %arg1[%c0, %c0_0] : memref<256x128xf32, #tpu.memory_space<vmem>>, vector<256x128xf32>
    %c0_1 = arith.constant 0 : index
    %c0_2 = arith.constant 0 : index
    %1 = vector.load %arg2[%c0_1, %c0_2] : memref<256x128xf32, #tpu.memory_space<vmem>>, vector<256x128xf32>
    %cst = arith.constant dense<0.000000e+00> : vector<256x256xf32>
    %2 = tpu.matmul %0, %1, %cst {dimension_numbers = #tpu.dot_dimension_numbers<[1], [1], [0], [0], [0, 0, 1, 0], [], []>} : vector<256x128xf32>, vector<256x128xf32>, vector<256x256xf32> -> vector<256x256xf32>
    %cst_3 = arith.constant 14.2857141 : f32
    %3 = vector.broadcast %cst_3 : f32 to vector<256x256xf32>
    %4 = arith.mulf %2, %3 : vector<256x256xf32>
    %5 = math.exp %4 : vector<256x256xf32>
    %c0_4 = arith.constant 0 : index
    %c0_5 = arith.constant 0 : index
    %6 = vector.load %arg3[%c0_4, %c0_5] : memref<256x128xf32, #tpu.memory_space<vmem>>, vector<256x1xf32>
    %c0_6 = arith.constant 0 : index
    %c1 = arith.constant 1 : index
    %7 = vector.load %arg3[%c0_6, %c1] : memref<256x128xf32, #tpu.memory_space<vmem>>, vector<256x1xf32>
    %c0_7 = arith.constant 0 : index
    %c3 = arith.constant 3 : index
    %8 = vector.load %arg3[%c0_7, %c3] : memref<256x128xf32, #tpu.memory_space<vmem>>, vector<256x1xf32>
    %c0_8 = arith.constant 0 : index
    %c4 = arith.constant 4 : index
    %9 = vector.load %arg3[%c0_8, %c4] : memref<256x128xf32, #tpu.memory_space<vmem>>, vector<256x1xf32>
    %c0_9 = arith.constant 0 : index
    %c0_10 = arith.constant 0 : index
    %10 = vector.load %arg4[%c0_9, %c0_10] : memref<8x256xf32, #tpu.memory_space<vmem>>, vector<1x256xf32>
    %c1_11 = arith.constant 1 : index
    %c0_12 = arith.constant 0 : index
    %11 = vector.load %arg4[%c1_11, %c0_12] : memref<8x256xf32, #tpu.memory_space<vmem>>, vector<1x256xf32>
    %12 = tpu.iota {dimensions = array<i32: 0>} : vector<256x256xi32>
    %c256_i32 = arith.constant 256 : i32
    %13 = arith.muli %arg0, %c256_i32 : i32
    %14 = vector.broadcast %13 : i32 to vector<256x256xi32>
    %15 = arith.addi %12, %14 : vector<256x256xi32>
    %16 = tpu.iota {dimensions = array<i32: 1>} : vector<256x256xi32>
    %17 = arith.cmpi ne, %15, %16 : vector<256x256xi32>
    %cst_13 = arith.constant 0.000000e+00 : f32
    %18 = vector.broadcast %cst_13 : f32 to vector<256x1xf32>
    %19 = arith.cmpf oge, %6, %18 : vector<256x1xf32>
    %20 = vector.broadcast %6 : vector<256x1xf32> to vector<256x256xf32>
    %21 = vector.broadcast %10 : vector<1x256xf32> to vector<256x256xf32>
    %22 = arith.cmpf oeq, %20, %21 : vector<256x256xf32>
    %23 = vector.broadcast %19 : vector<256x1xi1> to vector<256x256xi1>
    %24 = arith.andi %22, %23 : vector<256x256xi1>
    %25 = vector.broadcast %7 : vector<256x1xf32> to vector<256x256xf32>
    %26 = vector.broadcast %11 : vector<1x256xf32> to vector<256x256xf32>
    %27 = arith.cmpf oeq, %25, %26 : vector<256x256xf32>
    %28 = arith.andi %24, %27 : vector<256x256xi1>
    %29 = arith.andi %28, %17 : vector<256x256xi1>
    %cst_14 = arith.constant dense<true> : vector<256x256xi1>
    %30 = arith.xori %27, %cst_14 : vector<256x256xi1>
    %31 = arith.andi %24, %30 : vector<256x256xi1>
    %cst_15 = arith.constant 0.000000e+00 : f32
    %32 = vector.broadcast %cst_15 : f32 to vector<256x256xf32>
    %33 = arith.select %29, %4, %32 : vector<256x256xi1>, vector<256x256xf32>
    %cst_16 = arith.constant dense<0.000000e+00> : vector<256xf32>
    %34 = vector.multi_reduction <add>, %33, %cst_16 [1] : vector<256x256xf32> to vector<256xf32>
    %35 = vector.shape_cast %34 : vector<256xf32> to vector<256x1xf32>
    %cst_17 = arith.constant 0.000000e+00 : f32
    %36 = vector.broadcast %cst_17 : f32 to vector<256x256xf32>
    %37 = arith.select %31, %5, %36 : vector<256x256xi1>, vector<256x256xf32>
    %cst_18 = arith.constant dense<0.000000e+00> : vector<256xf32>
    %38 = vector.multi_reduction <add>, %37, %cst_18 [1] : vector<256x256xf32> to vector<256xf32>
    %39 = vector.shape_cast %38 : vector<256xf32> to vector<256x1xf32>
    %cst_19 = arith.constant 1.000000e-30 : f32
    %40 = vector.broadcast %cst_19 : f32 to vector<256x1xf32>
    %41 = arith.maximumf %39, %40 : vector<256x1xf32>
    %42 = math.log %41 : vector<256x1xf32>
    %43 = arith.mulf %35, %9 : vector<256x1xf32>
    %44 = arith.subf %42, %43 : vector<256x1xf32>
    %45 = arith.mulf %44, %8 : vector<256x1xf32>
    %cst_20 = arith.constant 0.000000e+00 : f32
    %46 = vector.broadcast %cst_20 : f32 to vector<256x1xf32>
    %47 = arith.cmpf oeq, %6, %46 : vector<256x1xf32>
    %48 = arith.extui %47 : vector<256x1xi1> to vector<256x1xi32>
    %49 = arith.sitofp %48 : vector<256x1xi32> to vector<256x1xf32>
    %cst_21 = arith.constant 1.000000e+00 : f32
    %50 = vector.broadcast %cst_21 : f32 to vector<256x1xf32>
    %51 = arith.cmpf oeq, %6, %50 : vector<256x1xf32>
    %52 = arith.extui %51 : vector<256x1xi1> to vector<256x1xi32>
    %53 = arith.sitofp %52 : vector<256x1xi32> to vector<256x1xf32>
    %54 = arith.mulf %45, %49 : vector<256x1xf32>
    %cst_22 = arith.constant dense<0.000000e+00> : vector<1xf32>
    %55 = vector.multi_reduction <add>, %54, %cst_22 [0] : vector<256x1xf32> to vector<1xf32>
    %56 = vector.shape_cast %55 : vector<1xf32> to vector<1x1xf32>
    %57 = arith.mulf %45, %53 : vector<256x1xf32>
    %cst_23 = arith.constant dense<0.000000e+00> : vector<1xf32>
    %58 = vector.multi_reduction <add>, %57, %cst_23 [0] : vector<256x1xf32> to vector<1xf32>
    %59 = vector.shape_cast %58 : vector<1xf32> to vector<1x1xf32>
    %cst_24 = arith.constant 0.000000e+00 : f32
    %60 = vector.broadcast %cst_24 : f32 to vector<256x1xf32>
    %61 = arith.cmpf oeq, %6, %60 : vector<256x1xf32>
    %cst_25 = arith.constant 1.000000e+00 : f32
    %62 = vector.broadcast %cst_25 : f32 to vector<1x256xf32>
    %63 = arith.cmpf oeq, %10, %62 : vector<1x256xf32>
    %64 = vector.broadcast %61 : vector<256x1xi1> to vector<256x256xi1>
    %65 = vector.broadcast %63 : vector<1x256xi1> to vector<256x256xi1>
    %66 = arith.andi %64, %65 : vector<256x256xi1>
    %cst_26 = arith.constant -1.000000e+30 : f32
    %67 = vector.broadcast %cst_26 : f32 to vector<256x256xf32>
    %68 = arith.select %66, %4, %67 : vector<256x256xi1>, vector<256x256xf32>
    %cst_27 = arith.constant dense<0xFF800000> : vector<256xf32>
    %69 = vector.multi_reduction <maximumf>, %68, %cst_27 [1] : vector<256x256xf32> to vector<256xf32>
    %70 = vector.shape_cast %69 : vector<256xf32> to vector<256x1xf32>
    %cst_28 = arith.constant dense<0xFF800000> : vector<1xf32>
    %71 = vector.multi_reduction <maximumf>, %70, %cst_28 [0] : vector<256x1xf32> to vector<1xf32>
    %72 = vector.shape_cast %71 : vector<1xf32> to vector<1x1xf32>
    %73 = tpu.iota {dimensions = array<i32: 1>} : vector<8x128xi32>
    %c0_i32 = arith.constant 0 : i32
    %74 = vector.broadcast %c0_i32 : i32 to vector<8x128xi32>
    %75 = arith.cmpi eq, %73, %74 : vector<8x128xi32>
    %cst_29 = arith.constant 0.000000e+00 : f32
    %76 = vector.shape_cast %56 : vector<1x1xf32> to vector<1x1xf32>
    %77 = vector.broadcast %76 : vector<1x1xf32> to vector<8x128xf32>
    %78 = vector.broadcast %cst_29 : f32 to vector<8x128xf32>
    %79 = arith.select %75, %77, %78 : vector<8x128xi1>, vector<8x128xf32>
    %c1_i32 = arith.constant 1 : i32
    %80 = vector.broadcast %c1_i32 : i32 to vector<8x128xi32>
    %81 = arith.cmpi eq, %73, %80 : vector<8x128xi32>
    %cst_30 = arith.constant 0.000000e+00 : f32
    %82 = vector.shape_cast %59 : vector<1x1xf32> to vector<1x1xf32>
    %83 = vector.broadcast %82 : vector<1x1xf32> to vector<8x128xf32>
    %84 = vector.broadcast %cst_30 : f32 to vector<8x128xf32>
    %85 = arith.select %81, %83, %84 : vector<8x128xi1>, vector<8x128xf32>
    %86 = arith.addf %79, %85 : vector<8x128xf32>
    %c2_i32 = arith.constant 2 : i32
    %87 = vector.broadcast %c2_i32 : i32 to vector<8x128xi32>
    %88 = arith.cmpi eq, %73, %87 : vector<8x128xi32>
    %cst_31 = arith.constant 0.000000e+00 : f32
    %89 = vector.shape_cast %72 : vector<1x1xf32> to vector<1x1xf32>
    %90 = vector.broadcast %89 : vector<1x1xf32> to vector<8x128xf32>
    %91 = vector.broadcast %cst_31 : f32 to vector<8x128xf32>
    %92 = arith.select %88, %90, %91 : vector<8x128xi1>, vector<8x128xf32>
    %93 = arith.addf %86, %92 : vector<8x128xf32>
    %c0_32 = arith.constant 0 : index
    %c0_33 = arith.constant 0 : index
    %94 = vector.load %arg5[%c0_32, %c0_33] : memref<8x128xf32, #tpu.memory_space<vmem>>, vector<8x128xf32>
    tpu.vector_store %arg5[%c0_32, %c0_33], %93 {strides = array<i32>} : memref<8x128xf32, #tpu.memory_space<vmem>>, vector<8x128xf32>,
    return
  }
  func.func @transform_0(%arg0: i32) -> (i32, i32) {
    %c0_i32 = arith.constant 0 : i32
    %c0_i32_0 = arith.constant 0 : i32
    return %arg0, %c0_i32 : i32, i32
  }
  func.func @transform_1(%arg0: i32) -> (i32, i32) {
    %c0_i32 = arith.constant 0 : i32
    %c0_i32_0 = arith.constant 0 : i32
    %c0_i32_1 = arith.constant 0 : i32
    return %c0_i32, %c0_i32_0 : i32, i32
  }
  func.func @transform_2(%arg0: i32) -> (i32, i32) {
    %c0_i32 = arith.constant 0 : i32
    %c0_i32_0 = arith.constant 0 : i32
    return %arg0, %c0_i32 : i32, i32
  }
  func.func @transform_3(%arg0: i32) -> (i32, i32) {
    %c0_i32 = arith.constant 0 : i32
    %c0_i32_0 = arith.constant 0 : i32
    %c0_i32_1 = arith.constant 0 : i32
    return %c0_i32, %c0_i32_0 : i32, i32
  }
  func.func @transform_4(%arg0: i32) -> (i32, i32) {
    %c0_i32 = arith.constant 0 : i32
    %c0_i32_0 = arith.constant 0 : i32
    return %arg0, %c0_i32 : i32, i32
  }
}

</mosaic_0001>

<llo_original>
// kernel: _device_forward.2
$region0: #{_device_forward.2}
  #allocation0 [shape = 'u32[]', space=smem, size = 0x4, offset = 0x4, fixed_abs, tag = 'smem constant byte address 0x4 - core index']
  #allocation1 [shape = 'u32[72,128]{1,0:T(1,128)}', space=vmem, size = 0x9000, scoped, tag = 'internal scratch']
  %s0 = inlined_call_operand.hbm [shape: f32[256,128], index: 0, kind: input, shape index: {}]
  %s1 = inlined_call_operand.hbm [shape: f32[128,128], index: 1, kind: input, shape index: {}]
  %s2 = inlined_call_operand.vmem [shape: f32[1,128], index: 2, kind: input, shape index: {}]
  %s3 = inlined_call_operand.hbm [shape: f32[128,128], index: 3, kind: input, shape index: {}]
  %s4 = inlined_call_operand.vmem [shape: f32[1,128], index: 4, kind: input, shape index: {}]
  %s5 = inlined_call_operand.hbm [shape: f32[256,128], index: 5, kind: input, shape index: {}]
  %s6 = inlined_call_operand.vmem [shape: f32[256,128], index: 6, kind: output, shape index: {}]
  %s7 = sld [smem:[#allocation0]]
  $region50: #{_device_forward.2} parent=0
    _
  %s9 = ssub.s32 1, %s7
  %s10 = scalar_select 0, %s9, %s7
  $region1: #{_device_forward.2} parent=0
    #allocation2 [shape = 'u8[131072]{0}', space=vmem, size = 0x20000, scoped, tag = 'input window, operand 0, single buffered']
    #allocation3 [shape = 's32[1]{0}', space=sflag, size = 0x4, scoped, tag = 'scoped memory for _device_forward.2']
    #allocation4 [shape = 'u8[65536]{0}', space=vmem, size = 0x10000, scoped, tag = 'input window, operand 1, single buffered']
    #allocation5 [shape = 's32[1]{0}', space=sflag, size = 0x4, scoped, tag = 'scoped memory for _device_forward.2']
    #allocation6 [shape = 'u8[65536]{0}', space=vmem, size = 0x10000, scoped, tag = 'input window, operand 3, single buffered']
    #allocation7 [shape = 'u8[131072]{0}', space=vmem, size = 0x20000, scoped, tag = 'input window, operand 5, single buffered']
    #allocation8 [shape = 's32[1]{0}', space=sflag, size = 0x4, scoped, tag = 'scoped memory for _device_forward.2']
    %11 = vsyncpa [#allocation3], 0
    %12 = vsyncpa [#allocation5], 0
    %13 = vsyncpa [#allocation8], 0
    // Predicated region
    $region2: #{_device_forward.2} parent=1 // pred_check
      _
    $region3: #{_device_forward.2} parent=1 // pred_check_branch
      %15 = sbr.rel (0) target = $region5
    $region4: #{_device_forward.2} parent=1 // pred_region
      %17 = vsyncadd [#allocation3], 0
      %s18 = sshll.u32 %s0, 4
      %s19 = int_to_ptr.hbm [resolvable:$true] %s18
      %s20 = sshll.u32 [#allocation2], 4
      %s21 = int_to_ptr.vmem [resolvable:$true] %s20
      %26 = dma.hbm_to_vmem [thread:$0]  %s19, 4096, %s21, [#allocation3], 128, 128, 8
    $region5: #{_device_forward.2} parent=1 // pred_fallthru
      _
    // Predicated region
    $region6: #{_device_forward.2} parent=1 // pred_check
      _
    $region7: #{_device_forward.2} parent=1 // pred_check_branch
      %28 = sbr.rel (0) target = $region9
    $region8: #{_device_forward.2} parent=1 // pred_region
      %30 = vsyncadd [#allocation5], 0
      %s31 = sshll.u32 %s1, 4
      %s32 = int_to_ptr.hbm [resolvable:$true] %s31
      %s33 = sshll.u32 [#allocation4], 4
      %s34 = int_to_ptr.vmem [resolvable:$true] %s33
      %39 = dma.hbm_to_vmem [thread:$0]  %s32, 2048, %s34, [#allocation5], 128, 128, 8
    $region9: #{_device_forward.2} parent=1 // pred_fallthru
      _
    // Predicated region
    $region10: #{_device_forward.2} parent=1 // pred_check
      _
    $region11: #{_device_forward.2} parent=1 // pred_check_branch
      %41 = sbr.rel (0) target = $region13
    $region12: #{_device_forward.2} parent=1 // pred_region
      _
    $region13: #{_device_forward.2} parent=1 // pred_fallthru
      _
    // Predicated region
    $region14: #{_device_forward.2} parent=1 // pred_check
      _
    $region15: #{_device_forward.2} parent=1 // pred_check_branch
      %43 = sbr.rel (0) target = $region17
    $region16: #{_device_forward.2} parent=1 // pred_region
      %45 = vsyncadd [#allocation5], 0
      %s46 = sshll.u32 %s3, 4
      %s47 = int_to_ptr.hbm [resolvable:$true] %s46
      %s48 = sshll.u32 [#allocation6], 4
      %s49 = int_to_ptr.vmem [resolvable:$true] %s48
      %54 = dma.hbm_to_vmem [thread:$0]  %s47, 2048, %s49, [#allocation5], 128, 128, 8
    $region17: #{_device_forward.2} parent=1 // pred_fallthru
      _
    // Predicated region
    $region18: #{_device_forward.2} parent=1 // pred_check
      _
    $region19: #{_device_forward.2} parent=1 // pred_check_branch
      %56 = sbr.rel (0) target = $region21
    $region20: #{_device_forward.2} parent=1 // pred_region
      _
    $region21: #{_device_forward.2} parent=1 // pred_fallthru
      _
    // Predicated region
    $region22: #{_device_forward.2} parent=1 // pred_check
      _
    $region23: #{_device_forward.2} parent=1 // pred_check_branch
      %58 = sbr.rel (0) target = $region25
    $region24: #{_device_forward.2} parent=1 // pred_region
      %60 = vsyncadd [#allocation8], 0
      %s61 = sshll.u32 %s5, 4
      %s62 = int_to_ptr.hbm [resolvable:$true] %s61
      %s63 = sshll.u32 [#allocation7], 4
      %s64 = int_to_ptr.vmem [resolvable:$true] %s63
      %69 = dma.hbm_to_vmem [thread:$0]  %s62, 4096, %s64, [#allocation8], 128, 128, 8
    $region25: #{_device_forward.2} parent=1 // pred_fallthru
      _
    // Predicated region
    $region26: #{_device_forward.2} parent=1 // pred_check
      _
    $region27: #{_device_forward.2} parent=1 // pred_check_branch
      %71 = sbr.rel (0) target = $region29
    $region28: #{_device_forward.2} parent=1 // pred_region
      %73 = dma.done [#allocation3], 4096
    $region29: #{_device_forward.2} parent=1 // pred_fallthru
      _
    // Predicated region
    $region30: #{_device_forward.2} parent=1 // pred_check
      _
    $region31: #{_device_forward.2} parent=1 // pred_check_branch
      %75 = sbr.rel (0) target = $region33
    $region32: #{_device_forward.2} parent=1 // pred_region
      %77 = dma.done [#allocation5], 2048
    $region33: #{_device_forward.2} parent=1 // pred_fallthru
      _
    // Predicated region
    $region34: #{_device_forward.2} parent=1 // pred_check
      _
    $region35: #{_device_forward.2} parent=1 // pred_check_branch
      %79 = sbr.rel (0) target = $region37
    $region36: #{_device_forward.2} parent=1 // pred_region
      %81 = dma.done [#allocation5], 2048
    $region37: #{_device_forward.2} parent=1 // pred_fallthru
      _
    // Predicated region
    $region38: #{_device_forward.2} parent=1 // pred_check
      _
    $region39: #{_device_forward.2} parent=1 // pred_check_branch
      %83 = sbr.rel (0) target = $region41
    $region40: #{_device_forward.2} parent=1 // pred_region
      %85 = dma.done [#allocation8], 4096
    $region41: #{_device_forward.2} parent=1 // pred_fallthru
      _
    %v86 = vld [vmem:[#allocation2] sm:$0xff]
    %v87 = vld [vmem:[#allocation2 + $0x8] sm:$0xff]
    %v88 = vld [vmem:[#allocation2 + $0x10] sm:$0xff]
    %v89 = vld [vmem:[#allocation2 + $0x18] sm:$0xff]
    %v90 = vld [vmem:[#allocation2 + $0x20] sm:$0xff]
    %v91 = vld [vmem:[#allocation2 + $0x28] sm:$0xff]
    %v92 = vld [vmem:[#allocation2 + $0x30] sm:$0xff]
    %v93 = vld [vmem:[#allocation2 + $0x38] sm:$0xff]
    %v94 = vld [vmem:[#allocation2 + $0x40] sm:$0xff]
    %v95 = vld [vmem:[#allocation2 + $0x48] sm:$0xff]
    %v96 = vld [vmem:[#allocation2 + $0x50] sm:$0xff]
    %v97 = vld [vmem:[#allocation2 + $0x58] sm:$0xff]
    %v98 = vld [vmem:[#allocation2 + $0x60] sm:$0xff]
    %v99 = vld [vmem:[#allocation2 + $0x68] sm:$0xff]
    %v100 = vld [vmem:[#allocation2 + $0x70] sm:$0xff]
    %v101 = vld [vmem:[#allocation2 + $0x78] sm:$0xff]
    %v102 = vld [vmem:[#allocation2 + $0x80] sm:$0xff]
    %v103 = vld [vmem:[#allocation2 + $0x88] sm:$0xff]
    %v104 = vld [vmem:[#allocation2 + $0x90] sm:$0xff]
    %v105 = vld [vmem:[#allocation2 + $0x98] sm:$0xff]
    %v106 = vld [vmem:[#allocation2 + $0xa0] sm:$0xff]
    %v107 = vld [vmem:[#allocation2 + $0xa8] sm:$0xff]
    %v108 = vld [vmem:[#allocation2 + $0xb0] sm:$0xff]
    %v109 = vld [vmem:[#allocation2 + $0xb8] sm:$0xff]
    %v110 = vld [vmem:[#allocation2 + $0xc0] sm:$0xff]
    %v111 = vld [vmem:[#allocation2 + $0xc8] sm:$0xff]
    %v112 = vld [vmem:[#allocation2 + $0xd0] sm:$0xff]
    %v113 = vld [vmem:[#allocation2 + $0xd8] sm:$0xff]
    %v114 = vld [vmem:[#allocation2 + $0xe0] sm:$0xff]
    %v115 = vld [vmem:[#allocation2 + $0xe8] sm:$0xff]
    %v116 = vld [vmem:[#allocation2 + $0xf0] sm:$0xff]
    %v117 = vld [vmem:[#allocation2 + $0xf8] sm:$0xff]
    %v118 = vld [vmem:[#allocation4] sm:$0xff]
    %v119 = vld [vmem:[#allocation4 + $0x8] sm:$0xff]
    %v120 = vld [vmem:[#allocation4 + $0x10] sm:$0xff]
    %v121 = vld [vmem:[#allocation4 + $0x18] sm:$0xff]
    %v122 = vld [vmem:[#allocation4 + $0x20] sm:$0xff]
    %v123 = vld [vmem:[#allocation4 + $0x28] sm:$0xff]
    %v124 = vld [vmem:[#allocation4 + $0x30] sm:$0xff]
    %v125 = vld [vmem:[#allocation4 + $0x38] sm:$0xff]
    %v126 = vld [vmem:[#allocation4 + $0x40] sm:$0xff]
    %v127 = vld [vmem:[#allocation4 + $0x48] sm:$0xff]
    %v128 = vld [vmem:[#allocation4 + $0x50] sm:$0xff]
    %v129 = vld [vmem:[#allocation4 + $0x58] sm:$0xff]
    %v130 = vld [vmem:[#allocation4 + $0x60] sm:$0xff]
    %v131 = vld [vmem:[#allocation4 + $0x68] sm:$0xff]
    %v132 = vld [vmem:[#allocation4 + $0x70] sm:$0xff]
    %v133 = vld [vmem:[#allocation4 + $0x78] sm:$0xff]
    %v134 = vld [vmem:[%s2] sm:$0x1]
    %v136 = vperm.slane %v134, 0
    %138 = vmatpush.msra.mxu0 %v133
    %139 = vmatpush.msra.mxu0 %v132
    %140 = vmatpush.msra.mxu0 %v131
    %141 = vmatpush.msra.mxu0 %v130
    %142 = vmatpush.msra.mxu0 %v129
    %143 = vmatpush.msra.mxu0 %v128
    %144 = vmatpush.msra.mxu0 %v127
    %145 = vmatpush.msra.mxu0 %v126
    %146 = vmatpush.msra.mxu0 %v125
    %147 = vmatpush.msra.mxu0 %v124
    %148 = vmatpush.msra.mxu0 %v123
    %149 = vmatpush.msra.mxu0 %v122
    %150 = vmatpush.msra.mxu0 %v121
    %151 = vmatpush.msra.mxu0 %v120
    %152 = vmatpush.msra.mxu0 %v119
    %153 = vmatpush.msra.mxu0 %v118
    %154 = vmatmul.f32.gmra.mxu0 %v86
    %v155 = vpop.f32.mrf.mxu0
    %v156 = vadd.f32 %v136, %v155
    %157 = vmatmul.f32.gmra.mxu0 %v87
    %v158 = vpop.f32.mrf.mxu0
    %v159 = vadd.f32 %v136, %v158
    %160 = vmatmul.f32.gmra.mxu0 %v88
    %v161 = vpop.f32.mrf.mxu0
    %v162 = vadd.f32 %v136, %v161
    %163 = vmatmul.f32.gmra.mxu0 %v89
    %v164 = vpop.f32.mrf.mxu0
    %v165 = vadd.f32 %v136, %v164
    %166 = vmatmul.f32.gmra.mxu0 %v90
    %v167 = vpop.f32.mrf.mxu0
    %v168 = vadd.f32 %v136, %v167
    %169 = vmatmul.f32.gmra.mxu0 %v91
    %v170 = vpop.f32.mrf.mxu0
    %v171 = vadd.f32 %v136, %v170
    %172 = vmatmul.f32.gmra.mxu0 %v92
    %v173 = vpop.f32.mrf.mxu0
    %v174 = vadd.f32 %v136, %v173
    %175 = vmatmul.f32.gmra.mxu0 %v93
    %v176 = vpop.f32.mrf.mxu0
    %v177 = vadd.f32 %v136, %v176
    %178 = vmatmul.f32.gmra.mxu0 %v94
    %v179 = vpop.f32.mrf.mxu0
    %v180 = vadd.f32 %v136, %v179
    %181 = vmatmul.f32.gmra.mxu0 %v95
    %v182 = vpop.f32.mrf.mxu0
    %v183 = vadd.f32 %v136, %v182
    %184 = vmatmul.f32.gmra.mxu0 %v96
    %v185 = vpop.f32.mrf.mxu0
    %v186 = vadd.f32 %v136, %v185
    %187 = vmatmul.f32.gmra.mxu0 %v97
    %v188 = vpop.f32.mrf.mxu0
    %v189 = vadd.f32 %v136, %v188
    %190 = vmatmul.f32.gmra.mxu0 %v98
    %v191 = vpop.f32.mrf.mxu0
    %v192 = vadd.f32 %v136, %v191
    %193 = vmatmul.f32.gmra.mxu0 %v99
    %v194 = vpop.f32.mrf.mxu0
    %v195 = vadd.f32 %v136, %v194
    %196 = vmatmul.f32.gmra.mxu0 %v100
    %v197 = vpop.f32.mrf.mxu0
    %v198 = vadd.f32 %v136, %v197
    %199 = vmatmul.f32.gmra.mxu0 %v101
    %v200 = vpop.f32.mrf.mxu0
    %v201 = vadd.f32 %v136, %v200
    %202 = vmatmul.f32.gmra.mxu0 %v102
    %v203 = vpop.f32.mrf.mxu0
    %v204 = vadd.f32 %v136, %v203
    %205 = vmatmul.f32.gmra.mxu0 %v103
    %v206 = vpop.f32.mrf.mxu0
    %v207 = vadd.f32 %v136, %v206
    %208 = vmatmul.f32.gmra.mxu0 %v104
    %v209 = vpop.f32.mrf.mxu0
    %v210 = vadd.f32 %v136, %v209
    %211 = vmatmul.f32.gmra.mxu0 %v105
    %v212 = vpop.f32.mrf.mxu0
    %v213 = vadd.f32 %v136, %v212
    %214 = vmatmul.f32.gmra.mxu0 %v106
    %v215 = vpop.f32.mrf.mxu0
    %v216 = vadd.f32 %v136, %v215
    %217 = vmatmul.f32.gmra.mxu0 %v107
    %v218 = vpop.f32.mrf.mxu0
    %v219 = vadd.f32 %v136, %v218
    %220 = vmatmul.f32.gmra.mxu0 %v108
    %v221 = vpop.f32.mrf.mxu0
    %v222 = vadd.f32 %v136, %v221
    %223 = vmatmul.f32.gmra.mxu0 %v109
    %v224 = vpop.f32.mrf.mxu0
    %v225 = vadd.f32 %v136, %v224
    %226 = vmatmul.f32.gmra.mxu0 %v110
    %v227 = vpop.f32.mrf.mxu0
    %v228 = vadd.f32 %v136, %v227
    %229 = vmatmul.f32.gmra.mxu0 %v111
    %v230 = vpop.f32.mrf.mxu0
    %v231 = vadd.f32 %v136, %v230
    %232 = vmatmul.f32.gmra.mxu0 %v112
    %v233 = vpop.f32.mrf.mxu0
    %v234 = vadd.f32 %v136, %v233
    %235 = vmatmul.f32.gmra.mxu0 %v113
    %v236 = vpop.f32.mrf.mxu0
    %v237 = vadd.f32 %v136, %v236
    %238 = vmatmul.f32.gmra.mxu0 %v114
    %v239 = vpop.f32.mrf.mxu0
    %v240 = vadd.f32 %v136, %v239
    %241 = vmatmul.f32.gmra.mxu0 %v115
    %v242 = vpop.f32.mrf.mxu0
    %v243 = vadd.f32 %v136, %v242
    %244 = vmatmul.f32.gmra.mxu0 %v116
    %v245 = vpop.f32.mrf.mxu0
    %v246 = vadd.f32 %v136, %v245
    %247 = vmatmul.f32.gmra.mxu0 %v117
    %v248 = vpop.f32.mrf.mxu0
    %v249 = vadd.f32 %v136, %v248
    %250 = vdwg.mxu0
    %v251 = vmax.f32 %v156, 0.0
    %v252 = vmax.f32 %v159, 0.0
    %v253 = vmax.f32 %v162, 0.0
    %v254 = vmax.f32 %v165, 0.0
    %v255 = vmax.f32 %v168, 0.0
    %v256 = vmax.f32 %v171, 0.0
    %v257 = vmax.f32 %v174, 0.0
    %v258 = vmax.f32 %v177, 0.0
    %v259 = vmax.f32 %v180, 0.0
    %v260 = vmax.f32 %v183, 0.0
    %v261 = vmax.f32 %v186, 0.0
    %v262 = vmax.f32 %v189, 0.0
    %v263 = vmax.f32 %v192, 0.0
    %v264 = vmax.f32 %v195, 0.0
    %v265 = vmax.f32 %v198, 0.0
    %v266 = vmax.f32 %v201, 0.0
    %v267 = vmax.f32 %v204, 0.0
    %v268 = vmax.f32 %v207, 0.0
    %v269 = vmax.f32 %v210, 0.0
    %v270 = vmax.f32 %v213, 0.0
    %v271 = vmax.f32 %v216, 0.0
    %v272 = vmax.f32 %v219, 0.0
    %v273 = vmax.f32 %v222, 0.0
    %v274 = vmax.f32 %v225, 0.0
    %v275 = vmax.f32 %v228, 0.0
    %v276 = vmax.f32 %v231, 0.0
    %v277 = vmax.f32 %v234, 0.0
    %v278 = vmax.f32 %v237, 0.0
    %v279 = vmax.f32 %v240, 0.0
    %v280 = vmax.f32 %v243, 0.0
    %v281 = vmax.f32 %v246, 0.0
    %v282 = vmax.f32 %v249, 0.0
    %v283 = vld [vmem:[#allocation6] sm:$0xff]
    %v284 = vld [vmem:[#allocation6 + $0x8] sm:$0xff]
    %v285 = vld [vmem:[#allocation6 + $0x10] sm:$0xff]
    %v286 = vld [vmem:[#allocation6 + $0x18] sm:$0xff]
    %v287 = vld [vmem:[#allocation6 + $0x20] sm:$0xff]
    %v288 = vld [vmem:[#allocation6 + $0x28] sm:$0xff]
    %v289 = vld [vmem:[#allocation6 + $0x30] sm:$0xff]
    %v290 = vld [vmem:[#allocation6 + $0x38] sm:$0xff]
    %v291 = vld [vmem:[#allocation6 + $0x40] sm:$0xff]
    %v292 = vld [vmem:[#allocation6 + $0x48] sm:$0xff]
    %v293 = vld [vmem:[#allocation6 + $0x50] sm:$0xff]
    %v294 = vld [vmem:[#allocation6 + $0x58] sm:$0xff]
    %v295 = vld [vmem:[#allocation6 + $0x60] sm:$0xff]
    %v296 = vld [vmem:[#allocation6 + $0x68] sm:$0xff]
    %v297 = vld [vmem:[#allocation6 + $0x70] sm:$0xff]
    %v298 = vld [vmem:[#allocation6 + $0x78] sm:$0xff]
    %v299 = vld [vmem:[%s4] sm:$0x1]
    %v301 = vperm.slane %v299, 0
    %303 = vmatpush.msra.mxu0 %v298
    %304 = vmatpush.msra.mxu0 %v297
    %305 = vmatpush.msra.mxu0 %v296
    %306 = vmatpush.msra.mxu0 %v295
    %307 = vmatpush.msra.mxu0 %v294
    %308 = vmatpush.msra.mxu0 %v293
    %309 = vmatpush.msra.mxu0 %v292
    %310 = vmatpush.msra.mxu0 %v291
    %311 = vmatpush.msra.mxu0 %v290
    %312 = vmatpush.msra.mxu0 %v289
    %313 = vmatpush.msra.mxu0 %v288
    %314 = vmatpush.msra.mxu0 %v287
    %315 = vmatpush.msra.mxu0 %v286
    %316 = vmatpush.msra.mxu0 %v285
    %317 = vmatpush.msra.mxu0 %v284
    %318 = vmatpush.msra.mxu0 %v283
    %319 = vmatmul.f32.gmra.mxu0 %v251
    %v320 = vpop.f32.mrf.mxu0
    %v321 = vadd.f32 %v301, %v320
    %322 = vmatmul.f32.gmra.mxu0 %v252
    %v323 = vpop.f32.mrf.mxu0
    %v324 = vadd.f32 %v301, %v323
    %325 = vmatmul.f32.gmra.mxu0 %v253
    %v326 = vpop.f32.mrf.mxu0
    %v327 = vadd.f32 %v301, %v326
    %328 = vmatmul.f32.gmra.mxu0 %v254
    %v329 = vpop.f32.mrf.mxu0
    %v330 = vadd.f32 %v301, %v329
    %331 = vmatmul.f32.gmra.mxu0 %v255
    %v332 = vpop.f32.mrf.mxu0
    %v333 = vadd.f32 %v301, %v332
    %334 = vmatmul.f32.gmra.mxu0 %v256
    %v335 = vpop.f32.mrf.mxu0
    %v336 = vadd.f32 %v301, %v335
    %337 = vmatmul.f32.gmra.mxu0 %v257
    %v338 = vpop.f32.mrf.mxu0
    %v339 = vadd.f32 %v301, %v338
    %340 = vmatmul.f32.gmra.mxu0 %v258
    %v341 = vpop.f32.mrf.mxu0
    %v342 = vadd.f32 %v301, %v341
    %343 = vmatmul.f32.gmra.mxu0 %v259
    %v344 = vpop.f32.mrf.mxu0
    %v345 = vadd.f32 %v301, %v344
    %346 = vmatmul.f32.gmra.mxu0 %v260
    %v347 = vpop.f32.mrf.mxu0
    %v348 = vadd.f32 %v301, %v347
    %349 = vmatmul.f32.gmra.mxu0 %v261
    %v350 = vpop.f32.mrf.mxu0
    %v351 = vadd.f32 %v301, %v350
    %352 = vmatmul.f32.gmra.mxu0 %v262
    %v353 = vpop.f32.mrf.mxu0
    %v354 = vadd.f32 %v301, %v353
    %355 = vmatmul.f32.gmra.mxu0 %v263
    %v356 = vpop.f32.mrf.mxu0
    %v357 = vadd.f32 %v301, %v356
    %358 = vmatmul.f32.gmra.mxu0 %v264
    %v359 = vpop.f32.mrf.mxu0
    %v360 = vadd.f32 %v301, %v359
    %361 = vmatmul.f32.gmra.mxu0 %v265
    %v362 = vpop.f32.mrf.mxu0
    %v363 = vadd.f32 %v301, %v362
    %364 = vmatmul.f32.gmra.mxu0 %v266
    %v365 = vpop.f32.mrf.mxu0
    %v366 = vadd.f32 %v301, %v365
    %367 = vmatmul.f32.gmra.mxu0 %v267
    %v368 = vpop.f32.mrf.mxu0
    %v369 = vadd.f32 %v301, %v368
    %370 = vmatmul.f32.gmra.mxu0 %v268
    %v371 = vpop.f32.mrf.mxu0
    %v372 = vadd.f32 %v301, %v371
    %373 = vmatmul.f32.gmra.mxu0 %v269
    %v374 = vpop.f32.mrf.mxu0
    %v375 = vadd.f32 %v301, %v374
    %376 = vmatmul.f32.gmra.mxu0 %v270
    %v377 = vpop.f32.mrf.mxu0
    %v378 = vadd.f32 %v301, %v377
    %379 = vmatmul.f32.gmra.mxu0 %v271
    %v380 = vpop.f32.mrf.mxu0
    %v381 = vadd.f32 %v301, %v380
    %382 = vmatmul.f32.gmra.mxu0 %v272
    %v383 = vpop.f32.mrf.mxu0
    %v384 = vadd.f32 %v301, %v383
    %385 = vmatmul.f32.gmra.mxu0 %v273
    %v386 = vpop.f32.mrf.mxu0
    %v387 = vadd.f32 %v301, %v386
    %388 = vmatmul.f32.gmra.mxu0 %v274
    %v389 = vpop.f32.mrf.mxu0
    %v390 = vadd.f32 %v301, %v389
    %391 = vmatmul.f32.gmra.mxu0 %v275
    %v392 = vpop.f32.mrf.mxu0
    %v393 = vadd.f32 %v301, %v392
    %394 = vmatmul.f32.gmra.mxu0 %v276
    %v395 = vpop.f32.mrf.mxu0
    %v396 = vadd.f32 %v301, %v395
    %397 = vmatmul.f32.gmra.mxu0 %v277
    %v398 = vpop.f32.mrf.mxu0
    %v399 = vadd.f32 %v301, %v398
    %400 = vmatmul.f32.gmra.mxu0 %v278
    %v401 = vpop.f32.mrf.mxu0
    %v402 = vadd.f32 %v301, %v401
    %403 = vmatmul.f32.gmra.mxu0 %v279
    %v404 = vpop.f32.mrf.mxu0
    %v405 = vadd.f32 %v301, %v404
    %406 = vmatmul.f32.gmra.mxu0 %v280
    %v407 = vpop.f32.mrf.mxu0
    %v408 = vadd.f32 %v301, %v407
    %409 = vmatmul.f32.gmra.mxu0 %v281
    %v410 = vpop.f32.mrf.mxu0
    %v411 = vadd.f32 %v301, %v410
    %412 = vmatmul.f32.gmra.mxu0 %v282
    %v413 = vpop.f32.mrf.mxu0
    %v414 = vadd.f32 %v301, %v413
    %415 = vdwg.mxu0
    %v416 = vmul.f32 %v321, %v321
    %v417 = vmul.f32 %v324, %v324
    %v418 = vmul.f32 %v327, %v327
    %v419 = vmul.f32 %v330, %v330
    %v420 = vmul.f32 %v333, %v333
    %v421 = vmul.f32 %v336, %v336
    %v422 = vmul.f32 %v339, %v339
    %v423 = vmul.f32 %v342, %v342
    %v424 = vmul.f32 %v345, %v345
    %v425 = vmul.f32 %v348, %v348
    %v426 = vmul.f32 %v351, %v351
    %v427 = vmul.f32 %v354, %v354
    %v428 = vmul.f32 %v357, %v357
    %v429 = vmul.f32 %v360, %v360
    %v430 = vmul.f32 %v363, %v363
    %v431 = vmul.f32 %v366, %v366
    %v432 = vmul.f32 %v369, %v369
    %v433 = vmul.f32 %v372, %v372
    %v434 = vmul.f32 %v375, %v375
    %v435 = vmul.f32 %v378, %v378
    %v436 = vmul.f32 %v381, %v381
    %v437 = vmul.f32 %v384, %v384
    %v438 = vmul.f32 %v387, %v387
    %v439 = vmul.f32 %v390, %v390
    %v440 = vmul.f32 %v393, %v393
    %v441 = vmul.f32 %v396, %v396
    %v442 = vmul.f32 %v399, %v399
    %v443 = vmul.f32 %v402, %v402
    %v444 = vmul.f32 %v405, %v405
    %v445 = vmul.f32 %v408, %v408
    %v446 = vmul.f32 %v411, %v411
    %v447 = vmul.f32 %v414, %v414
    %448 = vadd.xlane.f32.xlu0 %v416
    %v449 = vpop.xlane.xlu0 %448
    %450 = vadd.xlane.f32.xlu0 %v417
    %v451 = vpop.xlane.xlu0 %450
    %452 = vadd.xlane.f32.xlu0 %v418
    %v453 = vpop.xlane.xlu0 %452
    %454 = vadd.xlane.f32.xlu0 %v419
    %v455 = vpop.xlane.xlu0 %454
    %456 = vadd.xlane.f32.xlu0 %v420
    %v457 = vpop.xlane.xlu0 %456
    %458 = vadd.xlane.f32.xlu0 %v421
    %v459 = vpop.xlane.xlu0 %458
    %460 = vadd.xlane.f32.xlu0 %v422
    %v461 = vpop.xlane.xlu0 %460
    %462 = vadd.xlane.f32.xlu0 %v423
    %v463 = vpop.xlane.xlu0 %462
    %464 = vadd.xlane.f32.xlu0 %v424
    %v465 = vpop.xlane.xlu0 %464
    %466 = vadd.xlane.f32.xlu0 %v425
    %v467 = vpop.xlane.xlu0 %466
    %468 = vadd.xlane.f32.xlu0 %v426
    %v469 = vpop.xlane.xlu0 %468
    %470 = vadd.xlane.f32.xlu0 %v427
    %v471 = vpop.xlane.xlu0 %470
    %472 = vadd.xlane.f32.xlu0 %v428
    %v473 = vpop.xlane.xlu0 %472
    %474 = vadd.xlane.f32.xlu0 %v429
    %v475 = vpop.xlane.xlu0 %474
    %476 = vadd.xlane.f32.xlu0 %v430
    %v477 = vpop.xlane.xlu0 %476
    %478 = vadd.xlane.f32.xlu0 %v431
    %v479 = vpop.xlane.xlu0 %478
    %480 = vadd.xlane.f32.xlu0 %v432
    %v481 = vpop.xlane.xlu0 %480
    %482 = vadd.xlane.f32.xlu0 %v433
    %v483 = vpop.xlane.xlu0 %482
    %484 = vadd.xlane.f32.xlu0 %v434
    %v485 = vpop.xlane.xlu0 %484
    %486 = vadd.xlane.f32.xlu0 %v435
    %v487 = vpop.xlane.xlu0 %486
    %488 = vadd.xlane.f32.xlu0 %v436
    %v489 = vpop.xlane.xlu0 %488
    %490 = vadd.xlane.f32.xlu0 %v437
    %v491 = vpop.xlane.xlu0 %490
    %492 = vadd.xlane.f32.xlu0 %v438
    %v493 = vpop.xlane.xlu0 %492
    %494 = vadd.xlane.f32.xlu0 %v439
    %v495 = vpop.xlane.xlu0 %494
    %496 = vadd.xlane.f32.xlu0 %v440
    %v497 = vpop.xlane.xlu0 %496
    %498 = vadd.xlane.f32.xlu0 %v441
    %v499 = vpop.xlane.xlu0 %498
    %500 = vadd.xlane.f32.xlu0 %v442
    %v501 = vpop.xlane.xlu0 %500
    %502 = vadd.xlane.f32.xlu0 %v443
    %v503 = vpop.xlane.xlu0 %502
    %504 = vadd.xlane.f32.xlu0 %v444
    %v505 = vpop.xlane.xlu0 %504
    %506 = vadd.xlane.f32.xlu0 %v445
    %v507 = vpop.xlane.xlu0 %506
    %508 = vadd.xlane.f32.xlu0 %v446
    %v509 = vpop.xlane.xlu0 %508
    %510 = vadd.xlane.f32.xlu0 %v447
    %v511 = vpop.xlane.xlu0 %510
    %v512 = vrsqrt.pop %v449
    %v513 = vmul.f32 %v512, %v449
    %v514 = vmul.f32 %v513, %v512
    %v515 = vmul.f32 0.5, %v514
    %v516 = vsub.f32 1.5, %v515
    %v517 = vmul.f32 %v512, %v516
    %v518 = vmul.f32 %v449, %v517
    %vm519 = vcmp.eq.f32.partialorder %v449, inf
    %v520 = vsel %vm519, %v449, %v518
    %vm521 = vcmp.eq.f32.partialorder %v449, 0.0
    %v522 = vand.u32 %v449, 2147483648
    %v523 = vsel %vm521, %v522, %v520
    %v524 = vrsqrt.pop %v451
    %v525 = vmul.f32 %v524, %v451
    %v526 = vmul.f32 %v525, %v524
    %v527 = vmul.f32 0.5, %v526
    %v528 = vsub.f32 1.5, %v527
    %v529 = vmul.f32 %v524, %v528
    %v530 = vmul.f32 %v451, %v529
    %vm531 = vcmp.eq.f32.partialorder %v451, inf
    %v532 = vsel %vm531, %v451, %v530
    %vm533 = vcmp.eq.f32.partialorder %v451, 0.0
    %v534 = vand.u32 %v451, 2147483648
    %v535 = vsel %vm533, %v534, %v532
    %v536 = vrsqrt.pop %v453
    %v537 = vmul.f32 %v536, %v453
    %v538 = vmul.f32 %v537, %v536
    %v539 = vmul.f32 0.5, %v538
    %v540 = vsub.f32 1.5, %v539
    %v541 = vmul.f32 %v536, %v540
    %v542 = vmul.f32 %v453, %v541
    %vm543 = vcmp.eq.f32.partialorder %v453, inf
    %v544 = vsel %vm543, %v453, %v542
    %vm545 = vcmp.eq.f32.partialorder %v453, 0.0
    %v546 = vand.u32 %v453, 2147483648
    %v547 = vsel %vm545, %v546, %v544
    %v548 = vrsqrt.pop %v455
    %v549 = vmul.f32 %v548, %v455
    %v550 = vmul.f32 %v549, %v548
    %v551 = vmul.f32 0.5, %v550
    %v552 = vsub.f32 1.5, %v551
    %v553 = vmul.f32 %v548, %v552
    %v554 = vmul.f32 %v455, %v553
    %vm555 = vcmp.eq.f32.partialorder %v455, inf
    %v556 = vsel %vm555, %v455, %v554
    %vm557 = vcmp.eq.f32.partialorder %v455, 0.0
    %v558 = vand.u32 %v455, 2147483648
    %v559 = vsel %vm557, %v558, %v556
    %v560 = vrsqrt.pop %v457
    %v561 = vmul.f32 %v560, %v457
    %v562 = vmul.f32 %v561, %v560
    %v563 = vmul.f32 0.5, %v562
    %v564 = vsub.f32 1.5, %v563
    %v565 = vmul.f32 %v560, %v564
    %v566 = vmul.f32 %v457, %v565
    %vm567 = vcmp.eq.f32.partialorder %v457, inf
    %v568 = vsel %vm567, %v457, %v566
    %vm569 = vcmp.eq.f32.partialorder %v457, 0.0
    %v570 = vand.u32 %v457, 2147483648
    %v571 = vsel %vm569, %v570, %v568
    %v572 = vrsqrt.pop %v459
    %v573 = vmul.f32 %v572, %v459
    %v574 = vmul.f32 %v573, %v572
    %v575 = vmul.f32 0.5, %v574
    %v576 = vsub.f32 1.5, %v575
    %v577 = vmul.f32 %v572, %v576
    %v578 = vmul.f32 %v459, %v577
    %vm579 = vcmp.eq.f32.partialorder %v459, inf
    %v580 = vsel %vm579, %v459, %v578
    %vm581 = vcmp.eq.f32.partialorder %v459, 0.0
    %v582 = vand.u32 %v459, 2147483648
    %v583 = vsel %vm581, %v582, %v580
    %v584 = vrsqrt.pop %v461
    %v585 = vmul.f32 %v584, %v461
    %v586 = vmul.f32 %v585, %v584
    %v587 = vmul.f32 0.5, %v586
    %v588 = vsub.f32 1.5, %v587
    %v589 = vmul.f32 %v584, %v588
    %v590 = vmul.f32 %v461, %v589
    %vm591 = vcmp.eq.f32.partialorder %v461, inf
    %v592 = vsel %vm591, %v461, %v590
    %vm593 = vcmp.eq.f32.partialorder %v461, 0.0
    %v594 = vand.u32 %v461, 2147483648
    %v595 = vsel %vm593, %v594, %v592
    %v596 = vrsqrt.pop %v463
    %v597 = vmul.f32 %v596, %v463
    %v598 = vmul.f32 %v597, %v596
    %v599 = vmul.f32 0.5, %v598
    %v600 = vsub.f32 1.5, %v599
    %v601 = vmul.f32 %v596, %v600
    %v602 = vmul.f32 %v463, %v601
    %vm603 = vcmp.eq.f32.partialorder %v463, inf
    %v604 = vsel %vm603, %v463, %v602
    %vm605 = vcmp.eq.f32.partialorder %v463, 0.0
    %v606 = vand.u32 %v463, 2147483648
    %v607 = vsel %vm605, %v606, %v604
    %v608 = vrsqrt.pop %v465
    %v609 = vmul.f32 %v608, %v465
    %v610 = vmul.f32 %v609, %v608
    %v611 = vmul.f32 0.5, %v610
    %v612 = vsub.f32 1.5, %v611
    %v613 = vmul.f32 %v608, %v612
    %v614 = vmul.f32 %v465, %v613
    %vm615 = vcmp.eq.f32.partialorder %v465, inf
    %v616 = vsel %vm615, %v465, %v614
    %vm617 = vcmp.eq.f32.partialorder %v465, 0.0
    %v618 = vand.u32 %v465, 2147483648
    %v619 = vsel %vm617, %v618, %v616
    %v620 = vrsqrt.pop %v467
    %v621 = vmul.f32 %v620, %v467
    %v622 = vmul.f32 %v621, %v620
    %v623 = vmul.f32 0.5, %v622
    %v624 = vsub.f32 1.5, %v623
    %v625 = vmul.f32 %v620, %v624
    %v626 = vmul.f32 %v467, %v625
    %vm627 = vcmp.eq.f32.partialorder %v467, inf
    %v628 = vsel %vm627, %v467, %v626
    %vm629 = vcmp.eq.f32.partialorder %v467, 0.0
    %v630 = vand.u32 %v467, 2147483648
    %v631 = vsel %vm629, %v630, %v628
    %v632 = vrsqrt.pop %v469
    %v633 = vmul.f32 %v632, %v469
    %v634 = vmul.f32 %v633, %v632
    %v635 = vmul.f32 0.5, %v634
    %v636 = vsub.f32 1.5, %v635
    %v637 = vmul.f32 %v632, %v636
    %v638 = vmul.f32 %v469, %v637
    %vm639 = vcmp.eq.f32.partialorder %v469, inf
    %v640 = vsel %vm639, %v469, %v638
    %vm641 = vcmp.eq.f32.partialorder %v469, 0.0
    %v642 = vand.u32 %v469, 2147483648
    %v643 = vsel %vm641, %v642, %v640
    %v644 = vrsqrt.pop %v471
    %v645 = vmul.f32 %v644, %v471
    %v646 = vmul.f32 %v645, %v644
    %v647 = vmul.f32 0.5, %v646
    %v648 = vsub.f32 1.5, %v647
    %v649 = vmul.f32 %v644, %v648
    %v650 = vmul.f32 %v471, %v649
    %vm651 = vcmp.eq.f32.partialorder %v471, inf
    %v652 = vsel %vm651, %v471, %v650
    %vm653 = vcmp.eq.f32.partialorder %v471, 0.0
    %v654 = vand.u32 %v471, 2147483648
    %v655 = vsel %vm653, %v654, %v652
    %v656 = vrsqrt.pop %v473
    %v657 = vmul.f32 %v656, %v473
    %v658 = vmul.f32 %v657, %v656
    %v659 = vmul.f32 0.5, %v658
    %v660 = vsub.f32 1.5, %v659
    %v661 = vmul.f32 %v656, %v660
    %v662 = vmul.f32 %v473, %v661
    %vm663 = vcmp.eq.f32.partialorder %v473, inf
    %v664 = vsel %vm663, %v473, %v662
    %vm665 = vcmp.eq.f32.partialorder %v473, 0.0
    %v666 = vand.u32 %v473, 2147483648
    %v667 = vsel %vm665, %v666, %v664
    %v668 = vrsqrt.pop %v475
    %v669 = vmul.f32 %v668, %v475
    %v670 = vmul.f32 %v669, %v668
    %v671 = vmul.f32 0.5, %v670
    %v672 = vsub.f32 1.5, %v671
    %v673 = vmul.f32 %v668, %v672
    %v674 = vmul.f32 %v475, %v673
    %vm675 = vcmp.eq.f32.partialorder %v475, inf
    %v676 = vsel %vm675, %v475, %v674
    %vm677 = vcmp.eq.f32.partialorder %v475, 0.0
    %v678 = vand.u32 %v475, 2147483648
    %v679 = vsel %vm677, %v678, %v676
    %v680 = vrsqrt.pop %v477
    %v681 = vmul.f32 %v680, %v477
    %v682 = vmul.f32 %v681, %v680
    %v683 = vmul.f32 0.5, %v682
    %v684 = vsub.f32 1.5, %v683
    %v685 = vmul.f32 %v680, %v684
    %v686 = vmul.f32 %v477, %v685
    %vm687 = vcmp.eq.f32.partialorder %v477, inf
    %v688 = vsel %vm687, %v477, %v686
    %vm689 = vcmp.eq.f32.partialorder %v477, 0.0
    %v690 = vand.u32 %v477, 2147483648
    %v691 = vsel %vm689, %v690, %v688
    %v692 = vrsqrt.pop %v479
    %v693 = vmul.f32 %v692, %v479
    %v694 = vmul.f32 %v693, %v692
    %v695 = vmul.f32 0.5, %v694
    %v696 = vsub.f32 1.5, %v695
    %v697 = vmul.f32 %v692, %v696
    %v698 = vmul.f32 %v479, %v697
    %vm699 = vcmp.eq.f32.partialorder %v479, inf
    %v700 = vsel %vm699, %v479, %v698
    %vm701 = vcmp.eq.f32.partialorder %v479, 0.0
    %v702 = vand.u32 %v479, 2147483648
    %v703 = vsel %vm701, %v702, %v700
    %v704 = vrsqrt.pop %v481
    %v705 = vmul.f32 %v704, %v481
    %v706 = vmul.f32 %v705, %v704
    %v707 = vmul.f32 0.5, %v706
    %v708 = vsub.f32 1.5, %v707
    %v709 = vmul.f32 %v704, %v708
    %v710 = vmul.f32 %v481, %v709
    %vm711 = vcmp.eq.f32.partialorder %v481, inf
    %v712 = vsel %vm711, %v481, %v710
    %vm713 = vcmp.eq.f32.partialorder %v481, 0.0
    %v714 = vand.u32 %v481, 2147483648
    %v715 = vsel %vm713, %v714, %v712
    %v716 = vrsqrt.pop %v483
    %v717 = vmul.f32 %v716, %v483
    %v718 = vmul.f32 %v717, %v716
    %v719 = vmul.f32 0.5, %v718
    %v720 = vsub.f32 1.5, %v719
    %v721 = vmul.f32 %v716, %v720
    %v722 = vmul.f32 %v483, %v721
    %vm723 = vcmp.eq.f32.partialorder %v483, inf
    %v724 = vsel %vm723, %v483, %v722
    %vm725 = vcmp.eq.f32.partialorder %v483, 0.0
    %v726 = vand.u32 %v483, 2147483648
    %v727 = vsel %vm725, %v726, %v724
    %v728 = vrsqrt.pop %v485
    %v729 = vmul.f32 %v728, %v485
    %v730 = vmul.f32 %v729, %v728
    %v731 = vmul.f32 0.5, %v730
    %v732 = vsub.f32 1.5, %v731
    %v733 = vmul.f32 %v728, %v732
    %v734 = vmul.f32 %v485, %v733
    %vm735 = vcmp.eq.f32.partialorder %v485, inf
    %v736 = vsel %vm735, %v485, %v734
    %vm737 = vcmp.eq.f32.partialorder %v485, 0.0
    %v738 = vand.u32 %v485, 2147483648
    %v739 = vsel %vm737, %v738, %v736
    %v740 = vrsqrt.pop %v487
    %v741 = vmul.f32 %v740, %v487
    %v742 = vmul.f32 %v741, %v740
    %v743 = vmul.f32 0.5, %v742
    %v744 = vsub.f32 1.5, %v743
    %v745 = vmul.f32 %v740, %v744
    %v746 = vmul.f32 %v487, %v745
    %vm747 = vcmp.eq.f32.partialorder %v487, inf
    %v748 = vsel %vm747, %v487, %v746
    %vm749 = vcmp.eq.f32.partialorder %v487, 0.0
    %v750 = vand.u32 %v487, 2147483648
    %v751 = vsel %vm749, %v750, %v748
    %v752 = vrsqrt.pop %v489
    %v753 = vmul.f32 %v752, %v489
    %v754 = vmul.f32 %v753, %v752
    %v755 = vmul.f32 0.5, %v754
    %v756 = vsub.f32 1.5, %v755
    %v757 = vmul.f32 %v752, %v756
    %v758 = vmul.f32 %v489, %v757
    %vm759 = vcmp.eq.f32.partialorder %v489, inf
    %v760 = vsel %vm759, %v489, %v758
    %vm761 = vcmp.eq.f32.partialorder %v489, 0.0
    %v762 = vand.u32 %v489, 2147483648
    %v763 = vsel %vm761, %v762, %v760
    %v764 = vrsqrt.pop %v491
    %v765 = vmul.f32 %v764, %v491
    %v766 = vmul.f32 %v765, %v764
    %v767 = vmul.f32 0.5, %v766
    %v768 = vsub.f32 1.5, %v767
    %v769 = vmul.f32 %v764, %v768
    %v770 = vmul.f32 %v491, %v769
    %vm771 = vcmp.eq.f32.partialorder %v491, inf
    %v772 = vsel %vm771, %v491, %v770
    %vm773 = vcmp.eq.f32.partialorder %v491, 0.0
    %v774 = vand.u32 %v491, 2147483648
    %v775 = vsel %vm773, %v774, %v772
    %v776 = vrsqrt.pop %v493
    %v777 = vmul.f32 %v776, %v493
    %v778 = vmul.f32 %v777, %v776
    %v779 = vmul.f32 0.5, %v778
    %v780 = vsub.f32 1.5, %v779
    %v781 = vmul.f32 %v776, %v780
    %v782 = vmul.f32 %v493, %v781
    %vm783 = vcmp.eq.f32.partialorder %v493, inf
    %v784 = vsel %vm783, %v493, %v782
    %vm785 = vcmp.eq.f32.partialorder %v493, 0.0
    %v786 = vand.u32 %v493, 2147483648
    %v787 = vsel %vm785, %v786, %v784
    %v788 = vrsqrt.pop %v495
    %v789 = vmul.f32 %v788, %v495
    %v790 = vmul.f32 %v789, %v788
    %v791 = vmul.f32 0.5, %v790
    %v792 = vsub.f32 1.5, %v791
    %v793 = vmul.f32 %v788, %v792
    %v794 = vmul.f32 %v495, %v793
    %vm795 = vcmp.eq.f32.partialorder %v495, inf
    %v796 = vsel %vm795, %v495, %v794
    %vm797 = vcmp.eq.f32.partialorder %v495, 0.0
    %v798 = vand.u32 %v495, 2147483648
    %v799 = vsel %vm797, %v798, %v796
    %v800 = vrsqrt.pop %v497
    %v801 = vmul.f32 %v800, %v497
    %v802 = vmul.f32 %v801, %v800
    %v803 = vmul.f32 0.5, %v802
    %v804 = vsub.f32 1.5, %v803
    %v805 = vmul.f32 %v800, %v804
    %v806 = vmul.f32 %v497, %v805
    %vm807 = vcmp.eq.f32.partialorder %v497, inf
    %v808 = vsel %vm807, %v497, %v806
    %vm809 = vcmp.eq.f32.partialorder %v497, 0.0
    %v810 = vand.u32 %v497, 2147483648
    %v811 = vsel %vm809, %v810, %v808
    %v812 = vrsqrt.pop %v499
    %v813 = vmul.f32 %v812, %v499
    %v814 = vmul.f32 %v813, %v812
    %v815 = vmul.f32 0.5, %v814
    %v816 = vsub.f32 1.5, %v815
    %v817 = vmul.f32 %v812, %v816
    %v818 = vmul.f32 %v499, %v817
    %vm819 = vcmp.eq.f32.partialorder %v499, inf
    %v820 = vsel %vm819, %v499, %v818
    %vm821 = vcmp.eq.f32.partialorder %v499, 0.0
    %v822 = vand.u32 %v499, 2147483648
    %v823 = vsel %vm821, %v822, %v820
    %v824 = vrsqrt.pop %v501
    %v825 = vmul.f32 %v824, %v501
    %v826 = vmul.f32 %v825, %v824
    %v827 = vmul.f32 0.5, %v826
    %v828 = vsub.f32 1.5, %v827
    %v829 = vmul.f32 %v824, %v828
    %v830 = vmul.f32 %v501, %v829
    %vm831 = vcmp.eq.f32.partialorder %v501, inf
    %v832 = vsel %vm831, %v501, %v830
    %vm833 = vcmp.eq.f32.partialorder %v501, 0.0
    %v834 = vand.u32 %v501, 2147483648
    %v835 = vsel %vm833, %v834, %v832
    %v836 = vrsqrt.pop %v503
    %v837 = vmul.f32 %v836, %v503
    %v838 = vmul.f32 %v837, %v836
    %v839 = vmul.f32 0.5, %v838
    %v840 = vsub.f32 1.5, %v839
    %v841 = vmul.f32 %v836, %v840
    %v842 = vmul.f32 %v503, %v841
    %vm843 = vcmp.eq.f32.partialorder %v503, inf
    %v844 = vsel %vm843, %v503, %v842
    %vm845 = vcmp.eq.f32.partialorder %v503, 0.0
    %v846 = vand.u32 %v503, 2147483648
    %v847 = vsel %vm845, %v846, %v844
    %v848 = vrsqrt.pop %v505
    %v849 = vmul.f32 %v848, %v505
    %v850 = vmul.f32 %v849, %v848
    %v851 = vmul.f32 0.5, %v850
    %v852 = vsub.f32 1.5, %v851
    %v853 = vmul.f32 %v848, %v852
    %v854 = vmul.f32 %v505, %v853
    %vm855 = vcmp.eq.f32.partialorder %v505, inf
    %v856 = vsel %vm855, %v505, %v854
    %vm857 = vcmp.eq.f32.partialorder %v505, 0.0
    %v858 = vand.u32 %v505, 2147483648
    %v859 = vsel %vm857, %v858, %v856
    %v860 = vrsqrt.pop %v507
    %v861 = vmul.f32 %v860, %v507
    %v862 = vmul.f32 %v861, %v860
    %v863 = vmul.f32 0.5, %v862
    %v864 = vsub.f32 1.5, %v863
    %v865 = vmul.f32 %v860, %v864
    %v866 = vmul.f32 %v507, %v865
    %vm867 = vcmp.eq.f32.partialorder %v507, inf
    %v868 = vsel %vm867, %v507, %v866
    %vm869 = vcmp.eq.f32.partialorder %v507, 0.0
    %v870 = vand.u32 %v507, 2147483648
    %v871 = vsel %vm869, %v870, %v868
    %v872 = vrsqrt.pop %v509
    %v873 = vmul.f32 %v872, %v509
    %v874 = vmul.f32 %v873, %v872
    %v875 = vmul.f32 0.5, %v874
    %v876 = vsub.f32 1.5, %v875
    %v877 = vmul.f32 %v872, %v876
    %v878 = vmul.f32 %v509, %v877
    %vm879 = vcmp.eq.f32.partialorder %v509, inf
    %v880 = vsel %vm879, %v509, %v878
    %vm881 = vcmp.eq.f32.partialorder %v509, 0.0
    %v882 = vand.u32 %v509, 2147483648
    %v883 = vsel %vm881, %v882, %v880
    %v884 = vrsqrt.pop %v511
    %v885 = vmul.f32 %v884, %v511
    %v886 = vmul.f32 %v885, %v884
    %v887 = vmul.f32 0.5, %v886
    %v888 = vsub.f32 1.5, %v887
    %v889 = vmul.f32 %v884, %v888
    %v890 = vmul.f32 %v511, %v889
    %vm891 = vcmp.eq.f32.partialorder %v511, inf
    %v892 = vsel %vm891, %v511, %v890
    %vm893 = vcmp.eq.f32.partialorder %v511, 0.0
    %v894 = vand.u32 %v511, 2147483648
    %v895 = vsel %vm893, %v894, %v892
    %v896 = vmax.f32 %v523, 1e-12
    %v897 = vmax.f32 %v535, 1e-12
    %v898 = vmax.f32 %v547, 1e-12
    %v899 = vmax.f32 %v559, 1e-12
    %v900 = vmax.f32 %v571, 1e-12
    %v901 = vmax.f32 %v583, 1e-12
    %v902 = vmax.f32 %v595, 1e-12
    %v903 = vmax.f32 %v607, 1e-12
    %v904 = vmax.f32 %v619, 1e-12
    %v905 = vmax.f32 %v631, 1e-12
    %v906 = vmax.f32 %v643, 1e-12
    %v907 = vmax.f32 %v655, 1e-12
    %v908 = vmax.f32 %v667, 1e-12
    %v909 = vmax.f32 %v679, 1e-12
    %v910 = vmax.f32 %v691, 1e-12
    %v911 = vmax.f32 %v703, 1e-12
    %v912 = vmax.f32 %v715, 1e-12
    %v913 = vmax.f32 %v727, 1e-12
    %v914 = vmax.f32 %v739, 1e-12
    %v915 = vmax.f32 %v751, 1e-12
    %v916 = vmax.f32 %v763, 1e-12
    %v917 = vmax.f32 %v775, 1e-12
    %v918 = vmax.f32 %v787, 1e-12
    %v919 = vmax.f32 %v799, 1e-12
    %v920 = vmax.f32 %v811, 1e-12
    %v921 = vmax.f32 %v823, 1e-12
    %v922 = vmax.f32 %v835, 1e-12
    %v923 = vmax.f32 %v847, 1e-12
    %v924 = vmax.f32 %v859, 1e-12
    %v925 = vmax.f32 %v871, 1e-12
    %v926 = vmax.f32 %v883, 1e-12
    %v927 = vmax.f32 %v895, 1e-12
    %v928 = vrcp.pop %v896
    %v929 = vmul.f32 %v896, %v928
    %v930 = vsub.f32 1.0, %v929
    %v931 = vmul.f32 %v928, %v930
    %v932 = vadd.f32 %v928, %v931
    %vm933 = vweird.f32 %v896
    %vm934 = vweird.f32 %v928
    %vm935 = vmor %vm933, %vm934
    %v936 = vsel %vm935, %v928, %v932
    %v937 = vand.u32 2147483647, %v896
    %vm938 = vcmp.eq.f32.partialorder %v937, 8.507059e+37
    %v939 = vand.u32 %v896, 2147483648
    %v940 = vor.u32 1.1754944e-38, %v939
    %v941 = vsel %vm938, %v940, %v936
    %v942 = vmul.f32 %v321, %v941
    %v943 = vrcp.pop %v897
    %v944 = vmul.f32 %v897, %v943
    %v945 = vsub.f32 1.0, %v944
    %v946 = vmul.f32 %v943, %v945
    %v947 = vadd.f32 %v943, %v946
    %vm948 = vweird.f32 %v897
    %vm949 = vweird.f32 %v943
    %vm950 = vmor %vm948, %vm949
    %v951 = vsel %vm950, %v943, %v947
    %v952 = vand.u32 2147483647, %v897
    %vm953 = vcmp.eq.f32.partialorder %v952, 8.507059e+37
    %v954 = vand.u32 %v897, 2147483648
    %v955 = vor.u32 1.1754944e-38, %v954
    %v956 = vsel %vm953, %v955, %v951
    %v957 = vmul.f32 %v324, %v956
    %v958 = vrcp.pop %v898
    %v959 = vmul.f32 %v898, %v958
    %v960 = vsub.f32 1.0, %v959
    %v961 = vmul.f32 %v958, %v960
    %v962 = vadd.f32 %v958, %v961
    %vm963 = vweird.f32 %v898
    %vm964 = vweird.f32 %v958
    %vm965 = vmor %vm963, %vm964
    %v966 = vsel %vm965, %v958, %v962
    %v967 = vand.u32 2147483647, %v898
    %vm968 = vcmp.eq.f32.partialorder %v967, 8.507059e+37
    %v969 = vand.u32 %v898, 2147483648
    %v970 = vor.u32 1.1754944e-38, %v969
    %v971 = vsel %vm968, %v970, %v966
    %v972 = vmul.f32 %v327, %v971
    %v973 = vrcp.pop %v899
    %v974 = vmul.f32 %v899, %v973
    %v975 = vsub.f32 1.0, %v974
    %v976 = vmul.f32 %v973, %v975
    %v977 = vadd.f32 %v973, %v976
    %vm978 = vweird.f32 %v899
    %vm979 = vweird.f32 %v973
    %vm980 = vmor %vm978, %vm979
    %v981 = vsel %vm980, %v973, %v977
    %v982 = vand.u32 2147483647, %v899
    %vm983 = vcmp.eq.f32.partialorder %v982, 8.507059e+37
    %v984 = vand.u32 %v899, 2147483648
    %v985 = vor.u32 1.1754944e-38, %v984
    %v986 = vsel %vm983, %v985, %v981
    %v987 = vmul.f32 %v330, %v986
    %v988 = vrcp.pop %v900
    %v989 = vmul.f32 %v900, %v988
    %v990 = vsub.f32 1.0, %v989
    %v991 = vmul.f32 %v988, %v990
    %v992 = vadd.f32 %v988, %v991
    %vm993 = vweird.f32 %v900
    %vm994 = vweird.f32 %v988
    %vm995 = vmor %vm993, %vm994
    %v996 = vsel %vm995, %v988, %v992
    %v997 = vand.u32 2147483647, %v900
    %vm998 = vcmp.eq.f32.partialorder %v997, 8.507059e+37
    %v999 = vand.u32 %v900, 2147483648
    %v1000 = vor.u32 1.1754944e-38, %v999
    %v1001 = vsel %vm998, %v1000, %v996
    %v1002 = vmul.f32 %v333, %v1001
    %v1003 = vrcp.pop %v901
    %v1004 = vmul.f32 %v901, %v1003
    %v1005 = vsub.f32 1.0, %v1004
    %v1006 = vmul.f32 %v1003, %v1005
    %v1007 = vadd.f32 %v1003, %v1006
    %vm1008 = vweird.f32 %v901
    %vm1009 = vweird.f32 %v1003
    %vm1010 = vmor %vm1008, %vm1009
    %v1011 = vsel %vm1010, %v1003, %v1007
    %v1012 = vand.u32 2147483647, %v901
    %vm1013 = vcmp.eq.f32.partialorder %v1012, 8.507059e+37
    %v1014 = vand.u32 %v901, 2147483648
    %v1015 = vor.u32 1.1754944e-38, %v1014
    %v1016 = vsel %vm1013, %v1015, %v1011
    %v1017 = vmul.f32 %v336, %v1016
    %v1018 = vrcp.pop %v902
    %v1019 = vmul.f32 %v902, %v1018
    %v1020 = vsub.f32 1.0, %v1019
    %v1021 = vmul.f32 %v1018, %v1020
    %v1022 = vadd.f32 %v1018, %v1021
    %vm1023 = vweird.f32 %v902
    %vm1024 = vweird.f32 %v1018
    %vm1025 = vmor %vm1023, %vm1024
    %v1026 = vsel %vm1025, %v1018, %v1022
    %v1027 = vand.u32 2147483647, %v902
    %vm1028 = vcmp.eq.f32.partialorder %v1027, 8.507059e+37
    %v1029 = vand.u32 %v902, 2147483648
    %v1030 = vor.u32 1.1754944e-38, %v1029
    %v1031 = vsel %vm1028, %v1030, %v1026
    %v1032 = vmul.f32 %v339, %v1031
    %v1033 = vrcp.pop %v903
    %v1034 = vmul.f32 %v903, %v1033
    %v1035 = vsub.f32 1.0, %v1034
    %v1036 = vmul.f32 %v1033, %v1035
    %v1037 = vadd.f32 %v1033, %v1036
    %vm1038 = vweird.f32 %v903
    %vm1039 = vweird.f32 %v1033
    %vm1040 = vmor %vm1038, %vm1039
    %v1041 = vsel %vm1040, %v1033, %v1037
    %v1042 = vand.u32 2147483647, %v903
    %vm1043 = vcmp.eq.f32.partialorder %v1042, 8.507059e+37
    %v1044 = vand.u32 %v903, 2147483648
    %v1045 = vor.u32 1.1754944e-38, %v1044
    %v1046 = vsel %vm1043, %v1045, %v1041
    %v1047 = vmul.f32 %v342, %v1046
    %v1048 = vrcp.pop %v904
    %v1049 = vmul.f32 %v904, %v1048
    %v1050 = vsub.f32 1.0, %v1049
    %v1051 = vmul.f32 %v1048, %v1050
    %v1052 = vadd.f32 %v1048, %v1051
    %vm1053 = vweird.f32 %v904
    %vm1054 = vweird.f32 %v1048
    %vm1055 = vmor %vm1053, %vm1054
    %v1056 = vsel %vm1055, %v1048, %v1052
    %v1057 = vand.u32 2147483647, %v904
    %vm1058 = vcmp.eq.f32.partialorder %v1057, 8.507059e+37
    %v1059 = vand.u32 %v904, 2147483648
    %v1060 = vor.u32 1.1754944e-38, %v1059
    %v1061 = vsel %vm1058, %v1060, %v1056
    %v1062 = vmul.f32 %v345, %v1061
    %v1063 = vrcp.pop %v905
    %v1064 = vmul.f32 %v905, %v1063
    %v1065 = vsub.f32 1.0, %v1064
    %v1066 = vmul.f32 %v1063, %v1065
    %v1067 = vadd.f32 %v1063, %v1066
    %vm1068 = vweird.f32 %v905
    %vm1069 = vweird.f32 %v1063
    %vm1070 = vmor %vm1068, %vm1069
    %v1071 = vsel %vm1070, %v1063, %v1067
    %v1072 = vand.u32 2147483647, %v905
    %vm1073 = vcmp.eq.f32.partialorder %v1072, 8.507059e+37
    %v1074 = vand.u32 %v905, 2147483648
    %v1075 = vor.u32 1.1754944e-38, %v1074
    %v1076 = vsel %vm1073, %v1075, %v1071
    %v1077 = vmul.f32 %v348, %v1076
    %v1078 = vrcp.pop %v906
    %v1079 = vmul.f32 %v906, %v1078
    %v1080 = vsub.f32 1.0, %v1079
    %v1081 = vmul.f32 %v1078, %v1080
    %v1082 = vadd.f32 %v1078, %v1081
    %vm1083 = vweird.f32 %v906
    %vm1084 = vweird.f32 %v1078
    %vm1085 = vmor %vm1083, %vm1084
    %v1086 = vsel %vm1085, %v1078, %v1082
    %v1087 = vand.u32 2147483647, %v906
    %vm1088 = vcmp.eq.f32.partialorder %v1087, 8.507059e+37
    %v1089 = vand.u32 %v906, 2147483648
    %v1090 = vor.u32 1.1754944e-38, %v1089
    %v1091 = vsel %vm1088, %v1090, %v1086
    %v1092 = vmul.f32 %v351, %v1091
    %v1093 = vrcp.pop %v907
    %v1094 = vmul.f32 %v907, %v1093
    %v1095 = vsub.f32 1.0, %v1094
    %v1096 = vmul.f32 %v1093, %v1095
    %v1097 = vadd.f32 %v1093, %v1096
    %vm1098 = vweird.f32 %v907
    %vm1099 = vweird.f32 %v1093
    %vm1100 = vmor %vm1098, %vm1099
    %v1101 = vsel %vm1100, %v1093, %v1097
    %v1102 = vand.u32 2147483647, %v907
    %vm1103 = vcmp.eq.f32.partialorder %v1102, 8.507059e+37
    %v1104 = vand.u32 %v907, 2147483648
    %v1105 = vor.u32 1.1754944e-38, %v1104
    %v1106 = vsel %vm1103, %v1105, %v1101
    %v1107 = vmul.f32 %v354, %v1106
    %v1108 = vrcp.pop %v908
    %v1109 = vmul.f32 %v908, %v1108
    %v1110 = vsub.f32 1.0, %v1109
    %v1111 = vmul.f32 %v1108, %v1110
    %v1112 = vadd.f32 %v1108, %v1111
    %vm1113 = vweird.f32 %v908
    %vm1114 = vweird.f32 %v1108
    %vm1115 = vmor %vm1113, %vm1114
    %v1116 = vsel %vm1115, %v1108, %v1112
    %v1117 = vand.u32 2147483647, %v908
    %vm1118 = vcmp.eq.f32.partialorder %v1117, 8.507059e+37
    %v1119 = vand.u32 %v908, 2147483648
    %v1120 = vor.u32 1.1754944e-38, %v1119
    %v1121 = vsel %vm1118, %v1120, %v1116
    %v1122 = vmul.f32 %v357, %v1121
    %v1123 = vrcp.pop %v909
    %v1124 = vmul.f32 %v909, %v1123
    %v1125 = vsub.f32 1.0, %v1124
    %v1126 = vmul.f32 %v1123, %v1125
    %v1127 = vadd.f32 %v1123, %v1126
    %vm1128 = vweird.f32 %v909
    %vm1129 = vweird.f32 %v1123
    %vm1130 = vmor %vm1128, %vm1129
    %v1131 = vsel %vm1130, %v1123, %v1127
    %v1132 = vand.u32 2147483647, %v909
    %vm1133 = vcmp.eq.f32.partialorder %v1132, 8.507059e+37
    %v1134 = vand.u32 %v909, 2147483648
    %v1135 = vor.u32 1.1754944e-38, %v1134
    %v1136 = vsel %vm1133, %v1135, %v1131
    %v1137 = vmul.f32 %v360, %v1136
    %v1138 = vrcp.pop %v910
    %v1139 = vmul.f32 %v910, %v1138
    %v1140 = vsub.f32 1.0, %v1139
    %v1141 = vmul.f32 %v1138, %v1140
    %v1142 = vadd.f32 %v1138, %v1141
    %vm1143 = vweird.f32 %v910
    %vm1144 = vweird.f32 %v1138
    %vm1145 = vmor %vm1143, %vm1144
    %v1146 = vsel %vm1145, %v1138, %v1142
    %v1147 = vand.u32 2147483647, %v910
    %vm1148 = vcmp.eq.f32.partialorder %v1147, 8.507059e+37
    %v1149 = vand.u32 %v910, 2147483648
    %v1150 = vor.u32 1.1754944e-38, %v1149
    %v1151 = vsel %vm1148, %v1150, %v1146
    %v1152 = vmul.f32 %v363, %v1151
    %v1153 = vrcp.pop %v911
    %v1154 = vmul.f32 %v911, %v1153
    %v1155 = vsub.f32 1.0, %v1154
    %v1156 = vmul.f32 %v1153, %v1155
    %v1157 = vadd.f32 %v1153, %v1156
    %vm1158 = vweird.f32 %v911
    %vm1159 = vweird.f32 %v1153
    %vm1160 = vmor %vm1158, %vm1159
    %v1161 = vsel %vm1160, %v1153, %v1157
    %v1162 = vand.u32 2147483647, %v911
    %vm1163 = vcmp.eq.f32.partialorder %v1162, 8.507059e+37
    %v1164 = vand.u32 %v911, 2147483648
    %v1165 = vor.u32 1.1754944e-38, %v1164
    %v1166 = vsel %vm1163, %v1165, %v1161
    %v1167 = vmul.f32 %v366, %v1166
    %v1168 = vrcp.pop %v912
    %v1169 = vmul.f32 %v912, %v1168
    %v1170 = vsub.f32 1.0, %v1169
    %v1171 = vmul.f32 %v1168, %v1170
    %v1172 = vadd.f32 %v1168, %v1171
    %vm1173 = vweird.f32 %v912
    %vm1174 = vweird.f32 %v1168
    %vm1175 = vmor %vm1173, %vm1174
    %v1176 = vsel %vm1175, %v1168, %v1172
    %v1177 = vand.u32 2147483647, %v912
    %vm1178 = vcmp.eq.f32.partialorder %v1177, 8.507059e+37
    %v1179 = vand.u32 %v912, 2147483648
    %v1180 = vor.u32 1.1754944e-38, %v1179
    %v1181 = vsel %vm1178, %v1180, %v1176
    %v1182 = vmul.f32 %v369, %v1181
    %v1183 = vrcp.pop %v913
    %v1184 = vmul.f32 %v913, %v1183
    %v1185 = vsub.f32 1.0, %v1184
    %v1186 = vmul.f32 %v1183, %v1185
    %v1187 = vadd.f32 %v1183, %v1186
    %vm1188 = vweird.f32 %v913
    %vm1189 = vweird.f32 %v1183
    %vm1190 = vmor %vm1188, %vm1189
    %v1191 = vsel %vm1190, %v1183, %v1187
    %v1192 = vand.u32 2147483647, %v913
    %vm1193 = vcmp.eq.f32.partialorder %v1192, 8.507059e+37
    %v1194 = vand.u32 %v913, 2147483648
    %v1195 = vor.u32 1.1754944e-38, %v1194
    %v1196 = vsel %vm1193, %v1195, %v1191
    %v1197 = vmul.f32 %v372, %v1196
    %v1198 = vrcp.pop %v914
    %v1199 = vmul.f32 %v914, %v1198
    %v1200 = vsub.f32 1.0, %v1199
    %v1201 = vmul.f32 %v1198, %v1200
    %v1202 = vadd.f32 %v1198, %v1201
    %vm1203 = vweird.f32 %v914
    %vm1204 = vweird.f32 %v1198
    %vm1205 = vmor %vm1203, %vm1204
    %v1206 = vsel %vm1205, %v1198, %v1202
    %v1207 = vand.u32 2147483647, %v914
    %vm1208 = vcmp.eq.f32.partialorder %v1207, 8.507059e+37
    %v1209 = vand.u32 %v914, 2147483648
    %v1210 = vor.u32 1.1754944e-38, %v1209
    %v1211 = vsel %vm1208, %v1210, %v1206
    %v1212 = vmul.f32 %v375, %v1211
    %v1213 = vrcp.pop %v915
    %v1214 = vmul.f32 %v915, %v1213
    %v1215 = vsub.f32 1.0, %v1214
    %v1216 = vmul.f32 %v1213, %v1215
    %v1217 = vadd.f32 %v1213, %v1216
    %vm1218 = vweird.f32 %v915
    %vm1219 = vweird.f32 %v1213
    %vm1220 = vmor %vm1218, %vm1219
    %v1221 = vsel %vm1220, %v1213, %v1217
    %v1222 = vand.u32 2147483647, %v915
    %vm1223 = vcmp.eq.f32.partialorder %v1222, 8.507059e+37
    %v1224 = vand.u32 %v915, 2147483648
    %v1225 = vor.u32 1.1754944e-38, %v1224
    %v1226 = vsel %vm1223, %v1225, %v1221
    %v1227 = vmul.f32 %v378, %v1226
    %v1228 = vrcp.pop %v916
    %v1229 = vmul.f32 %v916, %v1228
    %v1230 = vsub.f32 1.0, %v1229
    %v1231 = vmul.f32 %v1228, %v1230
    %v1232 = vadd.f32 %v1228, %v1231
    %vm1233 = vweird.f32 %v916
    %vm1234 = vweird.f32 %v1228
    %vm1235 = vmor %vm1233, %vm1234
    %v1236 = vsel %vm1235, %v1228, %v1232
    %v1237 = vand.u32 2147483647, %v916
    %vm1238 = vcmp.eq.f32.partialorder %v1237, 8.507059e+37
    %v1239 = vand.u32 %v916, 2147483648
    %v1240 = vor.u32 1.1754944e-38, %v1239
    %v1241 = vsel %vm1238, %v1240, %v1236
    %v1242 = vmul.f32 %v381, %v1241
    %v1243 = vrcp.pop %v917
    %v1244 = vmul.f32 %v917, %v1243
    %v1245 = vsub.f32 1.0, %v1244
    %v1246 = vmul.f32 %v1243, %v1245
    %v1247 = vadd.f32 %v1243, %v1246
    %vm1248 = vweird.f32 %v917
    %vm1249 = vweird.f32 %v1243
    %vm1250 = vmor %vm1248, %vm1249
    %v1251 = vsel %vm1250, %v1243, %v1247
    %v1252 = vand.u32 2147483647, %v917
    %vm1253 = vcmp.eq.f32.partialorder %v1252, 8.507059e+37
    %v1254 = vand.u32 %v917, 2147483648
    %v1255 = vor.u32 1.1754944e-38, %v1254
    %v1256 = vsel %vm1253, %v1255, %v1251
    %v1257 = vmul.f32 %v384, %v1256
    %v1258 = vrcp.pop %v918
    %v1259 = vmul.f32 %v918, %v1258
    %v1260 = vsub.f32 1.0, %v1259
    %v1261 = vmul.f32 %v1258, %v1260
    %v1262 = vadd.f32 %v1258, %v1261
    %vm1263 = vweird.f32 %v918
    %vm1264 = vweird.f32 %v1258
    %vm1265 = vmor %vm1263, %vm1264
    %v1266 = vsel %vm1265, %v1258, %v1262
    %v1267 = vand.u32 2147483647, %v918
    %vm1268 = vcmp.eq.f32.partialorder %v1267, 8.507059e+37
    %v1269 = vand.u32 %v918, 2147483648
    %v1270 = vor.u32 1.1754944e-38, %v1269
    %v1271 = vsel %vm1268, %v1270, %v1266
    %v1272 = vmul.f32 %v387, %v1271
    %v1273 = vrcp.pop %v919
    %v1274 = vmul.f32 %v919, %v1273
    %v1275 = vsub.f32 1.0, %v1274
    %v1276 = vmul.f32 %v1273, %v1275
    %v1277 = vadd.f32 %v1273, %v1276
    %vm1278 = vweird.f32 %v919
    %vm1279 = vweird.f32 %v1273
    %vm1280 = vmor %vm1278, %vm1279
    %v1281 = vsel %vm1280, %v1273, %v1277
    %v1282 = vand.u32 2147483647, %v919
    %vm1283 = vcmp.eq.f32.partialorder %v1282, 8.507059e+37
    %v1284 = vand.u32 %v919, 2147483648
    %v1285 = vor.u32 1.1754944e-38, %v1284
    %v1286 = vsel %vm1283, %v1285, %v1281
    %v1287 = vmul.f32 %v390, %v1286
    %v1288 = vrcp.pop %v920
    %v1289 = vmul.f32 %v920, %v1288
    %v1290 = vsub.f32 1.0, %v1289
    %v1291 = vmul.f32 %v1288, %v1290
    %v1292 = vadd.f32 %v1288, %v1291
    %vm1293 = vweird.f32 %v920
    %vm1294 = vweird.f32 %v1288
    %vm1295 = vmor %vm1293, %vm1294
    %v1296 = vsel %vm1295, %v1288, %v1292
    %v1297 = vand.u32 2147483647, %v920
    %vm1298 = vcmp.eq.f32.partialorder %v1297, 8.507059e+37
    %v1299 = vand.u32 %v920, 2147483648
    %v1300 = vor.u32 1.1754944e-38, %v1299
    %v1301 = vsel %vm1298, %v1300, %v1296
    %v1302 = vmul.f32 %v393, %v1301
    %v1303 = vrcp.pop %v921
    %v1304 = vmul.f32 %v921, %v1303
    %v1305 = vsub.f32 1.0, %v1304
    %v1306 = vmul.f32 %v1303, %v1305
    %v1307 = vadd.f32 %v1303, %v1306
    %vm1308 = vweird.f32 %v921
    %vm1309 = vweird.f32 %v1303
    %vm1310 = vmor %vm1308, %vm1309
    %v1311 = vsel %vm1310, %v1303, %v1307
    %v1312 = vand.u32 2147483647, %v921
    %vm1313 = vcmp.eq.f32.partialorder %v1312, 8.507059e+37
    %v1314 = vand.u32 %v921, 2147483648
    %v1315 = vor.u32 1.1754944e-38, %v1314
    %v1316 = vsel %vm1313, %v1315, %v1311
    %v1317 = vmul.f32 %v396, %v1316
    %v1318 = vrcp.pop %v922
    %v1319 = vmul.f32 %v922, %v1318
    %v1320 = vsub.f32 1.0, %v1319
    %v1321 = vmul.f32 %v1318, %v1320
    %v1322 = vadd.f32 %v1318, %v1321
    %vm1323 = vweird.f32 %v922
    %vm1324 = vweird.f32 %v1318
    %vm1325 = vmor %vm1323, %vm1324
    %v1326 = vsel %vm1325, %v1318, %v1322
    %v1327 = vand.u32 2147483647, %v922
    %vm1328 = vcmp.eq.f32.partialorder %v1327, 8.507059e+37
    %v1329 = vand.u32 %v922, 2147483648
    %v1330 = vor.u32 1.1754944e-38, %v1329
    %v1331 = vsel %vm1328, %v1330, %v1326
    %v1332 = vmul.f32 %v399, %v1331
    %v1333 = vrcp.pop %v923
    %v1334 = vmul.f32 %v923, %v1333
    %v1335 = vsub.f32 1.0, %v1334
    %v1336 = vmul.f32 %v1333, %v1335
    %v1337 = vadd.f32 %v1333, %v1336
    %vm1338 = vweird.f32 %v923
    %vm1339 = vweird.f32 %v1333
    %vm1340 = vmor %vm1338, %vm1339
    %v1341 = vsel %vm1340, %v1333, %v1337
    %v1342 = vand.u32 2147483647, %v923
    %vm1343 = vcmp.eq.f32.partialorder %v1342, 8.507059e+37
    %v1344 = vand.u32 %v923, 2147483648
    %v1345 = vor.u32 1.1754944e-38, %v1344
    %v1346 = vsel %vm1343, %v1345, %v1341
    %v1347 = vmul.f32 %v402, %v1346
    %v1348 = vrcp.pop %v924
    %v1349 = vmul.f32 %v924, %v1348
    %v1350 = vsub.f32 1.0, %v1349
    %v1351 = vmul.f32 %v1348, %v1350
    %v1352 = vadd.f32 %v1348, %v1351
    %vm1353 = vweird.f32 %v924
    %vm1354 = vweird.f32 %v1348
    %vm1355 = vmor %vm1353, %vm1354
    %v1356 = vsel %vm1355, %v1348, %v1352
    %v1357 = vand.u32 2147483647, %v924
    %vm1358 = vcmp.eq.f32.partialorder %v1357, 8.507059e+37
    %v1359 = vand.u32 %v924, 2147483648
    %v1360 = vor.u32 1.1754944e-38, %v1359
    %v1361 = vsel %vm1358, %v1360, %v1356
    %v1362 = vmul.f32 %v405, %v1361
    %v1363 = vrcp.pop %v925
    %v1364 = vmul.f32 %v925, %v1363
    %v1365 = vsub.f32 1.0, %v1364
    %v1366 = vmul.f32 %v1363, %v1365
    %v1367 = vadd.f32 %v1363, %v1366
    %vm1368 = vweird.f32 %v925
    %vm1369 = vweird.f32 %v1363
    %vm1370 = vmor %vm1368, %vm1369
    %v1371 = vsel %vm1370, %v1363, %v1367
    %v1372 = vand.u32 2147483647, %v925
    %vm1373 = vcmp.eq.f32.partialorder %v1372, 8.507059e+37
    %v1374 = vand.u32 %v925, 2147483648
    %v1375 = vor.u32 1.1754944e-38, %v1374
    %v1376 = vsel %vm1373, %v1375, %v1371
    %v1377 = vmul.f32 %v408, %v1376
    %v1378 = vrcp.pop %v926
    %v1379 = vmul.f32 %v926, %v1378
    %v1380 = vsub.f32 1.0, %v1379
    %v1381 = vmul.f32 %v1378, %v1380
    %v1382 = vadd.f32 %v1378, %v1381
    %vm1383 = vweird.f32 %v926
    %vm1384 = vweird.f32 %v1378
    %vm1385 = vmor %vm1383, %vm1384
    %v1386 = vsel %vm1385, %v1378, %v1382
    %v1387 = vand.u32 2147483647, %v926
    %vm1388 = vcmp.eq.f32.partialorder %v1387, 8.507059e+37
    %v1389 = vand.u32 %v926, 2147483648
    %v1390 = vor.u32 1.1754944e-38, %v1389
    %v1391 = vsel %vm1388, %v1390, %v1386
    %v1392 = vmul.f32 %v411, %v1391
    %v1393 = vrcp.pop %v927
    %v1394 = vmul.f32 %v927, %v1393
    %v1395 = vsub.f32 1.0, %v1394
    %v1396 = vmul.f32 %v1393, %v1395
    %v1397 = vadd.f32 %v1393, %v1396
    %vm1398 = vweird.f32 %v927
    %vm1399 = vweird.f32 %v1393
    %vm1400 = vmor %vm1398, %vm1399
    %v1401 = vsel %vm1400, %v1393, %v1397
    %v1402 = vand.u32 2147483647, %v927
    %vm1403 = vcmp.eq.f32.partialorder %v1402, 8.507059e+37
    %v1404 = vand.u32 %v927, 2147483648
    %v1405 = vor.u32 1.1754944e-38, %v1404
    %v1406 = vsel %vm1403, %v1405, %v1401
    %v1407 = vmul.f32 %v414, %v1406
    %v1408 = vld [vmem:[#allocation7] sm:$0xff]
    %v1409 = vld [vmem:[#allocation7 + $0x8] sm:$0xff]
    %v1410 = vld [vmem:[#allocation7 + $0x10] sm:$0xff]
    %v1411 = vld [vmem:[#allocation7 + $0x18] sm:$0xff]
    %v1412 = vld [vmem:[#allocation7 + $0x20] sm:$0xff]
    %v1413 = vld [vmem:[#allocation7 + $0x28] sm:$0xff]
    %v1414 = vld [vmem:[#allocation7 + $0x30] sm:$0xff]
    %v1415 = vld [vmem:[#allocation7 + $0x38] sm:$0xff]
    %v1416 = vld [vmem:[#allocation7 + $0x40] sm:$0xff]
    %v1417 = vld [vmem:[#allocation7 + $0x48] sm:$0xff]
    %v1418 = vld [vmem:[#allocation7 + $0x50] sm:$0xff]
    %v1419 = vld [vmem:[#allocation7 + $0x58] sm:$0xff]
    %v1420 = vld [vmem:[#allocation7 + $0x60] sm:$0xff]
    %v1421 = vld [vmem:[#allocation7 + $0x68] sm:$0xff]
    %v1422 = vld [vmem:[#allocation7 + $0x70] sm:$0xff]
    %v1423 = vld [vmem:[#allocation7 + $0x78] sm:$0xff]
    %v1424 = vld [vmem:[#allocation7 + $0x80] sm:$0xff]
    %v1425 = vld [vmem:[#allocation7 + $0x88] sm:$0xff]
    %v1426 = vld [vmem:[#allocation7 + $0x90] sm:$0xff]
    %v1427 = vld [vmem:[#allocation7 + $0x98] sm:$0xff]
    %v1428 = vld [vmem:[#allocation7 + $0xa0] sm:$0xff]
    %v1429 = vld [vmem:[#allocation7 + $0xa8] sm:$0xff]
    %v1430 = vld [vmem:[#allocation7 + $0xb0] sm:$0xff]
    %v1431 = vld [vmem:[#allocation7 + $0xb8] sm:$0xff]
    %v1432 = vld [vmem:[#allocation7 + $0xc0] sm:$0xff]
    %v1433 = vld [vmem:[#allocation7 + $0xc8] sm:$0xff]
    %v1434 = vld [vmem:[#allocation7 + $0xd0] sm:$0xff]
    %v1435 = vld [vmem:[#allocation7 + $0xd8] sm:$0xff]
    %v1436 = vld [vmem:[#allocation7 + $0xe0] sm:$0xff]
    %v1437 = vld [vmem:[#allocation7 + $0xe8] sm:$0xff]
    %v1438 = vld [vmem:[#allocation7 + $0xf0] sm:$0xff]
    %v1439 = vld [vmem:[#allocation7 + $0xf8] sm:$0xff]
    %1441 = vset.pattern.permute.xlu0 2
    %1442 = vperm.xlu0 %1441, %v1408
    %v1443 = vpop.permute.xlu0 %1442
    %1446 = vset.pattern.permute.xlu0 2
    %1447 = vperm.xlu0 %1446, %v1409
    %v1448 = vpop.permute.xlu0 %1447
    %1451 = vset.pattern.permute.xlu0 2
    %1452 = vperm.xlu0 %1451, %v1410
    %v1453 = vpop.permute.xlu0 %1452
    %1456 = vset.pattern.permute.xlu0 2
    %1457 = vperm.xlu0 %1456, %v1411
    %v1458 = vpop.permute.xlu0 %1457
    %1461 = vset.pattern.permute.xlu0 2
    %1462 = vperm.xlu0 %1461, %v1412
    %v1463 = vpop.permute.xlu0 %1462
    %1466 = vset.pattern.permute.xlu0 2
    %1467 = vperm.xlu0 %1466, %v1413
    %v1468 = vpop.permute.xlu0 %1467
    %1471 = vset.pattern.permute.xlu0 2
    %1472 = vperm.xlu0 %1471, %v1414
    %v1473 = vpop.permute.xlu0 %1472
    %1476 = vset.pattern.permute.xlu0 2
    %1477 = vperm.xlu0 %1476, %v1415
    %v1478 = vpop.permute.xlu0 %1477
    %1481 = vset.pattern.permute.xlu0 2
    %1482 = vperm.xlu0 %1481, %v1416
    %v1483 = vpop.permute.xlu0 %1482
    %1486 = vset.pattern.permute.xlu0 2
    %1487 = vperm.xlu0 %1486, %v1417
    %v1488 = vpop.permute.xlu0 %1487
    %1491 = vset.pattern.permute.xlu0 2
    %1492 = vperm.xlu0 %1491, %v1418
    %v1493 = vpop.permute.xlu0 %1492
    %1496 = vset.pattern.permute.xlu0 2
    %1497 = vperm.xlu0 %1496, %v1419
    %v1498 = vpop.permute.xlu0 %1497
    %1501 = vset.pattern.permute.xlu0 2
    %1502 = vperm.xlu0 %1501, %v1420
    %v1503 = vpop.permute.xlu0 %1502
    %1506 = vset.pattern.permute.xlu0 2
    %1507 = vperm.xlu0 %1506, %v1421
    %v1508 = vpop.permute.xlu0 %1507
    %1511 = vset.pattern.permute.xlu0 2
    %1512 = vperm.xlu0 %1511, %v1422
    %v1513 = vpop.permute.xlu0 %1512
    %1516 = vset.pattern.permute.xlu0 2
    %1517 = vperm.xlu0 %1516, %v1423
    %v1518 = vpop.permute.xlu0 %1517
    %1521 = vset.pattern.permute.xlu0 2
    %1522 = vperm.xlu0 %1521, %v1424
    %v1523 = vpop.permute.xlu0 %1522
    %1526 = vset.pattern.permute.xlu0 2
    %1527 = vperm.xlu0 %1526, %v1425
    %v1528 = vpop.permute.xlu0 %1527
    %1531 = vset.pattern.permute.xlu0 2
    %1532 = vperm.xlu0 %1531, %v1426
    %v1533 = vpop.permute.xlu0 %1532
    %1536 = vset.pattern.permute.xlu0 2
    %1537 = vperm.xlu0 %1536, %v1427
    %v1538 = vpop.permute.xlu0 %1537
    %1541 = vset.pattern.permute.xlu0 2
    %1542 = vperm.xlu0 %1541, %v1428
    %v1543 = vpop.permute.xlu0 %1542
    %1546 = vset.pattern.permute.xlu0 2
    %1547 = vperm.xlu0 %1546, %v1429
    %v1548 = vpop.permute.xlu0 %1547
    %1551 = vset.pattern.permute.xlu0 2
    %1552 = vperm.xlu0 %1551, %v1430
    %v1553 = vpop.permute.xlu0 %1552
    %1556 = vset.pattern.permute.xlu0 2
    %1557 = vperm.xlu0 %1556, %v1431
    %v1558 = vpop.permute.xlu0 %1557
    %1561 = vset.pattern.permute.xlu0 2
    %1562 = vperm.xlu0 %1561, %v1432
    %v1563 = vpop.permute.xlu0 %1562
    %1566 = vset.pattern.permute.xlu0 2
    %1567 = vperm.xlu0 %1566, %v1433
    %v1568 = vpop.permute.xlu0 %1567
    %1571 = vset.pattern.permute.xlu0 2
    %1572 = vperm.xlu0 %1571, %v1434
    %v1573 = vpop.permute.xlu0 %1572
    %1576 = vset.pattern.permute.xlu0 2
    %1577 = vperm.xlu0 %1576, %v1435
    %v1578 = vpop.permute.xlu0 %1577
    %1581 = vset.pattern.permute.xlu0 2
    %1582 = vperm.xlu0 %1581, %v1436
    %v1583 = vpop.permute.xlu0 %1582
    %1586 = vset.pattern.permute.xlu0 2
    %1587 = vperm.xlu0 %1586, %v1437
    %v1588 = vpop.permute.xlu0 %1587
    %1591 = vset.pattern.permute.xlu0 2
    %1592 = vperm.xlu0 %1591, %v1438
    %v1593 = vpop.permute.xlu0 %1592
    %1596 = vset.pattern.permute.xlu0 2
    %1597 = vperm.xlu0 %1596, %v1439
    %v1598 = vpop.permute.xlu0 %1597
    %v1600 = vmul.f32 %v942, %v1443
    %v1601 = vmul.f32 %v957, %v1448
    %v1602 = vmul.f32 %v972, %v1453
    %v1603 = vmul.f32 %v987, %v1458
    %v1604 = vmul.f32 %v1002, %v1463
    %v1605 = vmul.f32 %v1017, %v1468
    %v1606 = vmul.f32 %v1032, %v1473
    %v1607 = vmul.f32 %v1047, %v1478
    %v1608 = vmul.f32 %v1062, %v1483
    %v1609 = vmul.f32 %v1077, %v1488
    %v1610 = vmul.f32 %v1092, %v1493
    %v1611 = vmul.f32 %v1107, %v1498
    %v1612 = vmul.f32 %v1122, %v1503
    %v1613 = vmul.f32 %v1137, %v1508
    %v1614 = vmul.f32 %v1152, %v1513
    %v1615 = vmul.f32 %v1167, %v1518
    %v1616 = vmul.f32 %v1182, %v1523
    %v1617 = vmul.f32 %v1197, %v1528
    %v1618 = vmul.f32 %v1212, %v1533
    %v1619 = vmul.f32 %v1227, %v1538
    %v1620 = vmul.f32 %v1242, %v1543
    %v1621 = vmul.f32 %v1257, %v1548
    %v1622 = vmul.f32 %v1272, %v1553
    %v1623 = vmul.f32 %v1287, %v1558
    %v1624 = vmul.f32 %v1302, %v1563
    %v1625 = vmul.f32 %v1317, %v1568
    %v1626 = vmul.f32 %v1332, %v1573
    %v1627 = vmul.f32 %v1347, %v1578
    %v1628 = vmul.f32 %v1362, %v1583
    %v1629 = vmul.f32 %v1377, %v1588
    %v1630 = vmul.f32 %v1392, %v1593
    %v1631 = vmul.f32 %v1407, %v1598
    %1632 = vst [vmem:[%s6] sm:$0xff] %v1600
    %1633 = vst [vmem:[%s6 + $0x8] sm:$0xff] %v1601
    %1634 = vst [vmem:[%s6 + $0x10] sm:$0xff] %v1602
    %1635 = vst [vmem:[%s6 + $0x18] sm:$0xff] %v1603
    %1636 = vst [vmem:[%s6 + $0x20] sm:$0xff] %v1604
    %1637 = vst [vmem:[%s6 + $0x28] sm:$0xff] %v1605
    %1638 = vst [vmem:[%s6 + $0x30] sm:$0xff] %v1606
    %1639 = vst [vmem:[%s6 + $0x38] sm:$0xff] %v1607
    %1640 = vst [vmem:[%s6 + $0x40] sm:$0xff] %v1608
    %1641 = vst [vmem:[%s6 + $0x48] sm:$0xff] %v1609
    %1642 = vst [vmem:[%s6 + $0x50] sm:$0xff] %v1610
    %1643 = vst [vmem:[%s6 + $0x58] sm:$0xff] %v1611
    %1644 = vst [vmem:[%s6 + $0x60] sm:$0xff] %v1612
    %1645 = vst [vmem:[%s6 + $0x68] sm:$0xff] %v1613
    %1646 = vst [vmem:[%s6 + $0x70] sm:$0xff] %v1614
    %1647 = vst [vmem:[%s6 + $0x78] sm:$0xff] %v1615
    %1648 = vst [vmem:[%s6 + $0x80] sm:$0xff] %v1616
    %1649 = vst [vmem:[%s6 + $0x88] sm:$0xff] %v1617
    %1650 = vst [vmem:[%s6 + $0x90] sm:$0xff] %v1618
    %1651 = vst [vmem:[%s6 + $0x98] sm:$0xff] %v1619
    %1652 = vst [vmem:[%s6 + $0xa0] sm:$0xff] %v1620
    %1653 = vst [vmem:[%s6 + $0xa8] sm:$0xff] %v1621
    %1654 = vst [vmem:[%s6 + $0xb0] sm:$0xff] %v1622
    %1655 = vst [vmem:[%s6 + $0xb8] sm:$0xff] %v1623
    %1656 = vst [vmem:[%s6 + $0xc0] sm:$0xff] %v1624
    %1657 = vst [vmem:[%s6 + $0xc8] sm:$0xff] %v1625
    %1658 = vst [vmem:[%s6 + $0xd0] sm:$0xff] %v1626
    %1659 = vst [vmem:[%s6 + $0xd8] sm:$0xff] %v1627
    %1660 = vst [vmem:[%s6 + $0xe0] sm:$0xff] %v1628
    %1661 = vst [vmem:[%s6 + $0xe8] sm:$0xff] %v1629
    %1662 = vst [vmem:[%s6 + $0xf0] sm:$0xff] %v1630
    %1663 = vst [vmem:[%s6 + $0xf8] sm:$0xff] %v1631
    // Predicated region
    $region42: #{_device_forward.2} parent=1 // pred_check
      _
    $region43: #{_device_forward.2} parent=1 // pred_check_branch
      %1665 = sbr.rel (0) target = $region45
    $region44: #{_device_forward.2} parent=1 // pred_region
      _
    $region45: #{_device_forward.2} parent=1 // pred_fallthru
      _
    // Predicated region
    $region46: #{_device_forward.2} parent=1 // pred_check
      _
    $region47: #{_device_forward.2} parent=1 // pred_check_branch
      %1667 = sbr.rel (0) target = $region49
    $region48: #{_device_forward.2} parent=1 // pred_region
      _
    $region49: #{_device_forward.2} parent=1 // pred_fallthru
      _
    %1668 = vsyncpa [#allocation3], 1
    %1669 = vsyncpa [#allocation5], 1
    %1670 = vsyncpa [#allocation8], 1

// kernel: _device_forward.3
$region0: #{_device_forward.3}
  #allocation0 [shape = 'u32[]', space=smem, size = 0x4, offset = 0x4, fixed_abs, tag = 'smem constant byte address 0x4 - core index']
  #allocation1 [shape = 'u32[72,128]{1,0:T(1,128)}', space=vmem, size = 0x9000, scoped, tag = 'internal scratch']
  %s0 = inlined_call_operand.vmem [shape: f32[256,128], index: 0, kind: input, shape index: {}, may-alias: {0,1}]
  %s1 = inlined_call_operand.vmem [shape: f32[256,128], index: 1, kind: input, shape index: {}, may-alias: {0,1}]
  %s2 = inlined_call_operand.hbm [shape: f32[256,128], index: 2, kind: input, shape index: {}]
  %s3 = inlined_call_operand.hbm [shape: f32[8,256], index: 3, kind: input, shape index: {}]
  %s4 = inlined_call_operand.vmem [shape: f32[8,128], index: 4, kind: output, shape index: {}]
  %s5 = sld [smem:[#allocation0]]
  $region34: #{_device_forward.3} parent=0
    _
  %s7 = ssub.s32 1, %s5
  %s8 = scalar_select 0, %s7, %s5
  $region1: #{_device_forward.3} parent=0
    #allocation2 [shape = 'u8[131072]{0}', space=vmem, size = 0x20000, scoped, tag = 'input window, operand 2, single buffered']
    #allocation3 [shape = 's32[1]{0}', space=sflag, size = 0x4, scoped, tag = 'scoped memory for _device_forward.3']
    #allocation4 [shape = 'u8[8192]{0}', space=vmem, size = 0x2000, scoped, tag = 'input window, operand 3, single buffered']
    #allocation5 [shape = 's32[1]{0}', space=sflag, size = 0x4, scoped, tag = 'scoped memory for _device_forward.3']
    %9 = vsyncpa [#allocation3], 0
    %10 = vsyncpa [#allocation5], 0
    // Predicated region
    $region2: #{_device_forward.3} parent=1 // pred_check
      _
    $region3: #{_device_forward.3} parent=1 // pred_check_branch
      %12 = sbr.rel (0) target = $region5
    $region4: #{_device_forward.3} parent=1 // pred_region
      _
    $region5: #{_device_forward.3} parent=1 // pred_fallthru
      _
    // Predicated region
    $region6: #{_device_forward.3} parent=1 // pred_check
      _
    $region7: #{_device_forward.3} parent=1 // pred_check_branch
      %14 = sbr.rel (0) target = $region9
    $region8: #{_device_forward.3} parent=1 // pred_region
      _
    $region9: #{_device_forward.3} parent=1 // pred_fallthru
      _
    // Predicated region
    $region10: #{_device_forward.3} parent=1 // pred_check
      _
    $region11: #{_device_forward.3} parent=1 // pred_check_branch
      %16 = sbr.rel (0) target = $region13
    $region12: #{_device_forward.3} parent=1 // pred_region
      %18 = vsyncadd [#allocation3], 0
      %s19 = sshll.u32 %s2, 4
      %s20 = int_to_ptr.hbm [resolvable:$true] %s19
      %s21 = sshll.u32 [#allocation2], 4
      %s22 = int_to_ptr.vmem [resolvable:$true] %s21
      %27 = dma.hbm_to_vmem [thread:$0]  %s20, 4096, %s22, [#allocation3], 128, 128, 8
    $region13: #{_device_forward.3} parent=1 // pred_fallthru
      _
    // Predicated region
    $region14: #{_device_forward.3} parent=1 // pred_check
      _
    $region15: #{_device_forward.3} parent=1 // pred_check_branch
      %29 = sbr.rel (0) target = $region17
    $region16: #{_device_forward.3} parent=1 // pred_region
      %31 = vsyncadd [#allocation5], 0
      %s33 = sshll.u32 %s3, 4
      %s34 = int_to_ptr.hbm [resolvable:$true] %s33
      %s35 = sshll.u32 [#allocation4], 4
      %s36 = int_to_ptr.vmem [resolvable:$true] %s35
      %38 = dma.hbm_to_vmem [thread:$0]  %s34, 256, %s36, [#allocation5]
    $region17: #{_device_forward.3} parent=1 // pred_fallthru
      _
    // Predicated region
    $region18: #{_device_forward.3} parent=1 // pred_check
      _
    $region19: #{_device_forward.3} parent=1 // pred_check_branch
      %40 = sbr.rel (0) target = $region21
    $region20: #{_device_forward.3} parent=1 // pred_region
      %42 = dma.done [#allocation3], 4096
    $region21: #{_device_forward.3} parent=1 // pred_fallthru
      _
    // Predicated region
    $region22: #{_device_forward.3} parent=1 // pred_check
      _
    $region23: #{_device_forward.3} parent=1 // pred_check_branch
      %44 = sbr.rel (0) target = $region25
    $region24: #{_device_forward.3} parent=1 // pred_region
      %46 = dma.done [#allocation5], 256
    $region25: #{_device_forward.3} parent=1 // pred_fallthru
      _
    %v47 = vld [vmem:[%s0] sm:$0xff]
    %v48 = vld [vmem:[%s0 + $0x8] sm:$0xff]
    %v49 = vld [vmem:[%s0 + $0x10] sm:$0xff]
    %v50 = vld [vmem:[%s0 + $0x18] sm:$0xff]
    %v51 = vld [vmem:[%s0 + $0x20] sm:$0xff]
    %v52 = vld [vmem:[%s0 + $0x28] sm:$0xff]
    %v53 = vld [vmem:[%s0 + $0x30] sm:$0xff]
    %v54 = vld [vmem:[%s0 + $0x38] sm:$0xff]
    %v55 = vld [vmem:[%s0 + $0x40] sm:$0xff]
    %v56 = vld [vmem:[%s0 + $0x48] sm:$0xff]
    %v57 = vld [vmem:[%s0 + $0x50] sm:$0xff]
    %v58 = vld [vmem:[%s0 + $0x58] sm:$0xff]
    %v59 = vld [vmem:[%s0 + $0x60] sm:$0xff]
    %v60 = vld [vmem:[%s0 + $0x68] sm:$0xff]
    %v61 = vld [vmem:[%s0 + $0x70] sm:$0xff]
    %v62 = vld [vmem:[%s0 + $0x78] sm:$0xff]
    %v63 = vld [vmem:[%s0 + $0x80] sm:$0xff]
    %v64 = vld [vmem:[%s0 + $0x88] sm:$0xff]
    %v65 = vld [vmem:[%s0 + $0x90] sm:$0xff]
    %v66 = vld [vmem:[%s0 + $0x98] sm:$0xff]
    %v67 = vld [vmem:[%s0 + $0xa0] sm:$0xff]
    %v68 = vld [vmem:[%s0 + $0xa8] sm:$0xff]
    %v69 = vld [vmem:[%s0 + $0xb0] sm:$0xff]
    %v70 = vld [vmem:[%s0 + $0xb8] sm:$0xff]
    %v71 = vld [vmem:[%s0 + $0xc0] sm:$0xff]
    %v72 = vld [vmem:[%s0 + $0xc8] sm:$0xff]
    %v73 = vld [vmem:[%s0 + $0xd0] sm:$0xff]
    %v74 = vld [vmem:[%s0 + $0xd8] sm:$0xff]
    %v75 = vld [vmem:[%s0 + $0xe0] sm:$0xff]
    %v76 = vld [vmem:[%s0 + $0xe8] sm:$0xff]
    %v77 = vld [vmem:[%s0 + $0xf0] sm:$0xff]
    %v78 = vld [vmem:[%s0 + $0xf8] sm:$0xff]
    %v79 = vld [vmem:[%s1] sm:$0xff]
    %v80 = vld [vmem:[%s1 + $0x8] sm:$0xff]
    %v81 = vld [vmem:[%s1 + $0x10] sm:$0xff]
    %v82 = vld [vmem:[%s1 + $0x18] sm:$0xff]
    %v83 = vld [vmem:[%s1 + $0x20] sm:$0xff]
    %v84 = vld [vmem:[%s1 + $0x28] sm:$0xff]
    %v85 = vld [vmem:[%s1 + $0x30] sm:$0xff]
    %v86 = vld [vmem:[%s1 + $0x38] sm:$0xff]
    %v87 = vld [vmem:[%s1 + $0x40] sm:$0xff]
    %v88 = vld [vmem:[%s1 + $0x48] sm:$0xff]
    %v89 = vld [vmem:[%s1 + $0x50] sm:$0xff]
    %v90 = vld [vmem:[%s1 + $0x58] sm:$0xff]
    %v91 = vld [vmem:[%s1 + $0x60] sm:$0xff]
    %v92 = vld [vmem:[%s1 + $0x68] sm:$0xff]
    %v93 = vld [vmem:[%s1 + $0x70] sm:$0xff]
    %v94 = vld [vmem:[%s1 + $0x78] sm:$0xff]
    %v95 = vld [vmem:[%s1 + $0x80] sm:$0xff]
    %v96 = vld [vmem:[%s1 + $0x88] sm:$0xff]
    %v97 = vld [vmem:[%s1 + $0x90] sm:$0xff]
    %v98 = vld [vmem:[%s1 + $0x98] sm:$0xff]
    %v99 = vld [vmem:[%s1 + $0xa0] sm:$0xff]
    %v100 = vld [vmem:[%s1 + $0xa8] sm:$0xff]
    %v101 = vld [vmem:[%s1 + $0xb0] sm:$0xff]
    %v102 = vld [vmem:[%s1 + $0xb8] sm:$0xff]
    %v103 = vld [vmem:[%s1 + $0xc0] sm:$0xff]
    %v104 = vld [vmem:[%s1 + $0xc8] sm:$0xff]
    %v105 = vld [vmem:[%s1 + $0xd0] sm:$0xff]
    %v106 = vld [vmem:[%s1 + $0xd8] sm:$0xff]
    %v107 = vld [vmem:[%s1 + $0xe0] sm:$0xff]
    %v108 = vld [vmem:[%s1 + $0xe8] sm:$0xff]
    %v109 = vld [vmem:[%s1 + $0xf0] sm:$0xff]
    %v110 = vld [vmem:[%s1 + $0xf8] sm:$0xff]
    %111 = vmatpush.xpose.msra.mxu0 %v94
    %112 = vmatpush.xpose.msra.mxu0 %v93
    %113 = vmatpush.xpose.msra.mxu0 %v92
    %114 = vmatpush.xpose.msra.mxu0 %v91
    %115 = vmatpush.xpose.msra.mxu0 %v90
    %116 = vmatpush.xpose.msra.mxu0 %v89
    %117 = vmatpush.xpose.msra.mxu0 %v88
    %118 = vmatpush.xpose.msra.mxu0 %v87
    %119 = vmatpush.xpose.msra.mxu0 %v86
    %120 = vmatpush.xpose.msra.mxu0 %v85
    %121 = vmatpush.xpose.msra.mxu0 %v84
    %122 = vmatpush.xpose.msra.mxu0 %v83
    %123 = vmatpush.xpose.msra.mxu0 %v82
    %124 = vmatpush.xpose.msra.mxu0 %v81
    %125 = vmatpush.xpose.msra.mxu0 %v80
    %126 = vmatpush.xpose.msra.mxu0 %v79
    %127 = vmatmul.f32.gmra.mxu0 %v47
    %v128 = vpop.f32.mrf.mxu0
    %v129 = vadd.f32 0.0, %v128
    %130 = vmatmul.f32.gmra.mxu0 %v48
    %v131 = vpop.f32.mrf.mxu0
    %v132 = vadd.f32 0.0, %v131
    %133 = vmatmul.f32.gmra.mxu0 %v49
    %v134 = vpop.f32.mrf.mxu0
    %v135 = vadd.f32 0.0, %v134
    %136 = vmatmul.f32.gmra.mxu0 %v50
    %v137 = vpop.f32.mrf.mxu0
    %v138 = vadd.f32 0.0, %v137
    %139 = vmatmul.f32.gmra.mxu0 %v51
    %v140 = vpop.f32.mrf.mxu0
    %v141 = vadd.f32 0.0, %v140
    %142 = vmatmul.f32.gmra.mxu0 %v52
    %v143 = vpop.f32.mrf.mxu0
    %v144 = vadd.f32 0.0, %v143
    %145 = vmatmul.f32.gmra.mxu0 %v53
    %v146 = vpop.f32.mrf.mxu0
    %v147 = vadd.f32 0.0, %v146
    %148 = vmatmul.f32.gmra.mxu0 %v54
    %v149 = vpop.f32.mrf.mxu0
    %v150 = vadd.f32 0.0, %v149
    %151 = vmatmul.f32.gmra.mxu0 %v55
    %v152 = vpop.f32.mrf.mxu0
    %v153 = vadd.f32 0.0, %v152
    %154 = vmatmul.f32.gmra.mxu0 %v56
    %v155 = vpop.f32.mrf.mxu0
    %v156 = vadd.f32 0.0, %v155
    %157 = vmatmul.f32.gmra.mxu0 %v57
    %v158 = vpop.f32.mrf.mxu0
    %v159 = vadd.f32 0.0, %v158
    %160 = vmatmul.f32.gmra.mxu0 %v58
    %v161 = vpop.f32.mrf.mxu0
    %v162 = vadd.f32 0.0, %v161
    %163 = vmatmul.f32.gmra.mxu0 %v59
    %v164 = vpop.f32.mrf.mxu0
    %v165 = vadd.f32 0.0, %v164
    %166 = vmatmul.f32.gmra.mxu0 %v60
    %v167 = vpop.f32.mrf.mxu0
    %v168 = vadd.f32 0.0, %v167
    %169 = vmatmul.f32.gmra.mxu0 %v61
    %v170 = vpop.f32.mrf.mxu0
    %v171 = vadd.f32 0.0, %v170
    %172 = vmatmul.f32.gmra.mxu0 %v62
    %v173 = vpop.f32.mrf.mxu0
    %v174 = vadd.f32 0.0, %v173
    %175 = vmatmul.f32.gmra.mxu0 %v63
    %v176 = vpop.f32.mrf.mxu0
    %v177 = vadd.f32 0.0, %v176
    %178 = vmatmul.f32.gmra.mxu0 %v64
    %v179 = vpop.f32.mrf.mxu0
    %v180 = vadd.f32 0.0, %v179
    %181 = vmatmul.f32.gmra.mxu0 %v65
    %v182 = vpop.f32.mrf.mxu0
    %v183 = vadd.f32 0.0, %v182
    %184 = vmatmul.f32.gmra.mxu0 %v66
    %v185 = vpop.f32.mrf.mxu0
    %v186 = vadd.f32 0.0, %v185
    %187 = vmatmul.f32.gmra.mxu0 %v67
    %v188 = vpop.f32.mrf.mxu0
    %v189 = vadd.f32 0.0, %v188
    %190 = vmatmul.f32.gmra.mxu0 %v68
    %v191 = vpop.f32.mrf.mxu0
    %v192 = vadd.f32 0.0, %v191
    %193 = vmatmul.f32.gmra.mxu0 %v69
    %v194 = vpop.f32.mrf.mxu0
    %v195 = vadd.f32 0.0, %v194
    %196 = vmatmul.f32.gmra.mxu0 %v70
    %v197 = vpop.f32.mrf.mxu0
    %v198 = vadd.f32 0.0, %v197
    %199 = vmatmul.f32.gmra.mxu0 %v71
    %v200 = vpop.f32.mrf.mxu0
    %v201 = vadd.f32 0.0, %v200
    %202 = vmatmul.f32.gmra.mxu0 %v72
    %v203 = vpop.f32.mrf.mxu0
    %v204 = vadd.f32 0.0, %v203
    %205 = vmatmul.f32.gmra.mxu0 %v73
    %v206 = vpop.f32.mrf.mxu0
    %v207 = vadd.f32 0.0, %v206
    %208 = vmatmul.f32.gmra.mxu0 %v74
    %v209 = vpop.f32.mrf.mxu0
    %v210 = vadd.f32 0.0, %v209
    %211 = vmatmul.f32.gmra.mxu0 %v75
    %v212 = vpop.f32.mrf.mxu0
    %v213 = vadd.f32 0.0, %v212
    %214 = vmatmul.f32.gmra.mxu0 %v76
    %v215 = vpop.f32.mrf.mxu0
    %v216 = vadd.f32 0.0, %v215
    %217 = vmatmul.f32.gmra.mxu0 %v77
    %v218 = vpop.f32.mrf.mxu0
    %v219 = vadd.f32 0.0, %v218
    %220 = vmatmul.f32.gmra.mxu0 %v78
    %v221 = vpop.f32.mrf.mxu0
    %v222 = vadd.f32 0.0, %v221
    %223 = vdwg.mxu0
    %224 = vmatpush.xpose.msra.mxu0 %v110
    %225 = vmatpush.xpose.msra.mxu0 %v109
    %226 = vmatpush.xpose.msra.mxu0 %v108
    %227 = vmatpush.xpose.msra.mxu0 %v107
    %228 = vmatpush.xpose.msra.mxu0 %v106
    %229 = vmatpush.xpose.msra.mxu0 %v105
    %230 = vmatpush.xpose.msra.mxu0 %v104
    %231 = vmatpush.xpose.msra.mxu0 %v103
    %232 = vmatpush.xpose.msra.mxu0 %v102
    %233 = vmatpush.xpose.msra.mxu0 %v101
    %234 = vmatpush.xpose.msra.mxu0 %v100
    %235 = vmatpush.xpose.msra.mxu0 %v99
    %236 = vmatpush.xpose.msra.mxu0 %v98
    %237 = vmatpush.xpose.msra.mxu0 %v97
    %238 = vmatpush.xpose.msra.mxu0 %v96
    %239 = vmatpush.xpose.msra.mxu0 %v95
    %240 = vmatmul.f32.gmra.mxu0 %v47
    %v241 = vpop.f32.mrf.mxu0
    %v242 = vadd.f32 0.0, %v241
    %243 = vmatmul.f32.gmra.mxu0 %v48
    %v244 = vpop.f32.mrf.mxu0
    %v245 = vadd.f32 0.0, %v244
    %246 = vmatmul.f32.gmra.mxu0 %v49
    %v247 = vpop.f32.mrf.mxu0
    %v248 = vadd.f32 0.0, %v247
    %249 = vmatmul.f32.gmra.mxu0 %v50
    %v250 = vpop.f32.mrf.mxu0
    %v251 = vadd.f32 0.0, %v250
    %252 = vmatmul.f32.gmra.mxu0 %v51
    %v253 = vpop.f32.mrf.mxu0
    %v254 = vadd.f32 0.0, %v253
    %255 = vmatmul.f32.gmra.mxu0 %v52
    %v256 = vpop.f32.mrf.mxu0
    %v257 = vadd.f32 0.0, %v256
    %258 = vmatmul.f32.gmra.mxu0 %v53
    %v259 = vpop.f32.mrf.mxu0
    %v260 = vadd.f32 0.0, %v259
    %261 = vmatmul.f32.gmra.mxu0 %v54
    %v262 = vpop.f32.mrf.mxu0
    %v263 = vadd.f32 0.0, %v262
    %264 = vmatmul.f32.gmra.mxu0 %v55
    %v265 = vpop.f32.mrf.mxu0
    %v266 = vadd.f32 0.0, %v265
    %267 = vmatmul.f32.gmra.mxu0 %v56
    %v268 = vpop.f32.mrf.mxu0
    %v269 = vadd.f32 0.0, %v268
    %270 = vmatmul.f32.gmra.mxu0 %v57
    %v271 = vpop.f32.mrf.mxu0
    %v272 = vadd.f32 0.0, %v271
    %273 = vmatmul.f32.gmra.mxu0 %v58
    %v274 = vpop.f32.mrf.mxu0
    %v275 = vadd.f32 0.0, %v274
    %276 = vmatmul.f32.gmra.mxu0 %v59
    %v277 = vpop.f32.mrf.mxu0
    %v278 = vadd.f32 0.0, %v277
    %279 = vmatmul.f32.gmra.mxu0 %v60
    %v280 = vpop.f32.mrf.mxu0
    %v281 = vadd.f32 0.0, %v280
    %282 = vmatmul.f32.gmra.mxu0 %v61
    %v283 = vpop.f32.mrf.mxu0
    %v284 = vadd.f32 0.0, %v283
    %285 = vmatmul.f32.gmra.mxu0 %v62
    %v286 = vpop.f32.mrf.mxu0
    %v287 = vadd.f32 0.0, %v286
    %288 = vmatmul.f32.gmra.mxu0 %v63
    %v289 = vpop.f32.mrf.mxu0
    %v290 = vadd.f32 0.0, %v289
    %291 = vmatmul.f32.gmra.mxu0 %v64
    %v292 = vpop.f32.mrf.mxu0
    %v293 = vadd.f32 0.0, %v292
    %294 = vmatmul.f32.gmra.mxu0 %v65
    %v295 = vpop.f32.mrf.mxu0
    %v296 = vadd.f32 0.0, %v295
    %297 = vmatmul.f32.gmra.mxu0 %v66
    %v298 = vpop.f32.mrf.mxu0
    %v299 = vadd.f32 0.0, %v298
    %300 = vmatmul.f32.gmra.mxu0 %v67
    %v301 = vpop.f32.mrf.mxu0
    %v302 = vadd.f32 0.0, %v301
    %303 = vmatmul.f32.gmra.mxu0 %v68
    %v304 = vpop.f32.mrf.mxu0
    %v305 = vadd.f32 0.0, %v304
    %306 = vmatmul.f32.gmra.mxu0 %v69
    %v307 = vpop.f32.mrf.mxu0
    %v308 = vadd.f32 0.0, %v307
    %309 = vmatmul.f32.gmra.mxu0 %v70
    %v310 = vpop.f32.mrf.mxu0
    %v311 = vadd.f32 0.0, %v310
    %312 = vmatmul.f32.gmra.mxu0 %v71
    %v313 = vpop.f32.mrf.mxu0
    %v314 = vadd.f32 0.0, %v313
    %315 = vmatmul.f32.gmra.mxu0 %v72
    %v316 = vpop.f32.mrf.mxu0
    %v317 = vadd.f32 0.0, %v316
    %318 = vmatmul.f32.gmra.mxu0 %v73
    %v319 = vpop.f32.mrf.mxu0
    %v320 = vadd.f32 0.0, %v319
    %321 = vmatmul.f32.gmra.mxu0 %v74
    %v322 = vpop.f32.mrf.mxu0
    %v323 = vadd.f32 0.0, %v322
    %324 = vmatmul.f32.gmra.mxu0 %v75
    %v325 = vpop.f32.mrf.mxu0
    %v326 = vadd.f32 0.0, %v325
    %327 = vmatmul.f32.gmra.mxu0 %v76
    %v328 = vpop.f32.mrf.mxu0
    %v329 = vadd.f32 0.0, %v328
    %330 = vmatmul.f32.gmra.mxu0 %v77
    %v331 = vpop.f32.mrf.mxu0
    %v332 = vadd.f32 0.0, %v331
    %333 = vmatmul.f32.gmra.mxu0 %v78
    %v334 = vpop.f32.mrf.mxu0
    %v335 = vadd.f32 0.0, %v334
    %336 = vdwg.mxu0
    %v337 = vmul.f32 %v129, 14.285714
    %v338 = vmul.f32 %v242, 14.285714
    %v339 = vmul.f32 %v132, 14.285714
    %v340 = vmul.f32 %v245, 14.285714
    %v341 = vmul.f32 %v135, 14.285714
    %v342 = vmul.f32 %v248, 14.285714
    %v343 = vmul.f32 %v138, 14.285714
    %v344 = vmul.f32 %v251, 14.285714
    %v345 = vmul.f32 %v141, 14.285714
    %v346 = vmul.f32 %v254, 14.285714
    %v347 = vmul.f32 %v144, 14.285714
    %v348 = vmul.f32 %v257, 14.285714
    %v349 = vmul.f32 %v147, 14.285714
    %v350 = vmul.f32 %v260, 14.285714
    %v351 = vmul.f32 %v150, 14.285714
    %v352 = vmul.f32 %v263, 14.285714
    %v353 = vmul.f32 %v153, 14.285714
    %v354 = vmul.f32 %v266, 14.285714
    %v355 = vmul.f32 %v156, 14.285714
    %v356 = vmul.f32 %v269, 14.285714
    %v357 = vmul.f32 %v159, 14.285714
    %v358 = vmul.f32 %v272, 14.285714
    %v359 = vmul.f32 %v162, 14.285714
    %v360 = vmul.f32 %v275, 14.285714
    %v361 = vmul.f32 %v165, 14.285714
    %v362 = vmul.f32 %v278, 14.285714
    %v363 = vmul.f32 %v168, 14.285714
    %v364 = vmul.f32 %v281, 14.285714
    %v365 = vmul.f32 %v171, 14.285714
    %v366 = vmul.f32 %v284, 14.285714
    %v367 = vmul.f32 %v174, 14.285714
    %v368 = vmul.f32 %v287, 14.285714
    %v369 = vmul.f32 %v177, 14.285714
    %v370 = vmul.f32 %v290, 14.285714
    %v371 = vmul.f32 %v180, 14.285714
    %v372 = vmul.f32 %v293, 14.285714
    %v373 = vmul.f32 %v183, 14.285714
    %v374 = vmul.f32 %v296, 14.285714
    %v375 = vmul.f32 %v186, 14.285714
    %v376 = vmul.f32 %v299, 14.285714
    %v377 = vmul.f32 %v189, 14.285714
    %v378 = vmul.f32 %v302, 14.285714
    %v379 = vmul.f32 %v192, 14.285714
    %v380 = vmul.f32 %v305, 14.285714
    %v381 = vmul.f32 %v195, 14.285714
    %v382 = vmul.f32 %v308, 14.285714
    %v383 = vmul.f32 %v198, 14.285714
    %v384 = vmul.f32 %v311, 14.285714
    %v385 = vmul.f32 %v201, 14.285714
    %v386 = vmul.f32 %v314, 14.285714
    %v387 = vmul.f32 %v204, 14.285714
    %v388 = vmul.f32 %v317, 14.285714
    %v389 = vmul.f32 %v207, 14.285714
    %v390 = vmul.f32 %v320, 14.285714
    %v391 = vmul.f32 %v210, 14.285714
    %v392 = vmul.f32 %v323, 14.285714
    %v393 = vmul.f32 %v213, 14.285714
    %v394 = vmul.f32 %v326, 14.285714
    %v395 = vmul.f32 %v216, 14.285714
    %v396 = vmul.f32 %v329, 14.285714
    %v397 = vmul.f32 %v219, 14.285714
    %v398 = vmul.f32 %v332, 14.285714
    %v399 = vmul.f32 %v222, 14.285714
    %v400 = vmul.f32 %v335, 14.285714
    %v401 = vmul.f32 %v337, 1.442695
    %v402 = vpow.pop %v401
    %v403 = vmul.f32 %v338, 1.442695
    %v404 = vpow.pop %v403
    %v405 = vmul.f32 %v339, 1.442695
    %v406 = vpow.pop %v405
    %v407 = vmul.f32 %v340, 1.442695
    %v408 = vpow.pop %v407
    %v409 = vmul.f32 %v341, 1.442695
    %v410 = vpow.pop %v409
    %v411 = vmul.f32 %v342, 1.442695
    %v412 = vpow.pop %v411
    %v413 = vmul.f32 %v343, 1.442695
    %v414 = vpow.pop %v413
    %v415 = vmul.f32 %v344, 1.442695
    %v416 = vpow.pop %v415
    %v417 = vmul.f32 %v345, 1.442695
    %v418 = vpow.pop %v417
    %v419 = vmul.f32 %v346, 1.442695
    %v420 = vpow.pop %v419
    %v421 = vmul.f32 %v347, 1.442695
    %v422 = vpow.pop %v421
    %v423 = vmul.f32 %v348, 1.442695
    %v424 = vpow.pop %v423
    %v425 = vmul.f32 %v349, 1.442695
    %v426 = vpow.pop %v425
    %v427 = vmul.f32 %v350, 1.442695
    %v428 = vpow.pop %v427
    %v429 = vmul.f32 %v351, 1.442695
    %v430 = vpow.pop %v429
    %v431 = vmul.f32 %v352, 1.442695
    %v432 = vpow.pop %v431
    %v433 = vmul.f32 %v353, 1.442695
    %v434 = vpow.pop %v433
    %v435 = vmul.f32 %v354, 1.442695
    %v436 = vpow.pop %v435
    %v437 = vmul.f32 %v355, 1.442695
    %v438 = vpow.pop %v437
    %v439 = vmul.f32 %v356, 1.442695
    %v440 = vpow.pop %v439
    %v441 = vmul.f32 %v357, 1.442695
    %v442 = vpow.pop %v441
    %v443 = vmul.f32 %v358, 1.442695
    %v444 = vpow.pop %v443
    %v445 = vmul.f32 %v359, 1.442695
    %v446 = vpow.pop %v445
    %v447 = vmul.f32 %v360, 1.442695
    %v448 = vpow.pop %v447
    %v449 = vmul.f32 %v361, 1.442695
    %v450 = vpow.pop %v449
    %v451 = vmul.f32 %v362, 1.442695
    %v452 = vpow.pop %v451
    %v453 = vmul.f32 %v363, 1.442695
    %v454 = vpow.pop %v453
    %v455 = vmul.f32 %v364, 1.442695
    %v456 = vpow.pop %v455
    %v457 = vmul.f32 %v365, 1.442695
    %v458 = vpow.pop %v457
    %v459 = vmul.f32 %v366, 1.442695
    %v460 = vpow.pop %v459
    %v461 = vmul.f32 %v367, 1.442695
    %v462 = vpow.pop %v461
    %v463 = vmul.f32 %v368, 1.442695
    %v464 = vpow.pop %v463
    %v465 = vmul.f32 %v369, 1.442695
    %v466 = vpow.pop %v465
    %v467 = vmul.f32 %v370, 1.442695
    %v468 = vpow.pop %v467
    %v469 = vmul.f32 %v371, 1.442695
    %v470 = vpow.pop %v469
    %v471 = vmul.f32 %v372, 1.442695
    %v472 = vpow.pop %v471
    %v473 = vmul.f32 %v373, 1.442695
    %v474 = vpow.pop %v473
    %v475 = vmul.f32 %v374, 1.442695
    %v476 = vpow.pop %v475
    %v477 = vmul.f32 %v375, 1.442695
    %v478 = vpow.pop %v477
    %v479 = vmul.f32 %v376, 1.442695
    %v480 = vpow.pop %v479
    %v481 = vmul.f32 %v377, 1.442695
    %v482 = vpow.pop %v481
    %v483 = vmul.f32 %v378, 1.442695
    %v484 = vpow.pop %v483
    %v485 = vmul.f32 %v379, 1.442695
    %v486 = vpow.pop %v485
    %v487 = vmul.f32 %v380, 1.442695
    %v488 = vpow.pop %v487
    %v489 = vmul.f32 %v381, 1.442695
    %v490 = vpow.pop %v489
    %v491 = vmul.f32 %v382, 1.442695
    %v492 = vpow.pop %v491
    %v493 = vmul.f32 %v383, 1.442695
    %v494 = vpow.pop %v493
    %v495 = vmul.f32 %v384, 1.442695
    %v496 = vpow.pop %v495
    %v497 = vmul.f32 %v385, 1.442695
    %v498 = vpow.pop %v497
    %v499 = vmul.f32 %v386, 1.442695
    %v500 = vpow.pop %v499
    %v501 = vmul.f32 %v387, 1.442695
    %v502 = vpow.pop %v501
    %v503 = vmul.f32 %v388, 1.442695
    %v504 = vpow.pop %v503
    %v505 = vmul.f32 %v389, 1.442695
    %v506 = vpow.pop %v505
    %v507 = vmul.f32 %v390, 1.442695
    %v508 = vpow.pop %v507
    %v509 = vmul.f32 %v391, 1.442695
    %v510 = vpow.pop %v509
    %v511 = vmul.f32 %v392, 1.442695
    %v512 = vpow.pop %v511
    %v513 = vmul.f32 %v393, 1.442695
    %v514 = vpow.pop %v513
    %v515 = vmul.f32 %v394, 1.442695
    %v516 = vpow.pop %v515
    %v517 = vmul.f32 %v395, 1.442695
    %v518 = vpow.pop %v517
    %v519 = vmul.f32 %v396, 1.442695
    %v520 = vpow.pop %v519
    %v521 = vmul.f32 %v397, 1.442695
    %v522 = vpow.pop %v521
    %v523 = vmul.f32 %v398, 1.442695
    %v524 = vpow.pop %v523
    %v525 = vmul.f32 %v399, 1.442695
    %v526 = vpow.pop %v525
    %v527 = vmul.f32 %v400, 1.442695
    %v528 = vpow.pop %v527
    %v529 = vld [vmem:[#allocation2] sm:$0xff]
    %v530 = vld [vmem:[#allocation2 + $0x8] sm:$0xff]
    %v531 = vld [vmem:[#allocation2 + $0x10] sm:$0xff]
    %v532 = vld [vmem:[#allocation2 + $0x18] sm:$0xff]
    %v533 = vld [vmem:[#allocation2 + $0x20] sm:$0xff]
    %v534 = vld [vmem:[#allocation2 + $0x28] sm:$0xff]
    %v535 = vld [vmem:[#allocation2 + $0x30] sm:$0xff]
    %v536 = vld [vmem:[#allocation2 + $0x38] sm:$0xff]
    %v537 = vld [vmem:[#allocation2 + $0x40] sm:$0xff]
    %v538 = vld [vmem:[#allocation2 + $0x48] sm:$0xff]
    %v539 = vld [vmem:[#allocation2 + $0x50] sm:$0xff]
    %v540 = vld [vmem:[#allocation2 + $0x58] sm:$0xff]
    %v541 = vld [vmem:[#allocation2 + $0x60] sm:$0xff]
    %v542 = vld [vmem:[#allocation2 + $0x68] sm:$0xff]
    %v543 = vld [vmem:[#allocation2 + $0x70] sm:$0xff]
    %v544 = vld [vmem:[#allocation2 + $0x78] sm:$0xff]
    %v545 = vld [vmem:[#allocation2 + $0x80] sm:$0xff]
    %v546 = vld [vmem:[#allocation2 + $0x88] sm:$0xff]
    %v547 = vld [vmem:[#allocation2 + $0x90] sm:$0xff]
    %v548 = vld [vmem:[#allocation2 + $0x98] sm:$0xff]
    %v549 = vld [vmem:[#allocation2 + $0xa0] sm:$0xff]
    %v550 = vld [vmem:[#allocation2 + $0xa8] sm:$0xff]
    %v551 = vld [vmem:[#allocation2 + $0xb0] sm:$0xff]
    %v552 = vld [vmem:[#allocation2 + $0xb8] sm:$0xff]
    %v553 = vld [vmem:[#allocation2 + $0xc0] sm:$0xff]
    %v554 = vld [vmem:[#allocation2 + $0xc8] sm:$0xff]
    %v555 = vld [vmem:[#allocation2 + $0xd0] sm:$0xff]
    %v556 = vld [vmem:[#allocation2 + $0xd8] sm:$0xff]
    %v557 = vld [vmem:[#allocation2 + $0xe0] sm:$0xff]
    %v558 = vld [vmem:[#allocation2 + $0xe8] sm:$0xff]
    %v559 = vld [vmem:[#allocation2 + $0xf0] sm:$0xff]
    %v560 = vld [vmem:[#allocation2 + $0xf8] sm:$0xff]
    %v561 = vld [vmem:[#allocation4] ss:$8 sm:$0x3]
    %s562 = scalar_lea.vmem [#allocation4], 1
    %v563 = vld [vmem:[%s562] ss:$8 sm:$0x3]
    %v564 = vlaneseq
    %v565 = vshrl.u32 %v564, 7
    %v566 = vadd.s32 %v565, 8
    %v567 = vadd.s32 %v565, 16
    %v568 = vadd.s32 %v565, 24
    %v569 = vadd.s32 %v565, 32
    %v570 = vadd.s32 %v565, 40
    %v571 = vadd.s32 %v565, 48
    %v572 = vadd.s32 %v565, 56
    %v573 = vadd.s32 %v565, 64
    %v574 = vadd.s32 %v565, 72
    %v575 = vadd.s32 %v565, 80
    %v576 = vadd.s32 %v565, 88
    %v577 = vadd.s32 %v565, 96
    %v578 = vadd.s32 %v565, 104
    %v579 = vadd.s32 %v565, 112
    %v580 = vadd.s32 %v565, 120
    %v581 = vadd.s32 %v565, 128
    %v582 = vadd.s32 %v565, 136
    %v583 = vadd.s32 %v565, 144
    %v584 = vadd.s32 %v565, 152
    %v585 = vadd.s32 %v565, 160
    %v586 = vadd.s32 %v565, 168
    %v587 = vadd.s32 %v565, 176
    %v588 = vadd.s32 %v565, 184
    %v589 = vadd.s32 %v565, 192
    %v590 = vadd.s32 %v565, 200
    %v591 = vadd.s32 %v565, 208
    %v592 = vadd.s32 %v565, 216
    %v593 = vadd.s32 %v565, 224
    %v594 = vadd.s32 %v565, 232
    %v595 = vadd.s32 %v565, 240
    %v596 = vadd.s32 %v565, 248
    %s597 = smul.u32 0, 256
    %v598 = vstv %s597
    %v599 = vadd.s32 %v565, %v598
    %v600 = vadd.s32 %v566, %v598
    %v601 = vadd.s32 %v567, %v598
    %v602 = vadd.s32 %v568, %v598
    %v603 = vadd.s32 %v569, %v598
    %v604 = vadd.s32 %v570, %v598
    %v605 = vadd.s32 %v571, %v598
    %v606 = vadd.s32 %v572, %v598
    %v607 = vadd.s32 %v573, %v598
    %v608 = vadd.s32 %v574, %v598
    %v609 = vadd.s32 %v575, %v598
    %v610 = vadd.s32 %v576, %v598
    %v611 = vadd.s32 %v577, %v598
    %v612 = vadd.s32 %v578, %v598
    %v613 = vadd.s32 %v579, %v598
    %v614 = vadd.s32 %v580, %v598
    %v615 = vadd.s32 %v581, %v598
    %v616 = vadd.s32 %v582, %v598
    %v617 = vadd.s32 %v583, %v598
    %v618 = vadd.s32 %v584, %v598
    %v619 = vadd.s32 %v585, %v598
    %v620 = vadd.s32 %v586, %v598
    %v621 = vadd.s32 %v587, %v598
    %v622 = vadd.s32 %v588, %v598
    %v623 = vadd.s32 %v589, %v598
    %v624 = vadd.s32 %v590, %v598
    %v625 = vadd.s32 %v591, %v598
    %v626 = vadd.s32 %v592, %v598
    %v627 = vadd.s32 %v593, %v598
    %v628 = vadd.s32 %v594, %v598
    %v629 = vadd.s32 %v595, %v598
    %v630 = vadd.s32 %v596, %v598
    %v631 = vlaneseq
    %v632 = vand.u32 %v631, 127
    %v633 = vadd.s32 %v632, 128
    %vm634 = vcmp.ne.s32.totalorder %v599, %v632
    %vm635 = vcmp.ne.s32.totalorder %v599, %v633
    %vm636 = vcmp.ne.s32.totalorder %v600, %v632
    %vm637 = vcmp.ne.s32.totalorder %v600, %v633
    %vm638 = vcmp.ne.s32.totalorder %v601, %v632
    %vm639 = vcmp.ne.s32.totalorder %v601, %v633
    %vm640 = vcmp.ne.s32.totalorder %v602, %v632
    %vm641 = vcmp.ne.s32.totalorder %v602, %v633
    %vm642 = vcmp.ne.s32.totalorder %v603, %v632
    %vm643 = vcmp.ne.s32.totalorder %v603, %v633
    %vm644 = vcmp.ne.s32.totalorder %v604, %v632
    %vm645 = vcmp.ne.s32.totalorder %v604, %v633
    %vm646 = vcmp.ne.s32.totalorder %v605, %v632
    %vm647 = vcmp.ne.s32.totalorder %v605, %v633
    %vm648 = vcmp.ne.s32.totalorder %v606, %v632
    %vm649 = vcmp.ne.s32.totalorder %v606, %v633
    %vm650 = vcmp.ne.s32.totalorder %v607, %v632
    %vm651 = vcmp.ne.s32.totalorder %v607, %v633
    %vm652 = vcmp.ne.s32.totalorder %v608, %v632
    %vm653 = vcmp.ne.s32.totalorder %v608, %v633
    %vm654 = vcmp.ne.s32.totalorder %v609, %v632
    %vm655 = vcmp.ne.s32.totalorder %v609, %v633
    %vm656 = vcmp.ne.s32.totalorder %v610, %v632
    %vm657 = vcmp.ne.s32.totalorder %v610, %v633
    %vm658 = vcmp.ne.s32.totalorder %v611, %v632
    %vm659 = vcmp.ne.s32.totalorder %v611, %v633
    %vm660 = vcmp.ne.s32.totalorder %v612, %v632
    %vm661 = vcmp.ne.s32.totalorder %v612, %v633
    %vm662 = vcmp.ne.s32.totalorder %v613, %v632
    %vm663 = vcmp.ne.s32.totalorder %v613, %v633
    %vm664 = vcmp.ne.s32.totalorder %v614, %v632
    %vm665 = vcmp.ne.s32.totalorder %v614, %v633
    %vm666 = vcmp.ne.s32.totalorder %v615, %v632
    %vm667 = vcmp.ne.s32.totalorder %v615, %v633
    %vm668 = vcmp.ne.s32.totalorder %v616, %v632
    %vm669 = vcmp.ne.s32.totalorder %v616, %v633
    %vm670 = vcmp.ne.s32.totalorder %v617, %v632
    %vm671 = vcmp.ne.s32.totalorder %v617, %v633
    %vm672 = vcmp.ne.s32.totalorder %v618, %v632
    %vm673 = vcmp.ne.s32.totalorder %v618, %v633
    %vm674 = vcmp.ne.s32.totalorder %v619, %v632
    %vm675 = vcmp.ne.s32.totalorder %v619, %v633
    %vm676 = vcmp.ne.s32.totalorder %v620, %v632
    %vm677 = vcmp.ne.s32.totalorder %v620, %v633
    %vm678 = vcmp.ne.s32.totalorder %v621, %v632
    %vm679 = vcmp.ne.s32.totalorder %v621, %v633
    %vm680 = vcmp.ne.s32.totalorder %v622, %v632
    %vm681 = vcmp.ne.s32.totalorder %v622, %v633
    %vm682 = vcmp.ne.s32.totalorder %v623, %v632
    %vm683 = vcmp.ne.s32.totalorder %v623, %v633
    %vm684 = vcmp.ne.s32.totalorder %v624, %v632
    %vm685 = vcmp.ne.s32.totalorder %v624, %v633
    %vm686 = vcmp.ne.s32.totalorder %v625, %v632
    %vm687 = vcmp.ne.s32.totalorder %v625, %v633
    %vm688 = vcmp.ne.s32.totalorder %v626, %v632
    %vm689 = vcmp.ne.s32.totalorder %v626, %v633
    %vm690 = vcmp.ne.s32.totalorder %v627, %v632
    %vm691 = vcmp.ne.s32.totalorder %v627, %v633
    %vm692 = vcmp.ne.s32.totalorder %v628, %v632
    %vm693 = vcmp.ne.s32.totalorder %v628, %v633
    %vm694 = vcmp.ne.s32.totalorder %v629, %v632
    %vm695 = vcmp.ne.s32.totalorder %v629, %v633
    %vm696 = vcmp.ne.s32.totalorder %v630, %v632
    %vm697 = vcmp.ne.s32.totalorder %v630, %v633
    %vm698 = vcmp.ge.f32.partialorder %v529, 0.0
    %vm699 = vcmp.ge.f32.partialorder %v530, 0.0
    %vm700 = vcmp.ge.f32.partialorder %v531, 0.0
    %vm701 = vcmp.ge.f32.partialorder %v532, 0.0
    %vm702 = vcmp.ge.f32.partialorder %v533, 0.0
    %vm703 = vcmp.ge.f32.partialorder %v534, 0.0
    %vm704 = vcmp.ge.f32.partialorder %v535, 0.0
    %vm705 = vcmp.ge.f32.partialorder %v536, 0.0
    %vm706 = vcmp.ge.f32.partialorder %v537, 0.0
    %vm707 = vcmp.ge.f32.partialorder %v538, 0.0
    %vm708 = vcmp.ge.f32.partialorder %v539, 0.0
    %vm709 = vcmp.ge.f32.partialorder %v540, 0.0
    %vm710 = vcmp.ge.f32.partialorder %v541, 0.0
    %vm711 = vcmp.ge.f32.partialorder %v542, 0.0
    %vm712 = vcmp.ge.f32.partialorder %v543, 0.0
    %vm713 = vcmp.ge.f32.partialorder %v544, 0.0
    %vm714 = vcmp.ge.f32.partialorder %v545, 0.0
    %vm715 = vcmp.ge.f32.partialorder %v546, 0.0
    %vm716 = vcmp.ge.f32.partialorder %v547, 0.0
    %vm717 = vcmp.ge.f32.partialorder %v548, 0.0
    %vm718 = vcmp.ge.f32.partialorder %v549, 0.0
    %vm719 = vcmp.ge.f32.partialorder %v550, 0.0
    %vm720 = vcmp.ge.f32.partialorder %v551, 0.0
    %vm721 = vcmp.ge.f32.partialorder %v552, 0.0
    %vm722 = vcmp.ge.f32.partialorder %v553, 0.0
    %vm723 = vcmp.ge.f32.partialorder %v554, 0.0
    %vm724 = vcmp.ge.f32.partialorder %v555, 0.0
    %vm725 = vcmp.ge.f32.partialorder %v556, 0.0
    %vm726 = vcmp.ge.f32.partialorder %v557, 0.0
    %vm727 = vcmp.ge.f32.partialorder %v558, 0.0
    %vm728 = vcmp.ge.f32.partialorder %v559, 0.0
    %vm729 = vcmp.ge.f32.partialorder %v560, 0.0
    %731 = vset.pattern.permute.xlu0 0
    %732 = vperm.xlu0 %731, %v529
    %v733 = vpop.permute.xlu0 %732
    %736 = vset.pattern.permute.xlu0 0
    %737 = vperm.xlu0 %736, %v530
    %v738 = vpop.permute.xlu0 %737
    %741 = vset.pattern.permute.xlu0 0
    %742 = vperm.xlu0 %741, %v531
    %v743 = vpop.permute.xlu0 %742
    %746 = vset.pattern.permute.xlu0 0
    %747 = vperm.xlu0 %746, %v532
    %v748 = vpop.permute.xlu0 %747
    %751 = vset.pattern.permute.xlu0 0
    %752 = vperm.xlu0 %751, %v533
    %v753 = vpop.permute.xlu0 %752
    %756 = vset.pattern.permute.xlu0 0
    %757 = vperm.xlu0 %756, %v534
    %v758 = vpop.permute.xlu0 %757
    %761 = vset.pattern.permute.xlu0 0
    %762 = vperm.xlu0 %761, %v535
    %v763 = vpop.permute.xlu0 %762
    %766 = vset.pattern.permute.xlu0 0
    %767 = vperm.xlu0 %766, %v536
    %v768 = vpop.permute.xlu0 %767
    %771 = vset.pattern.permute.xlu0 0
    %772 = vperm.xlu0 %771, %v537
    %v773 = vpop.permute.xlu0 %772
    %776 = vset.pattern.permute.xlu0 0
    %777 = vperm.xlu0 %776, %v538
    %v778 = vpop.permute.xlu0 %777
    %781 = vset.pattern.permute.xlu0 0
    %782 = vperm.xlu0 %781, %v539
    %v783 = vpop.permute.xlu0 %782
    %786 = vset.pattern.permute.xlu0 0
    %787 = vperm.xlu0 %786, %v540
    %v788 = vpop.permute.xlu0 %787
    %791 = vset.pattern.permute.xlu0 0
    %792 = vperm.xlu0 %791, %v541
    %v793 = vpop.permute.xlu0 %792
    %796 = vset.pattern.permute.xlu0 0
    %797 = vperm.xlu0 %796, %v542
    %v798 = vpop.permute.xlu0 %797
    %801 = vset.pattern.permute.xlu0 0
    %802 = vperm.xlu0 %801, %v543
    %v803 = vpop.permute.xlu0 %802
    %806 = vset.pattern.permute.xlu0 0
    %807 = vperm.xlu0 %806, %v544
    %v808 = vpop.permute.xlu0 %807
    %811 = vset.pattern.permute.xlu0 0
    %812 = vperm.xlu0 %811, %v545
    %v813 = vpop.permute.xlu0 %812
    %816 = vset.pattern.permute.xlu0 0
    %817 = vperm.xlu0 %816, %v546
    %v818 = vpop.permute.xlu0 %817
    %821 = vset.pattern.permute.xlu0 0
    %822 = vperm.xlu0 %821, %v547
    %v823 = vpop.permute.xlu0 %822
    %826 = vset.pattern.permute.xlu0 0
    %827 = vperm.xlu0 %826, %v548
    %v828 = vpop.permute.xlu0 %827
    %831 = vset.pattern.permute.xlu0 0
    %832 = vperm.xlu0 %831, %v549
    %v833 = vpop.permute.xlu0 %832
    %836 = vset.pattern.permute.xlu0 0
    %837 = vperm.xlu0 %836, %v550
    %v838 = vpop.permute.xlu0 %837
    %841 = vset.pattern.permute.xlu0 0
    %842 = vperm.xlu0 %841, %v551
    %v843 = vpop.permute.xlu0 %842
    %846 = vset.pattern.permute.xlu0 0
    %847 = vperm.xlu0 %846, %v552
    %v848 = vpop.permute.xlu0 %847
    %851 = vset.pattern.permute.xlu0 0
    %852 = vperm.xlu0 %851, %v553
    %v853 = vpop.permute.xlu0 %852
    %856 = vset.pattern.permute.xlu0 0
    %857 = vperm.xlu0 %856, %v554
    %v858 = vpop.permute.xlu0 %857
    %861 = vset.pattern.permute.xlu0 0
    %862 = vperm.xlu0 %861, %v555
    %v863 = vpop.permute.xlu0 %862
    %866 = vset.pattern.permute.xlu0 0
    %867 = vperm.xlu0 %866, %v556
    %v868 = vpop.permute.xlu0 %867
    %871 = vset.pattern.permute.xlu0 0
    %872 = vperm.xlu0 %871, %v557
    %v873 = vpop.permute.xlu0 %872
    %876 = vset.pattern.permute.xlu0 0
    %877 = vperm.xlu0 %876, %v558
    %v878 = vpop.permute.xlu0 %877
    %881 = vset.pattern.permute.xlu0 0
    %882 = vperm.xlu0 %881, %v559
    %v883 = vpop.permute.xlu0 %882
    %886 = vset.pattern.permute.xlu0 0
    %887 = vperm.xlu0 %886, %v560
    %v888 = vpop.permute.xlu0 %887
    %v891 = vperm.slane %v561, 0
    %v892 = vperm.slane %v561, 1
    %vm895 = vcmp.eq.f32.partialorder %v733, %v891
    %vm896 = vcmp.eq.f32.partialorder %v733, %v892
    %vm897 = vcmp.eq.f32.partialorder %v738, %v891
    %vm898 = vcmp.eq.f32.partialorder %v738, %v892
    %vm899 = vcmp.eq.f32.partialorder %v743, %v891
    %vm900 = vcmp.eq.f32.partialorder %v743, %v892
    %vm901 = vcmp.eq.f32.partialorder %v748, %v891
    %vm902 = vcmp.eq.f32.partialorder %v748, %v892
    %vm903 = vcmp.eq.f32.partialorder %v753, %v891
    %vm904 = vcmp.eq.f32.partialorder %v753, %v892
    %vm905 = vcmp.eq.f32.partialorder %v758, %v891
    %vm906 = vcmp.eq.f32.partialorder %v758, %v892
    %vm907 = vcmp.eq.f32.partialorder %v763, %v891
    %vm908 = vcmp.eq.f32.partialorder %v763, %v892
    %vm909 = vcmp.eq.f32.partialorder %v768, %v891
    %vm910 = vcmp.eq.f32.partialorder %v768, %v892
    %vm911 = vcmp.eq.f32.partialorder %v773, %v891
    %vm912 = vcmp.eq.f32.partialorder %v773, %v892
    %vm913 = vcmp.eq.f32.partialorder %v778, %v891
    %vm914 = vcmp.eq.f32.partialorder %v778, %v892
    %vm915 = vcmp.eq.f32.partialorder %v783, %v891
    %vm916 = vcmp.eq.f32.partialorder %v783, %v892
    %vm917 = vcmp.eq.f32.partialorder %v788, %v891
    %vm918 = vcmp.eq.f32.partialorder %v788, %v892
    %vm919 = vcmp.eq.f32.partialorder %v793, %v891
    %vm920 = vcmp.eq.f32.partialorder %v793, %v892
    %vm921 = vcmp.eq.f32.partialorder %v798, %v891
    %vm922 = vcmp.eq.f32.partialorder %v798, %v892
    %vm923 = vcmp.eq.f32.partialorder %v803, %v891
    %vm924 = vcmp.eq.f32.partialorder %v803, %v892
    %vm925 = vcmp.eq.f32.partialorder %v808, %v891
    %vm926 = vcmp.eq.f32.partialorder %v808, %v892
    %vm927 = vcmp.eq.f32.partialorder %v813, %v891
    %vm928 = vcmp.eq.f32.partialorder %v813, %v892
    %vm929 = vcmp.eq.f32.partialorder %v818, %v891
    %vm930 = vcmp.eq.f32.partialorder %v818, %v892
    %vm931 = vcmp.eq.f32.partialorder %v823, %v891
    %vm932 = vcmp.eq.f32.partialorder %v823, %v892
    %vm933 = vcmp.eq.f32.partialorder %v828, %v891
    %vm934 = vcmp.eq.f32.partialorder %v828, %v892
    %vm935 = vcmp.eq.f32.partialorder %v833, %v891
    %vm936 = vcmp.eq.f32.partialorder %v833, %v892
    %vm937 = vcmp.eq.f32.partialorder %v838, %v891
    %vm938 = vcmp.eq.f32.partialorder %v838, %v892
    %vm939 = vcmp.eq.f32.partialorder %v843, %v891
    %vm940 = vcmp.eq.f32.partialorder %v843, %v892
    %vm941 = vcmp.eq.f32.partialorder %v848, %v891
    %vm942 = vcmp.eq.f32.partialorder %v848, %v892
    %vm943 = vcmp.eq.f32.partialorder %v853, %v891
    %vm944 = vcmp.eq.f32.partialorder %v853, %v892
    %vm945 = vcmp.eq.f32.partialorder %v858, %v891
    %vm946 = vcmp.eq.f32.partialorder %v858, %v892
    %vm947 = vcmp.eq.f32.partialorder %v863, %v891
    %vm948 = vcmp.eq.f32.partialorder %v863, %v892
    %vm949 = vcmp.eq.f32.partialorder %v868, %v891
    %vm950 = vcmp.eq.f32.partialorder %v868, %v892
    %vm951 = vcmp.eq.f32.partialorder %v873, %v891
    %vm952 = vcmp.eq.f32.partialorder %v873, %v892
    %vm953 = vcmp.eq.f32.partialorder %v878, %v891
    %vm954 = vcmp.eq.f32.partialorder %v878, %v892
    %vm955 = vcmp.eq.f32.partialorder %v883, %v891
    %vm956 = vcmp.eq.f32.partialorder %v883, %v892
    %vm957 = vcmp.eq.f32.partialorder %v888, %v891
    %vm958 = vcmp.eq.f32.partialorder %v888, %v892
    %v959 = vsel %vm698, 1, 0
    %v960 = vsel %vm699, 1, 0
    %v961 = vsel %vm700, 1, 0
    %v962 = vsel %vm701, 1, 0
    %v963 = vsel %vm702, 1, 0
    %v964 = vsel %vm703, 1, 0
    %v965 = vsel %vm704, 1, 0
    %v966 = vsel %vm705, 1, 0
    %v967 = vsel %vm706, 1, 0
    %v968 = vsel %vm707, 1, 0
    %v969 = vsel %vm708, 1, 0
    %v970 = vsel %vm709, 1, 0
    %v971 = vsel %vm710, 1, 0
    %v972 = vsel %vm711, 1, 0
    %v973 = vsel %vm712, 1, 0
    %v974 = vsel %vm713, 1, 0
    %v975 = vsel %vm714, 1, 0
    %v976 = vsel %vm715, 1, 0
    %v977 = vsel %vm716, 1, 0
    %v978 = vsel %vm717, 1, 0
    %v979 = vsel %vm718, 1, 0
    %v980 = vsel %vm719, 1, 0
    %v981 = vsel %vm720, 1, 0
    %v982 = vsel %vm721, 1, 0
    %v983 = vsel %vm722, 1, 0
    %v984 = vsel %vm723, 1, 0
    %v985 = vsel %vm724, 1, 0
    %v986 = vsel %vm725, 1, 0
    %v987 = vsel %vm726, 1, 0
    %v988 = vsel %vm727, 1, 0
    %v989 = vsel %vm728, 1, 0
    %v990 = vsel %vm729, 1, 0
    %991 = vset.pattern.permute.xlu0 0
    %992 = vperm.xlu0 %991, %v959
    %v993 = vpop.permute.xlu0 %992
    %994 = vset.pattern.permute.xlu0 0
    %995 = vperm.xlu0 %994, %v960
    %v996 = vpop.permute.xlu0 %995
    %997 = vset.pattern.permute.xlu0 0
    %998 = vperm.xlu0 %997, %v961
    %v999 = vpop.permute.xlu0 %998
    %1000 = vset.pattern.permute.xlu0 0
    %1001 = vperm.xlu0 %1000, %v962
    %v1002 = vpop.permute.xlu0 %1001
    %1003 = vset.pattern.permute.xlu0 0
    %1004 = vperm.xlu0 %1003, %v963
    %v1005 = vpop.permute.xlu0 %1004
    %1006 = vset.pattern.permute.xlu0 0
    %1007 = vperm.xlu0 %1006, %v964
    %v1008 = vpop.permute.xlu0 %1007
    %1009 = vset.pattern.permute.xlu0 0
    %1010 = vperm.xlu0 %1009, %v965
    %v1011 = vpop.permute.xlu0 %1010
    %1012 = vset.pattern.permute.xlu0 0
    %1013 = vperm.xlu0 %1012, %v966
    %v1014 = vpop.permute.xlu0 %1013
    %1015 = vset.pattern.permute.xlu0 0
    %1016 = vperm.xlu0 %1015, %v967
    %v1017 = vpop.permute.xlu0 %1016
    %1018 = vset.pattern.permute.xlu0 0
    %1019 = vperm.xlu0 %1018, %v968
    %v1020 = vpop.permute.xlu0 %1019
    %1021 = vset.pattern.permute.xlu0 0
    %1022 = vperm.xlu0 %1021, %v969
    %v1023 = vpop.permute.xlu0 %1022
    %1024 = vset.pattern.permute.xlu0 0
    %1025 = vperm.xlu0 %1024, %v970
    %v1026 = vpop.permute.xlu0 %1025
    %1027 = vset.pattern.permute.xlu0 0
    %1028 = vperm.xlu0 %1027, %v971
    %v1029 = vpop.permute.xlu0 %1028
    %1030 = vset.pattern.permute.xlu0 0
    %1031 = vperm.xlu0 %1030, %v972
    %v1032 = vpop.permute.xlu0 %1031
    %1033 = vset.pattern.permute.xlu0 0
    %1034 = vperm.xlu0 %1033, %v973
    %v1035 = vpop.permute.xlu0 %1034
    %1036 = vset.pattern.permute.xlu0 0
    %1037 = vperm.xlu0 %1036, %v974
    %v1038 = vpop.permute.xlu0 %1037
    %1039 = vset.pattern.permute.xlu0 0
    %1040 = vperm.xlu0 %1039, %v975
    %v1041 = vpop.permute.xlu0 %1040
    %1042 = vset.pattern.permute.xlu0 0
    %1043 = vperm.xlu0 %1042, %v976
    %v1044 = vpop.permute.xlu0 %1043
    %1045 = vset.pattern.permute.xlu0 0
    %1046 = vperm.xlu0 %1045, %v977
    %v1047 = vpop.permute.xlu0 %1046
    %1048 = vset.pattern.permute.xlu0 0
    %1049 = vperm.xlu0 %1048, %v978
    %v1050 = vpop.permute.xlu0 %1049
    %1051 = vset.pattern.permute.xlu0 0
    %1052 = vperm.xlu0 %1051, %v979
    %v1053 = vpop.permute.xlu0 %1052
    %1054 = vset.pattern.permute.xlu0 0
    %1055 = vperm.xlu0 %1054, %v980
    %v1056 = vpop.permute.xlu0 %1055
    %1057 = vset.pattern.permute.xlu0 0
    %1058 = vperm.xlu0 %1057, %v981
    %v1059 = vpop.permute.xlu0 %1058
    %1060 = vset.pattern.permute.xlu0 0
    %1061 = vperm.xlu0 %1060, %v982
    %v1062 = vpop.permute.xlu0 %1061
    %1063 = vset.pattern.permute.xlu0 0
    %1064 = vperm.xlu0 %1063, %v983
    %v1065 = vpop.permute.xlu0 %1064
    %1066 = vset.pattern.permute.xlu0 0
    %1067 = vperm.xlu0 %1066, %v984
    %v1068 = vpop.permute.xlu0 %1067
    %1069 = vset.pattern.permute.xlu0 0
    %1070 = vperm.xlu0 %1069, %v985
    %v1071 = vpop.permute.xlu0 %1070
    %1072 = vset.pattern.permute.xlu0 0
    %1073 = vperm.xlu0 %1072, %v986
    %v1074 = vpop.permute.xlu0 %1073
    %1075 = vset.pattern.permute.xlu0 0
    %1076 = vperm.xlu0 %1075, %v987
    %v1077 = vpop.permute.xlu0 %1076
    %1078 = vset.pattern.permute.xlu0 0
    %1079 = vperm.xlu0 %1078, %v988
    %v1080 = vpop.permute.xlu0 %1079
    %1081 = vset.pattern.permute.xlu0 0
    %1082 = vperm.xlu0 %1081, %v989
    %v1083 = vpop.permute.xlu0 %1082
    %1084 = vset.pattern.permute.xlu0 0
    %1085 = vperm.xlu0 %1084, %v990
    %v1086 = vpop.permute.xlu0 %1085
    %vm1087 = vcmp.eq.s32.totalorder %v993, 1
    %vm1088 = vcmp.eq.s32.totalorder %v996, 1
    %vm1089 = vcmp.eq.s32.totalorder %v999, 1
    %vm1090 = vcmp.eq.s32.totalorder %v1002, 1
    %vm1091 = vcmp.eq.s32.totalorder %v1005, 1
    %vm1092 = vcmp.eq.s32.totalorder %v1008, 1
    %vm1093 = vcmp.eq.s32.totalorder %v1011, 1
    %vm1094 = vcmp.eq.s32.totalorder %v1014, 1
    %vm1095 = vcmp.eq.s32.totalorder %v1017, 1
    %vm1096 = vcmp.eq.s32.totalorder %v1020, 1
    %vm1097 = vcmp.eq.s32.totalorder %v1023, 1
    %vm1098 = vcmp.eq.s32.totalorder %v1026, 1
    %vm1099 = vcmp.eq.s32.totalorder %v1029, 1
    %vm1100 = vcmp.eq.s32.totalorder %v1032, 1
    %vm1101 = vcmp.eq.s32.totalorder %v1035, 1
    %vm1102 = vcmp.eq.s32.totalorder %v1038, 1
    %vm1103 = vcmp.eq.s32.totalorder %v1041, 1
    %vm1104 = vcmp.eq.s32.totalorder %v1044, 1
    %vm1105 = vcmp.eq.s32.totalorder %v1047, 1
    %vm1106 = vcmp.eq.s32.totalorder %v1050, 1
    %vm1107 = vcmp.eq.s32.totalorder %v1053, 1
    %vm1108 = vcmp.eq.s32.totalorder %v1056, 1
    %vm1109 = vcmp.eq.s32.totalorder %v1059, 1
    %vm1110 = vcmp.eq.s32.totalorder %v1062, 1
    %vm1111 = vcmp.eq.s32.totalorder %v1065, 1
    %vm1112 = vcmp.eq.s32.totalorder %v1068, 1
    %vm1113 = vcmp.eq.s32.totalorder %v1071, 1
    %vm1114 = vcmp.eq.s32.totalorder %v1074, 1
    %vm1115 = vcmp.eq.s32.totalorder %v1077, 1
    %vm1116 = vcmp.eq.s32.totalorder %v1080, 1
    %vm1117 = vcmp.eq.s32.totalorder %v1083, 1
    %vm1118 = vcmp.eq.s32.totalorder %v1086, 1
    %vm1119 = vmand %vm895, %vm1087
    %vm1120 = vmand %vm896, %vm1087
    %vm1121 = vmand %vm897, %vm1088
    %vm1122 = vmand %vm898, %vm1088
    %vm1123 = vmand %vm899, %vm1089
    %vm1124 = vmand %vm900, %vm1089
    %vm1125 = vmand %vm901, %vm1090
    %vm1126 = vmand %vm902, %vm1090
    %vm1127 = vmand %vm903, %vm1091
    %vm1128 = vmand %vm904, %vm1091
    %vm1129 = vmand %vm905, %vm1092
    %vm1130 = vmand %vm906, %vm1092
    %vm1131 = vmand %vm907, %vm1093
    %vm1132 = vmand %vm908, %vm1093
    %vm1133 = vmand %vm909, %vm1094
    %vm1134 = vmand %vm910, %vm1094
    %vm1135 = vmand %vm911, %vm1095
    %vm1136 = vmand %vm912, %vm1095
    %vm1137 = vmand %vm913, %vm1096
    %vm1138 = vmand %vm914, %vm1096
    %vm1139 = vmand %vm915, %vm1097
    %vm1140 = vmand %vm916, %vm1097
    %vm1141 = vmand %vm917, %vm1098
    %vm1142 = vmand %vm918, %vm1098
    %vm1143 = vmand %vm919, %vm1099
    %vm1144 = vmand %vm920, %vm1099
    %vm1145 = vmand %vm921, %vm1100
    %vm1146 = vmand %vm922, %vm1100
    %vm1147 = vmand %vm923, %vm1101
    %vm1148 = vmand %vm924, %vm1101
    %vm1149 = vmand %vm925, %vm1102
    %vm1150 = vmand %vm926, %vm1102
    %vm1151 = vmand %vm927, %vm1103
    %vm1152 = vmand %vm928, %vm1103
    %vm1153 = vmand %vm929, %vm1104
    %vm1154 = vmand %vm930, %vm1104
    %vm1155 = vmand %vm931, %vm1105
    %vm1156 = vmand %vm932, %vm1105
    %vm1157 = vmand %vm933, %vm1106
    %vm1158 = vmand %vm934, %vm1106
    %vm1159 = vmand %vm935, %vm1107
    %vm1160 = vmand %vm936, %vm1107
    %vm1161 = vmand %vm937, %vm1108
    %vm1162 = vmand %vm938, %vm1108
    %vm1163 = vmand %vm939, %vm1109
    %vm1164 = vmand %vm940, %vm1109
    %vm1165 = vmand %vm941, %vm1110
    %vm1166 = vmand %vm942, %vm1110
    %vm1167 = vmand %vm943, %vm1111
    %vm1168 = vmand %vm944, %vm1111
    %vm1169 = vmand %vm945, %vm1112
    %vm1170 = vmand %vm946, %vm1112
    %vm1171 = vmand %vm947, %vm1113
    %vm1172 = vmand %vm948, %vm1113
    %vm1173 = vmand %vm949, %vm1114
    %vm1174 = vmand %vm950, %vm1114
    %vm1175 = vmand %vm951, %vm1115
    %vm1176 = vmand %vm952, %vm1115
    %vm1177 = vmand %vm953, %vm1116
    %vm1178 = vmand %vm954, %vm1116
    %vm1179 = vmand %vm955, %vm1117
    %vm1180 = vmand %vm956, %vm1117
    %vm1181 = vmand %vm957, %vm1118
    %vm1182 = vmand %vm958, %vm1118
    %1183 = vset.pattern.permute.xlu0 1
    %1184 = vperm.xlu0 %1183, %v529
    %v1185 = vpop.permute.xlu0 %1184
    %1187 = vset.pattern.permute.xlu0 1
    %1188 = vperm.xlu0 %1187, %v530
    %v1189 = vpop.permute.xlu0 %1188
    %1191 = vset.pattern.permute.xlu0 1
    %1192 = vperm.xlu0 %1191, %v531
    %v1193 = vpop.permute.xlu0 %1192
    %1195 = vset.pattern.permute.xlu0 1
    %1196 = vperm.xlu0 %1195, %v532
    %v1197 = vpop.permute.xlu0 %1196
    %1199 = vset.pattern.permute.xlu0 1
    %1200 = vperm.xlu0 %1199, %v533
    %v1201 = vpop.permute.xlu0 %1200
    %1203 = vset.pattern.permute.xlu0 1
    %1204 = vperm.xlu0 %1203, %v534
    %v1205 = vpop.permute.xlu0 %1204
    %1207 = vset.pattern.permute.xlu0 1
    %1208 = vperm.xlu0 %1207, %v535
    %v1209 = vpop.permute.xlu0 %1208
    %1211 = vset.pattern.permute.xlu0 1
    %1212 = vperm.xlu0 %1211, %v536
    %v1213 = vpop.permute.xlu0 %1212
    %1215 = vset.pattern.permute.xlu0 1
    %1216 = vperm.xlu0 %1215, %v537
    %v1217 = vpop.permute.xlu0 %1216
    %1219 = vset.pattern.permute.xlu0 1
    %1220 = vperm.xlu0 %1219, %v538
    %v1221 = vpop.permute.xlu0 %1220
    %1223 = vset.pattern.permute.xlu0 1
    %1224 = vperm.xlu0 %1223, %v539
    %v1225 = vpop.permute.xlu0 %1224
    %1227 = vset.pattern.permute.xlu0 1
    %1228 = vperm.xlu0 %1227, %v540
    %v1229 = vpop.permute.xlu0 %1228
    %1231 = vset.pattern.permute.xlu0 1
    %1232 = vperm.xlu0 %1231, %v541
    %v1233 = vpop.permute.xlu0 %1232
    %1235 = vset.pattern.permute.xlu0 1
    %1236 = vperm.xlu0 %1235, %v542
    %v1237 = vpop.permute.xlu0 %1236
    %1239 = vset.pattern.permute.xlu0 1
    %1240 = vperm.xlu0 %1239, %v543
    %v1241 = vpop.permute.xlu0 %1240
    %1243 = vset.pattern.permute.xlu0 1
    %1244 = vperm.xlu0 %1243, %v544
    %v1245 = vpop.permute.xlu0 %1244
    %1247 = vset.pattern.permute.xlu0 1
    %1248 = vperm.xlu0 %1247, %v545
    %v1249 = vpop.permute.xlu0 %1248
    %1251 = vset.pattern.permute.xlu0 1
    %1252 = vperm.xlu0 %1251, %v546
    %v1253 = vpop.permute.xlu0 %1252
    %1255 = vset.pattern.permute.xlu0 1
    %1256 = vperm.xlu0 %1255, %v547
    %v1257 = vpop.permute.xlu0 %1256
    %1259 = vset.pattern.permute.xlu0 1
    %1260 = vperm.xlu0 %1259, %v548
    %v1261 = vpop.permute.xlu0 %1260
    %1263 = vset.pattern.permute.xlu0 1
    %1264 = vperm.xlu0 %1263, %v549
    %v1265 = vpop.permute.xlu0 %1264
    %1267 = vset.pattern.permute.xlu0 1
    %1268 = vperm.xlu0 %1267, %v550
    %v1269 = vpop.permute.xlu0 %1268
    %1271 = vset.pattern.permute.xlu0 1
    %1272 = vperm.xlu0 %1271, %v551
    %v1273 = vpop.permute.xlu0 %1272
    %1275 = vset.pattern.permute.xlu0 1
    %1276 = vperm.xlu0 %1275, %v552
    %v1277 = vpop.permute.xlu0 %1276
    %1279 = vset.pattern.permute.xlu0 1
    %1280 = vperm.xlu0 %1279, %v553
    %v1281 = vpop.permute.xlu0 %1280
    %1283 = vset.pattern.permute.xlu0 1
    %1284 = vperm.xlu0 %1283, %v554
    %v1285 = vpop.permute.xlu0 %1284
    %1287 = vset.pattern.permute.xlu0 1
    %1288 = vperm.xlu0 %1287, %v555
    %v1289 = vpop.permute.xlu0 %1288
    %1291 = vset.pattern.permute.xlu0 1
    %1292 = vperm.xlu0 %1291, %v556
    %v1293 = vpop.permute.xlu0 %1292
    %1295 = vset.pattern.permute.xlu0 1
    %1296 = vperm.xlu0 %1295, %v557
    %v1297 = vpop.permute.xlu0 %1296
    %1299 = vset.pattern.permute.xlu0 1
    %1300 = vperm.xlu0 %1299, %v558
    %v1301 = vpop.permute.xlu0 %1300
    %1303 = vset.pattern.permute.xlu0 1
    %1304 = vperm.xlu0 %1303, %v559
    %v1305 = vpop.permute.xlu0 %1304
    %1307 = vset.pattern.permute.xlu0 1
    %1308 = vperm.xlu0 %1307, %v560
    %v1309 = vpop.permute.xlu0 %1308
    %v1312 = vperm.slane %v563, 0
    %v1313 = vperm.slane %v563, 1
    %vm1316 = vcmp.eq.f32.partialorder %v1185, %v1312
    %vm1317 = vcmp.eq.f32.partialorder %v1185, %v1313
    %vm1318 = vcmp.eq.f32.partialorder %v1189, %v1312
    %vm1319 = vcmp.eq.f32.partialorder %v1189, %v1313
    %vm1320 = vcmp.eq.f32.partialorder %v1193, %v1312
    %vm1321 = vcmp.eq.f32.partialorder %v1193, %v1313
    %vm1322 = vcmp.eq.f32.partialorder %v1197, %v1312
    %vm1323 = vcmp.eq.f32.partialorder %v1197, %v1313
    %vm1324 = vcmp.eq.f32.partialorder %v1201, %v1312
    %vm1325 = vcmp.eq.f32.partialorder %v1201, %v1313
    %vm1326 = vcmp.eq.f32.partialorder %v1205, %v1312
    %vm1327 = vcmp.eq.f32.partialorder %v1205, %v1313
    %vm1328 = vcmp.eq.f32.partialorder %v1209, %v1312
    %vm1329 = vcmp.eq.f32.partialorder %v1209, %v1313
    %vm1330 = vcmp.eq.f32.partialorder %v1213, %v1312
    %vm1331 = vcmp.eq.f32.partialorder %v1213, %v1313
    %vm1332 = vcmp.eq.f32.partialorder %v1217, %v1312
    %vm1333 = vcmp.eq.f32.partialorder %v1217, %v1313
    %vm1334 = vcmp.eq.f32.partialorder %v1221, %v1312
    %vm1335 = vcmp.eq.f32.partialorder %v1221, %v1313
    %vm1336 = vcmp.eq.f32.partialorder %v1225, %v1312
    %vm1337 = vcmp.eq.f32.partialorder %v1225, %v1313
    %vm1338 = vcmp.eq.f32.partialorder %v1229, %v1312
    %vm1339 = vcmp.eq.f32.partialorder %v1229, %v1313
    %vm1340 = vcmp.eq.f32.partialorder %v1233, %v1312
    %vm1341 = vcmp.eq.f32.partialorder %v1233, %v1313
    %vm1342 = vcmp.eq.f32.partialorder %v1237, %v1312
    %vm1343 = vcmp.eq.f32.partialorder %v1237, %v1313
    %vm1344 = vcmp.eq.f32.partialorder %v1241, %v1312
    %vm1345 = vcmp.eq.f32.partialorder %v1241, %v1313
    %vm1346 = vcmp.eq.f32.partialorder %v1245, %v1312
    %vm1347 = vcmp.eq.f32.partialorder %v1245, %v1313
    %vm1348 = vcmp.eq.f32.partialorder %v1249, %v1312
    %vm1349 = vcmp.eq.f32.partialorder %v1249, %v1313
    %vm1350 = vcmp.eq.f32.partialorder %v1253, %v1312
    %vm1351 = vcmp.eq.f32.partialorder %v1253, %v1313
    %vm1352 = vcmp.eq.f32.partialorder %v1257, %v1312
    %vm1353 = vcmp.eq.f32.partialorder %v1257, %v1313
    %vm1354 = vcmp.eq.f32.partialorder %v1261, %v1312
    %vm1355 = vcmp.eq.f32.partialorder %v1261, %v1313
    %vm1356 = vcmp.eq.f32.partialorder %v1265, %v1312
    %vm1357 = vcmp.eq.f32.partialorder %v1265, %v1313
    %vm1358 = vcmp.eq.f32.partialorder %v1269, %v1312
    %vm1359 = vcmp.eq.f32.partialorder %v1269, %v1313
    %vm1360 = vcmp.eq.f32.partialorder %v1273, %v1312
    %vm1361 = vcmp.eq.f32.partialorder %v1273, %v1313
    %vm1362 = vcmp.eq.f32.partialorder %v1277, %v1312
    %vm1363 = vcmp.eq.f32.partialorder %v1277, %v1313
    %vm1364 = vcmp.eq.f32.partialorder %v1281, %v1312
    %vm1365 = vcmp.eq.f32.partialorder %v1281, %v1313
    %vm1366 = vcmp.eq.f32.partialorder %v1285, %v1312
    %vm1367 = vcmp.eq.f32.partialorder %v1285, %v1313
    %vm1368 = vcmp.eq.f32.partialorder %v1289, %v1312
    %vm1369 = vcmp.eq.f32.partialorder %v1289, %v1313
    %vm1370 = vcmp.eq.f32.partialorder %v1293, %v1312
    %vm1371 = vcmp.eq.f32.partialorder %v1293, %v1313
    %vm1372 = vcmp.eq.f32.partialorder %v1297, %v1312
    %vm1373 = vcmp.eq.f32.partialorder %v1297, %v1313
    %vm1374 = vcmp.eq.f32.partialorder %v1301, %v1312
    %vm1375 = vcmp.eq.f32.partialorder %v1301, %v1313
    %vm1376 = vcmp.eq.f32.partialorder %v1305, %v1312
    %vm1377 = vcmp.eq.f32.partialorder %v1305, %v1313
    %vm1378 = vcmp.eq.f32.partialorder %v1309, %v1312
    %vm1379 = vcmp.eq.f32.partialorder %v1309, %v1313
    %vm1380 = vmand %vm1119, %vm1316
    %vm1381 = vmand %vm1120, %vm1317
    %vm1382 = vmand %vm1121, %vm1318
    %vm1383 = vmand %vm1122, %vm1319
    %vm1384 = vmand %vm1123, %vm1320
    %vm1385 = vmand %vm1124, %vm1321
    %vm1386 = vmand %vm1125, %vm1322
    %vm1387 = vmand %vm1126, %vm1323
    %vm1388 = vmand %vm1127, %vm1324
    %vm1389 = vmand %vm1128, %vm1325
    %vm1390 = vmand %vm1129, %vm1326
    %vm1391 = vmand %vm1130, %vm1327
    %vm1392 = vmand %vm1131, %vm1328
    %vm1393 = vmand %vm1132, %vm1329
    %vm1394 = vmand %vm1133, %vm1330
    %vm1395 = vmand %vm1134, %vm1331
    %vm1396 = vmand %vm1135, %vm1332
    %vm1397 = vmand %vm1136, %vm1333
    %vm1398 = vmand %vm1137, %vm1334
    %vm1399 = vmand %vm1138, %vm1335
    %vm1400 = vmand %vm1139, %vm1336
    %vm1401 = vmand %vm1140, %vm1337
    %vm1402 = vmand %vm1141, %vm1338
    %vm1403 = vmand %vm1142, %vm1339
    %vm1404 = vmand %vm1143, %vm1340
    %vm1405 = vmand %vm1144, %vm1341
    %vm1406 = vmand %vm1145, %vm1342
    %vm1407 = vmand %vm1146, %vm1343
    %vm1408 = vmand %vm1147, %vm1344
    %vm1409 = vmand %vm1148, %vm1345
    %vm1410 = vmand %vm1149, %vm1346
    %vm1411 = vmand %vm1150, %vm1347
    %vm1412 = vmand %vm1151, %vm1348
    %vm1413 = vmand %vm1152, %vm1349
    %vm1414 = vmand %vm1153, %vm1350
    %vm1415 = vmand %vm1154, %vm1351
    %vm1416 = vmand %vm1155, %vm1352
    %vm1417 = vmand %vm1156, %vm1353
    %vm1418 = vmand %vm1157, %vm1354
    %vm1419 = vmand %vm1158, %vm1355
    %vm1420 = vmand %vm1159, %vm1356
    %vm1421 = vmand %vm1160, %vm1357
    %vm1422 = vmand %vm1161, %vm1358
    %vm1423 = vmand %vm1162, %vm1359
    %vm1424 = vmand %vm1163, %vm1360
    %vm1425 = vmand %vm1164, %vm1361
    %vm1426 = vmand %vm1165, %vm1362
    %vm1427 = vmand %vm1166, %vm1363
    %vm1428 = vmand %vm1167, %vm1364
    %vm1429 = vmand %vm1168, %vm1365
    %vm1430 = vmand %vm1169, %vm1366
    %vm1431 = vmand %vm1170, %vm1367
    %vm1432 = vmand %vm1171, %vm1368
    %vm1433 = vmand %vm1172, %vm1369
    %vm1434 = vmand %vm1173, %vm1370
    %vm1435 = vmand %vm1174, %vm1371
    %vm1436 = vmand %vm1175, %vm1372
    %vm1437 = vmand %vm1176, %vm1373
    %vm1438 = vmand %vm1177, %vm1374
    %vm1439 = vmand %vm1178, %vm1375
    %vm1440 = vmand %vm1179, %vm1376
    %vm1441 = vmand %vm1180, %vm1377
    %vm1442 = vmand %vm1181, %vm1378
    %vm1443 = vmand %vm1182, %vm1379
    %vm1444 = vmand %vm1380, %vm634
    %vm1445 = vmand %vm1381, %vm635
    %vm1446 = vmand %vm1382, %vm636
    %vm1447 = vmand %vm1383, %vm637
    %vm1448 = vmand %vm1384, %vm638
    %vm1449 = vmand %vm1385, %vm639
    %vm1450 = vmand %vm1386, %vm640
    %vm1451 = vmand %vm1387, %vm641
    %vm1452 = vmand %vm1388, %vm642
    %vm1453 = vmand %vm1389, %vm643
    %vm1454 = vmand %vm1390, %vm644
    %vm1455 = vmand %vm1391, %vm645
    %vm1456 = vmand %vm1392, %vm646
    %vm1457 = vmand %vm1393, %vm647
    %vm1458 = vmand %vm1394, %vm648
    %vm1459 = vmand %vm1395, %vm649
    %vm1460 = vmand %vm1396, %vm650
    %vm1461 = vmand %vm1397, %vm651
    %vm1462 = vmand %vm1398, %vm652
    %vm1463 = vmand %vm1399, %vm653
    %vm1464 = vmand %vm1400, %vm654
    %vm1465 = vmand %vm1401, %vm655
    %vm1466 = vmand %vm1402, %vm656
    %vm1467 = vmand %vm1403, %vm657
    %vm1468 = vmand %vm1404, %vm658
    %vm1469 = vmand %vm1405, %vm659
    %vm1470 = vmand %vm1406, %vm660
    %vm1471 = vmand %vm1407, %vm661
    %vm1472 = vmand %vm1408, %vm662
    %vm1473 = vmand %vm1409, %vm663
    %vm1474 = vmand %vm1410, %vm664
    %vm1475 = vmand %vm1411, %vm665
    %vm1476 = vmand %vm1412, %vm666
    %vm1477 = vmand %vm1413, %vm667
    %vm1478 = vmand %vm1414, %vm668
    %vm1479 = vmand %vm1415, %vm669
    %vm1480 = vmand %vm1416, %vm670
    %vm1481 = vmand %vm1417, %vm671
    %vm1482 = vmand %vm1418, %vm672
    %vm1483 = vmand %vm1419, %vm673
    %vm1484 = vmand %vm1420, %vm674
    %vm1485 = vmand %vm1421, %vm675
    %vm1486 = vmand %vm1422, %vm676
    %vm1487 = vmand %vm1423, %vm677
    %vm1488 = vmand %vm1424, %vm678
    %vm1489 = vmand %vm1425, %vm679
    %vm1490 = vmand %vm1426, %vm680
    %vm1491 = vmand %vm1427, %vm681
    %vm1492 = vmand %vm1428, %vm682
    %vm1493 = vmand %vm1429, %vm683
    %vm1494 = vmand %vm1430, %vm684
    %vm1495 = vmand %vm1431, %vm685
    %vm1496 = vmand %vm1432, %vm686
    %vm1497 = vmand %vm1433, %vm687
    %vm1498 = vmand %vm1434, %vm688
    %vm1499 = vmand %vm1435, %vm689
    %vm1500 = vmand %vm1436, %vm690
    %vm1501 = vmand %vm1437, %vm691
    %vm1502 = vmand %vm1438, %vm692
    %vm1503 = vmand %vm1439, %vm693
    %vm1504 = vmand %vm1440, %vm694
    %vm1505 = vmand %vm1441, %vm695
    %vm1506 = vmand %vm1442, %vm696
    %vm1507 = vmand %vm1443, %vm697
    %vm1508 = vmxor %vm1316, 1
    %vm1509 = vmxor %vm1317, 1
    %vm1510 = vmxor %vm1318, 1
    %vm1511 = vmxor %vm1319, 1
    %vm1512 = vmxor %vm1320, 1
    %vm1513 = vmxor %vm1321, 1
    %vm1514 = vmxor %vm1322, 1
    %vm1515 = vmxor %vm1323, 1
    %vm1516 = vmxor %vm1324, 1
    %vm1517 = vmxor %vm1325, 1
    %vm1518 = vmxor %vm1326, 1
    %vm1519 = vmxor %vm1327, 1
    %vm1520 = vmxor %vm1328, 1
    %vm1521 = vmxor %vm1329, 1
    %vm1522 = vmxor %vm1330, 1
    %vm1523 = vmxor %vm1331, 1
    %vm1524 = vmxor %vm1332, 1
    %vm1525 = vmxor %vm1333, 1
    %vm1526 = vmxor %vm1334, 1
    %vm1527 = vmxor %vm1335, 1
    %vm1528 = vmxor %vm1336, 1
    %vm1529 = vmxor %vm1337, 1
    %vm1530 = vmxor %vm1338, 1
    %vm1531 = vmxor %vm1339, 1
    %vm1532 = vmxor %vm1340, 1
    %vm1533 = vmxor %vm1341, 1
    %vm1534 = vmxor %vm1342, 1
    %vm1535 = vmxor %vm1343, 1
    %vm1536 = vmxor %vm1344, 1
    %vm1537 = vmxor %vm1345, 1
    %vm1538 = vmxor %vm1346, 1
    %vm1539 = vmxor %vm1347, 1
    %vm1540 = vmxor %vm1348, 1
    %vm1541 = vmxor %vm1349, 1
    %vm1542 = vmxor %vm1350, 1
    %vm1543 = vmxor %vm1351, 1
    %vm1544 = vmxor %vm1352, 1
    %vm1545 = vmxor %vm1353, 1
    %vm1546 = vmxor %vm1354, 1
    %vm1547 = vmxor %vm1355, 1
    %vm1548 = vmxor %vm1356, 1
    %vm1549 = vmxor %vm1357, 1
    %vm1550 = vmxor %vm1358, 1
    %vm1551 = vmxor %vm1359, 1
    %vm1552 = vmxor %vm1360, 1
    %vm1553 = vmxor %vm1361, 1
    %vm1554 = vmxor %vm1362, 1
    %vm1555 = vmxor %vm1363, 1
    %vm1556 = vmxor %vm1364, 1
    %vm1557 = vmxor %vm1365, 1
    %vm1558 = vmxor %vm1366, 1
    %vm1559 = vmxor %vm1367, 1
    %vm1560 = vmxor %vm1368, 1
    %vm1561 = vmxor %vm1369, 1
    %vm1562 = vmxor %vm1370, 1
    %vm1563 = vmxor %vm1371, 1
    %vm1564 = vmxor %vm1372, 1
    %vm1565 = vmxor %vm1373, 1
    %vm1566 = vmxor %vm1374, 1
    %vm1567 = vmxor %vm1375, 1
    %vm1568 = vmxor %vm1376, 1
    %vm1569 = vmxor %vm1377, 1
    %vm1570 = vmxor %vm1378, 1
    %vm1571 = vmxor %vm1379, 1
    %vm1572 = vmand %vm1119, %vm1508
    %vm1573 = vmand %vm1120, %vm1509
    %vm1574 = vmand %vm1121, %vm1510
    %vm1575 = vmand %vm1122, %vm1511
    %vm1576 = vmand %vm1123, %vm1512
    %vm1577 = vmand %vm1124, %vm1513
    %vm1578 = vmand %vm1125, %vm1514
    %vm1579 = vmand %vm1126, %vm1515
    %vm1580 = vmand %vm1127, %vm1516
    %vm1581 = vmand %vm1128, %vm1517
    %vm1582 = vmand %vm1129, %vm1518
    %vm1583 = vmand %vm1130, %vm1519
    %vm1584 = vmand %vm1131, %vm1520
    %vm1585 = vmand %vm1132, %vm1521
    %vm1586 = vmand %vm1133, %vm1522
    %vm1587 = vmand %vm1134, %vm1523
    %vm1588 = vmand %vm1135, %vm1524
    %vm1589 = vmand %vm1136, %vm1525
    %vm1590 = vmand %vm1137, %vm1526
    %vm1591 = vmand %vm1138, %vm1527
    %vm1592 = vmand %vm1139, %vm1528
    %vm1593 = vmand %vm1140, %vm1529
    %vm1594 = vmand %vm1141, %vm1530
    %vm1595 = vmand %vm1142, %vm1531
    %vm1596 = vmand %vm1143, %vm1532
    %vm1597 = vmand %vm1144, %vm1533
    %vm1598 = vmand %vm1145, %vm1534
    %vm1599 = vmand %vm1146, %vm1535
    %vm1600 = vmand %vm1147, %vm1536
    %vm1601 = vmand %vm1148, %vm1537
    %vm1602 = vmand %vm1149, %vm1538
    %vm1603 = vmand %vm1150, %vm1539
    %vm1604 = vmand %vm1151, %vm1540
    %vm1605 = vmand %vm1152, %vm1541
    %vm1606 = vmand %vm1153, %vm1542
    %vm1607 = vmand %vm1154, %vm1543
    %vm1608 = vmand %vm1155, %vm1544
    %vm1609 = vmand %vm1156, %vm1545
    %vm1610 = vmand %vm1157, %vm1546
    %vm1611 = vmand %vm1158, %vm1547
    %vm1612 = vmand %vm1159, %vm1548
    %vm1613 = vmand %vm1160, %vm1549
    %vm1614 = vmand %vm1161, %vm1550
    %vm1615 = vmand %vm1162, %vm1551
    %vm1616 = vmand %vm1163, %vm1552
    %vm1617 = vmand %vm1164, %vm1553
    %vm1618 = vmand %vm1165, %vm1554
    %vm1619 = vmand %vm1166, %vm1555
    %vm1620 = vmand %vm1167, %vm1556
    %vm1621 = vmand %vm1168, %vm1557
    %vm1622 = vmand %vm1169, %vm1558
    %vm1623 = vmand %vm1170, %vm1559
    %vm1624 = vmand %vm1171, %vm1560
    %vm1625 = vmand %vm1172, %vm1561
    %vm1626 = vmand %vm1173, %vm1562
    %vm1627 = vmand %vm1174, %vm1563
    %vm1628 = vmand %vm1175, %vm1564
    %vm1629 = vmand %vm1176, %vm1565
    %vm1630 = vmand %vm1177, %vm1566
    %vm1631 = vmand %vm1178, %vm1567
    %vm1632 = vmand %vm1179, %vm1568
    %vm1633 = vmand %vm1180, %vm1569
    %vm1634 = vmand %vm1181, %vm1570
    %vm1635 = vmand %vm1182, %vm1571
    %v1636 = vsel %vm1444, %v337, 0.0
    %v1637 = vsel %vm1445, %v338, 0.0
    %v1638 = vsel %vm1446, %v339, 0.0
    %v1639 = vsel %vm1447, %v340, 0.0
    %v1640 = vsel %vm1448, %v341, 0.0
    %v1641 = vsel %vm1449, %v342, 0.0
    %v1642 = vsel %vm1450, %v343, 0.0
    %v1643 = vsel %vm1451, %v344, 0.0
    %v1644 = vsel %vm1452, %v345, 0.0
    %v1645 = vsel %vm1453, %v346, 0.0
    %v1646 = vsel %vm1454, %v347, 0.0
    %v1647 = vsel %vm1455, %v348, 0.0
    %v1648 = vsel %vm1456, %v349, 0.0
    %v1649 = vsel %vm1457, %v350, 0.0
    %v1650 = vsel %vm1458, %v351, 0.0
    %v1651 = vsel %vm1459, %v352, 0.0
    %v1652 = vsel %vm1460, %v353, 0.0
    %v1653 = vsel %vm1461, %v354, 0.0
    %v1654 = vsel %vm1462, %v355, 0.0
    %v1655 = vsel %vm1463, %v356, 0.0
    %v1656 = vsel %vm1464, %v357, 0.0
    %v1657 = vsel %vm1465, %v358, 0.0
    %v1658 = vsel %vm1466, %v359, 0.0
    %v1659 = vsel %vm1467, %v360, 0.0
    %v1660 = vsel %vm1468, %v361, 0.0
    %v1661 = vsel %vm1469, %v362, 0.0
    %v1662 = vsel %vm1470, %v363, 0.0
    %v1663 = vsel %vm1471, %v364, 0.0
    %v1664 = vsel %vm1472, %v365, 0.0
    %v1665 = vsel %vm1473, %v366, 0.0
    %v1666 = vsel %vm1474, %v367, 0.0
    %v1667 = vsel %vm1475, %v368, 0.0
    %v1668 = vsel %vm1476, %v369, 0.0
    %v1669 = vsel %vm1477, %v370, 0.0
    %v1670 = vsel %vm1478, %v371, 0.0
    %v1671 = vsel %vm1479, %v372, 0.0
    %v1672 = vsel %vm1480, %v373, 0.0
    %v1673 = vsel %vm1481, %v374, 0.0
    %v1674 = vsel %vm1482, %v375, 0.0
    %v1675 = vsel %vm1483, %v376, 0.0
    %v1676 = vsel %vm1484, %v377, 0.0
    %v1677 = vsel %vm1485, %v378, 0.0
    %v1678 = vsel %vm1486, %v379, 0.0
    %v1679 = vsel %vm1487, %v380, 0.0
    %v1680 = vsel %vm1488, %v381, 0.0
    %v1681 = vsel %vm1489, %v382, 0.0
    %v1682 = vsel %vm1490, %v383, 0.0
    %v1683 = vsel %vm1491, %v384, 0.0
    %v1684 = vsel %vm1492, %v385, 0.0
    %v1685 = vsel %vm1493, %v386, 0.0
    %v1686 = vsel %vm1494, %v387, 0.0
    %v1687 = vsel %vm1495, %v388, 0.0
    %v1688 = vsel %vm1496, %v389, 0.0
    %v1689 = vsel %vm1497, %v390, 0.0
    %v1690 = vsel %vm1498, %v391, 0.0
    %v1691 = vsel %vm1499, %v392, 0.0
    %v1692 = vsel %vm1500, %v393, 0.0
    %v1693 = vsel %vm1501, %v394, 0.0
    %v1694 = vsel %vm1502, %v395, 0.0
    %v1695 = vsel %vm1503, %v396, 0.0
    %v1696 = vsel %vm1504, %v397, 0.0
    %v1697 = vsel %vm1505, %v398, 0.0
    %v1698 = vsel %vm1506, %v399, 0.0
    %v1699 = vsel %vm1507, %v400, 0.0
    %v1700 = vadd.f32 %v1636, %v1637
    %1701 = vadd.xlane.f32.xlu0 %v1700
    %v1702 = vpop.xlane.xlu0 %1701
    %v1703 = vadd.f32 %v1638, %v1639
    %1704 = vadd.xlane.f32.xlu0 %v1703
    %v1705 = vpop.xlane.xlu0 %1704
    %v1706 = vadd.f32 %v1640, %v1641
    %1707 = vadd.xlane.f32.xlu0 %v1706
    %v1708 = vpop.xlane.xlu0 %1707
    %v1709 = vadd.f32 %v1642, %v1643
    %1710 = vadd.xlane.f32.xlu0 %v1709
    %v1711 = vpop.xlane.xlu0 %1710
    %v1712 = vadd.f32 %v1644, %v1645
    %1713 = vadd.xlane.f32.xlu0 %v1712
    %v1714 = vpop.xlane.xlu0 %1713
    %v1715 = vadd.f32 %v1646, %v1647
    %1716 = vadd.xlane.f32.xlu0 %v1715
    %v1717 = vpop.xlane.xlu0 %1716
    %v1718 = vadd.f32 %v1648, %v1649
    %1719 = vadd.xlane.f32.xlu0 %v1718
    %v1720 = vpop.xlane.xlu0 %1719
    %v1721 = vadd.f32 %v1650, %v1651
    %1722 = vadd.xlane.f32.xlu0 %v1721
    %v1723 = vpop.xlane.xlu0 %1722
    %v1724 = vadd.f32 %v1652, %v1653
    %1725 = vadd.xlane.f32.xlu0 %v1724
    %v1726 = vpop.xlane.xlu0 %1725
    %v1727 = vadd.f32 %v1654, %v1655
    %1728 = vadd.xlane.f32.xlu0 %v1727
    %v1729 = vpop.xlane.xlu0 %1728
    %v1730 = vadd.f32 %v1656, %v1657
    %1731 = vadd.xlane.f32.xlu0 %v1730
    %v1732 = vpop.xlane.xlu0 %1731
    %v1733 = vadd.f32 %v1658, %v1659
    %1734 = vadd.xlane.f32.xlu0 %v1733
    %v1735 = vpop.xlane.xlu0 %1734
    %v1736 = vadd.f32 %v1660, %v1661
    %1737 = vadd.xlane.f32.xlu0 %v1736
    %v1738 = vpop.xlane.xlu0 %1737
    %v1739 = vadd.f32 %v1662, %v1663
    %1740 = vadd.xlane.f32.xlu0 %v1739
    %v1741 = vpop.xlane.xlu0 %1740
    %v1742 = vadd.f32 %v1664, %v1665
    %1743 = vadd.xlane.f32.xlu0 %v1742
    %v1744 = vpop.xlane.xlu0 %1743
    %v1745 = vadd.f32 %v1666, %v1667
    %1746 = vadd.xlane.f32.xlu0 %v1745
    %v1747 = vpop.xlane.xlu0 %1746
    %v1748 = vadd.f32 %v1668, %v1669
    %1749 = vadd.xlane.f32.xlu0 %v1748
    %v1750 = vpop.xlane.xlu0 %1749
    %v1751 = vadd.f32 %v1670, %v1671
    %1752 = vadd.xlane.f32.xlu0 %v1751
    %v1753 = vpop.xlane.xlu0 %1752
    %v1754 = vadd.f32 %v1672, %v1673
    %1755 = vadd.xlane.f32.xlu0 %v1754
    %v1756 = vpop.xlane.xlu0 %1755
    %v1757 = vadd.f32 %v1674, %v1675
    %1758 = vadd.xlane.f32.xlu0 %v1757
    %v1759 = vpop.xlane.xlu0 %1758
    %v1760 = vadd.f32 %v1676, %v1677
    %1761 = vadd.xlane.f32.xlu0 %v1760
    %v1762 = vpop.xlane.xlu0 %1761
    %v1763 = vadd.f32 %v1678, %v1679
    %1764 = vadd.xlane.f32.xlu0 %v1763
    %v1765 = vpop.xlane.xlu0 %1764
    %v1766 = vadd.f32 %v1680, %v1681
    %1767 = vadd.xlane.f32.xlu0 %v1766
    %v1768 = vpop.xlane.xlu0 %1767
    %v1769 = vadd.f32 %v1682, %v1683
    %1770 = vadd.xlane.f32.xlu0 %v1769
    %v1771 = vpop.xlane.xlu0 %1770
    %v1772 = vadd.f32 %v1684, %v1685
    %1773 = vadd.xlane.f32.xlu0 %v1772
    %v1774 = vpop.xlane.xlu0 %1773
    %v1775 = vadd.f32 %v1686, %v1687
    %1776 = vadd.xlane.f32.xlu0 %v1775
    %v1777 = vpop.xlane.xlu0 %1776
    %v1778 = vadd.f32 %v1688, %v1689
    %1779 = vadd.xlane.f32.xlu0 %v1778
    %v1780 = vpop.xlane.xlu0 %1779
    %v1781 = vadd.f32 %v1690, %v1691
    %1782 = vadd.xlane.f32.xlu0 %v1781
    %v1783 = vpop.xlane.xlu0 %1782
    %v1784 = vadd.f32 %v1692, %v1693
    %1785 = vadd.xlane.f32.xlu0 %v1784
    %v1786 = vpop.xlane.xlu0 %1785
    %v1787 = vadd.f32 %v1694, %v1695
    %1788 = vadd.xlane.f32.xlu0 %v1787
    %v1789 = vpop.xlane.xlu0 %1788
    %v1790 = vadd.f32 %v1696, %v1697
    %1791 = vadd.xlane.f32.xlu0 %v1790
    %v1792 = vpop.xlane.xlu0 %1791
    %v1793 = vadd.f32 %v1698, %v1699
    %1794 = vadd.xlane.f32.xlu0 %v1793
    %v1795 = vpop.xlane.xlu0 %1794
    %v1796 = vsel %vm1572, %v402, 0.0
    %v1797 = vsel %vm1573, %v404, 0.0
    %v1798 = vsel %vm1574, %v406, 0.0
    %v1799 = vsel %vm1575, %v408, 0.0
    %v1800 = vsel %vm1576, %v410, 0.0
    %v1801 = vsel %vm1577, %v412, 0.0
    %v1802 = vsel %vm1578, %v414, 0.0
    %v1803 = vsel %vm1579, %v416, 0.0
    %v1804 = vsel %vm1580, %v418, 0.0
    %v1805 = vsel %vm1581, %v420, 0.0
    %v1806 = vsel %vm1582, %v422, 0.0
    %v1807 = vsel %vm1583, %v424, 0.0
    %v1808 = vsel %vm1584, %v426, 0.0
    %v1809 = vsel %vm1585, %v428, 0.0
    %v1810 = vsel %vm1586, %v430, 0.0
    %v1811 = vsel %vm1587, %v432, 0.0
    %v1812 = vsel %vm1588, %v434, 0.0
    %v1813 = vsel %vm1589, %v436, 0.0
    %v1814 = vsel %vm1590, %v438, 0.0
    %v1815 = vsel %vm1591, %v440, 0.0
    %v1816 = vsel %vm1592, %v442, 0.0
    %v1817 = vsel %vm1593, %v444, 0.0
    %v1818 = vsel %vm1594, %v446, 0.0
    %v1819 = vsel %vm1595, %v448, 0.0
    %v1820 = vsel %vm1596, %v450, 0.0
    %v1821 = vsel %vm1597, %v452, 0.0
    %v1822 = vsel %vm1598, %v454, 0.0
    %v1823 = vsel %vm1599, %v456, 0.0
    %v1824 = vsel %vm1600, %v458, 0.0
    %v1825 = vsel %vm1601, %v460, 0.0
    %v1826 = vsel %vm1602, %v462, 0.0
    %v1827 = vsel %vm1603, %v464, 0.0
    %v1828 = vsel %vm1604, %v466, 0.0
    %v1829 = vsel %vm1605, %v468, 0.0
    %v1830 = vsel %vm1606, %v470, 0.0
    %v1831 = vsel %vm1607, %v472, 0.0
    %v1832 = vsel %vm1608, %v474, 0.0
    %v1833 = vsel %vm1609, %v476, 0.0
    %v1834 = vsel %vm1610, %v478, 0.0
    %v1835 = vsel %vm1611, %v480, 0.0
    %v1836 = vsel %vm1612, %v482, 0.0
    %v1837 = vsel %vm1613, %v484, 0.0
    %v1838 = vsel %vm1614, %v486, 0.0
    %v1839 = vsel %vm1615, %v488, 0.0
    %v1840 = vsel %vm1616, %v490, 0.0
    %v1841 = vsel %vm1617, %v492, 0.0
    %v1842 = vsel %vm1618, %v494, 0.0
    %v1843 = vsel %vm1619, %v496, 0.0
    %v1844 = vsel %vm1620, %v498, 0.0
    %v1845 = vsel %vm1621, %v500, 0.0
    %v1846 = vsel %vm1622, %v502, 0.0
    %v1847 = vsel %vm1623, %v504, 0.0
    %v1848 = vsel %vm1624, %v506, 0.0
    %v1849 = vsel %vm1625, %v508, 0.0
    %v1850 = vsel %vm1626, %v510, 0.0
    %v1851 = vsel %vm1627, %v512, 0.0
    %v1852 = vsel %vm1628, %v514, 0.0
    %v1853 = vsel %vm1629, %v516, 0.0
    %v1854 = vsel %vm1630, %v518, 0.0
    %v1855 = vsel %vm1631, %v520, 0.0
    %v1856 = vsel %vm1632, %v522, 0.0
    %v1857 = vsel %vm1633, %v524, 0.0
    %v1858 = vsel %vm1634, %v526, 0.0
    %v1859 = vsel %vm1635, %v528, 0.0
    %v1860 = vadd.f32 %v1796, %v1797
    %1861 = vadd.xlane.f32.xlu0 %v1860
    %v1862 = vpop.xlane.xlu0 %1861
    %v1863 = vadd.f32 %v1798, %v1799
    %1864 = vadd.xlane.f32.xlu0 %v1863
    %v1865 = vpop.xlane.xlu0 %1864
    %v1866 = vadd.f32 %v1800, %v1801
    %1867 = vadd.xlane.f32.xlu0 %v1866
    %v1868 = vpop.xlane.xlu0 %1867
    %v1869 = vadd.f32 %v1802, %v1803
    %1870 = vadd.xlane.f32.xlu0 %v1869
    %v1871 = vpop.xlane.xlu0 %1870
    %v1872 = vadd.f32 %v1804, %v1805
    %1873 = vadd.xlane.f32.xlu0 %v1872
    %v1874 = vpop.xlane.xlu0 %1873
    %v1875 = vadd.f32 %v1806, %v1807
    %1876 = vadd.xlane.f32.xlu0 %v1875
    %v1877 = vpop.xlane.xlu0 %1876
    %v1878 = vadd.f32 %v1808, %v1809
    %1879 = vadd.xlane.f32.xlu0 %v1878
    %v1880 = vpop.xlane.xlu0 %1879
    %v1881 = vadd.f32 %v1810, %v1811
    %1882 = vadd.xlane.f32.xlu0 %v1881
    %v1883 = vpop.xlane.xlu0 %1882
    %v1884 = vadd.f32 %v1812, %v1813
    %1885 = vadd.xlane.f32.xlu0 %v1884
    %v1886 = vpop.xlane.xlu0 %1885
    %v1887 = vadd.f32 %v1814, %v1815
    %1888 = vadd.xlane.f32.xlu0 %v1887
    %v1889 = vpop.xlane.xlu0 %1888
    %v1890 = vadd.f32 %v1816, %v1817
    %1891 = vadd.xlane.f32.xlu0 %v1890
    %v1892 = vpop.xlane.xlu0 %1891
    %v1893 = vadd.f32 %v1818, %v1819
    %1894 = vadd.xlane.f32.xlu0 %v1893
    %v1895 = vpop.xlane.xlu0 %1894
    %v1896 = vadd.f32 %v1820, %v1821
    %1897 = vadd.xlane.f32.xlu0 %v1896
    %v1898 = vpop.xlane.xlu0 %1897
    %v1899 = vadd.f32 %v1822, %v1823
    %1900 = vadd.xlane.f32.xlu0 %v1899
    %v1901 = vpop.xlane.xlu0 %1900
    %v1902 = vadd.f32 %v1824, %v1825
    %1903 = vadd.xlane.f32.xlu0 %v1902
    %v1904 = vpop.xlane.xlu0 %1903
    %v1905 = vadd.f32 %v1826, %v1827
    %1906 = vadd.xlane.f32.xlu0 %v1905
    %v1907 = vpop.xlane.xlu0 %1906
    %v1908 = vadd.f32 %v1828, %v1829
    %1909 = vadd.xlane.f32.xlu0 %v1908
    %v1910 = vpop.xlane.xlu0 %1909
    %v1911 = vadd.f32 %v1830, %v1831
    %1912 = vadd.xlane.f32.xlu0 %v1911
    %v1913 = vpop.xlane.xlu0 %1912
    %v1914 = vadd.f32 %v1832, %v1833
    %1915 = vadd.xlane.f32.xlu0 %v1914
    %v1916 = vpop.xlane.xlu0 %1915
    %v1917 = vadd.f32 %v1834, %v1835
    %1918 = vadd.xlane.f32.xlu0 %v1917
    %v1919 = vpop.xlane.xlu0 %1918
    %v1920 = vadd.f32 %v1836, %v1837
    %1921 = vadd.xlane.f32.xlu0 %v1920
    %v1922 = vpop.xlane.xlu0 %1921
    %v1923 = vadd.f32 %v1838, %v1839
    %1924 = vadd.xlane.f32.xlu0 %v1923
    %v1925 = vpop.xlane.xlu0 %1924
    %v1926 = vadd.f32 %v1840, %v1841
    %1927 = vadd.xlane.f32.xlu0 %v1926
    %v1928 = vpop.xlane.xlu0 %1927
    %v1929 = vadd.f32 %v1842, %v1843
    %1930 = vadd.xlane.f32.xlu0 %v1929
    %v1931 = vpop.xlane.xlu0 %1930
    %v1932 = vadd.f32 %v1844, %v1845
    %1933 = vadd.xlane.f32.xlu0 %v1932
    %v1934 = vpop.xlane.xlu0 %1933
    %v1935 = vadd.f32 %v1846, %v1847
    %1936 = vadd.xlane.f32.xlu0 %v1935
    %v1937 = vpop.xlane.xlu0 %1936
    %v1938 = vadd.f32 %v1848, %v1849
    %1939 = vadd.xlane.f32.xlu0 %v1938
    %v1940 = vpop.xlane.xlu0 %1939
    %v1941 = vadd.f32 %v1850, %v1851
    %1942 = vadd.xlane.f32.xlu0 %v1941
    %v1943 = vpop.xlane.xlu0 %1942
    %v1944 = vadd.f32 %v1852, %v1853
    %1945 = vadd.xlane.f32.xlu0 %v1944
    %v1946 = vpop.xlane.xlu0 %1945
    %v1947 = vadd.f32 %v1854, %v1855
    %1948 = vadd.xlane.f32.xlu0 %v1947
    %v1949 = vpop.xlane.xlu0 %1948
    %v1950 = vadd.f32 %v1856, %v1857
    %1951 = vadd.xlane.f32.xlu0 %v1950
    %v1952 = vpop.xlane.xlu0 %1951
    %v1953 = vadd.f32 %v1858, %v1859
    %1954 = vadd.xlane.f32.xlu0 %v1953
    %v1955 = vpop.xlane.xlu0 %1954
    %v1956 = vmax.f32 %v1862, 1e-30
    %v1957 = vmax.f32 %v1865, 1e-30
    %v1958 = vmax.f32 %v1868, 1e-30
    %v1959 = vmax.f32 %v1871, 1e-30
    %v1960 = vmax.f32 %v1874, 1e-30
    %v1961 = vmax.f32 %v1877, 1e-30
    %v1962 = vmax.f32 %v1880, 1e-30
    %v1963 = vmax.f32 %v1883, 1e-30
    %v1964 = vmax.f32 %v1886, 1e-30
    %v1965 = vmax.f32 %v1889, 1e-30
    %v1966 = vmax.f32 %v1892, 1e-30
    %v1967 = vmax.f32 %v1895, 1e-30
    %v1968 = vmax.f32 %v1898, 1e-30
    %v1969 = vmax.f32 %v1901, 1e-30
    %v1970 = vmax.f32 %v1904, 1e-30
    %v1971 = vmax.f32 %v1907, 1e-30
    %v1972 = vmax.f32 %v1910, 1e-30
    %v1973 = vmax.f32 %v1913, 1e-30
    %v1974 = vmax.f32 %v1916, 1e-30
    %v1975 = vmax.f32 %v1919, 1e-30
    %v1976 = vmax.f32 %v1922, 1e-30
    %v1977 = vmax.f32 %v1925, 1e-30
    %v1978 = vmax.f32 %v1928, 1e-30
    %v1979 = vmax.f32 %v1931, 1e-30
    %v1980 = vmax.f32 %v1934, 1e-30
    %v1981 = vmax.f32 %v1937, 1e-30
    %v1982 = vmax.f32 %v1940, 1e-30
    %v1983 = vmax.f32 %v1943, 1e-30
    %v1984 = vmax.f32 %v1946, 1e-30
    %v1985 = vmax.f32 %v1949, 1e-30
    %v1986 = vmax.f32 %v1952, 1e-30
    %v1987 = vmax.f32 %v1955, 1e-30
    %v1988 = vlog2.pop %v1956
    %v1989 = vmul.f32 %v1988, 0.6931472
    %v1990 = vlog2.pop %v1957
    %v1991 = vmul.f32 %v1990, 0.6931472
    %v1992 = vlog2.pop %v1958
    %v1993 = vmul.f32 %v1992, 0.6931472
    %v1994 = vlog2.pop %v1959
    %v1995 = vmul.f32 %v1994, 0.6931472
    %v1996 = vlog2.pop %v1960
    %v1997 = vmul.f32 %v1996, 0.6931472
    %v1998 = vlog2.pop %v1961
    %v1999 = vmul.f32 %v1998, 0.6931472
    %v2000 = vlog2.pop %v1962
    %v2001 = vmul.f32 %v2000, 0.6931472
    %v2002 = vlog2.pop %v1963
    %v2003 = vmul.f32 %v2002, 0.6931472
    %v2004 = vlog2.pop %v1964
    %v2005 = vmul.f32 %v2004, 0.6931472
    %v2006 = vlog2.pop %v1965
    %v2007 = vmul.f32 %v2006, 0.6931472
    %v2008 = vlog2.pop %v1966
    %v2009 = vmul.f32 %v2008, 0.6931472
    %v2010 = vlog2.pop %v1967
    %v2011 = vmul.f32 %v2010, 0.6931472
    %v2012 = vlog2.pop %v1968
    %v2013 = vmul.f32 %v2012, 0.6931472
    %v2014 = vlog2.pop %v1969
    %v2015 = vmul.f32 %v2014, 0.6931472
    %v2016 = vlog2.pop %v1970
    %v2017 = vmul.f32 %v2016, 0.6931472
    %v2018 = vlog2.pop %v1971
    %v2019 = vmul.f32 %v2018, 0.6931472
    %v2020 = vlog2.pop %v1972
    %v2021 = vmul.f32 %v2020, 0.6931472
    %v2022 = vlog2.pop %v1973
    %v2023 = vmul.f32 %v2022, 0.6931472
    %v2024 = vlog2.pop %v1974
    %v2025 = vmul.f32 %v2024, 0.6931472
    %v2026 = vlog2.pop %v1975
    %v2027 = vmul.f32 %v2026, 0.6931472
    %v2028 = vlog2.pop %v1976
    %v2029 = vmul.f32 %v2028, 0.6931472
    %v2030 = vlog2.pop %v1977
    %v2031 = vmul.f32 %v2030, 0.6931472
    %v2032 = vlog2.pop %v1978
    %v2033 = vmul.f32 %v2032, 0.6931472
    %v2034 = vlog2.pop %v1979
    %v2035 = vmul.f32 %v2034, 0.6931472
    %v2036 = vlog2.pop %v1980
    %v2037 = vmul.f32 %v2036, 0.6931472
    %v2038 = vlog2.pop %v1981
    %v2039 = vmul.f32 %v2038, 0.6931472
    %v2040 = vlog2.pop %v1982
    %v2041 = vmul.f32 %v2040, 0.6931472
    %v2042 = vlog2.pop %v1983
    %v2043 = vmul.f32 %v2042, 0.6931472
    %v2044 = vlog2.pop %v1984
    %v2045 = vmul.f32 %v2044, 0.6931472
    %v2046 = vlog2.pop %v1985
    %v2047 = vmul.f32 %v2046, 0.6931472
    %v2048 = vlog2.pop %v1986
    %v2049 = vmul.f32 %v2048, 0.6931472
    %v2050 = vlog2.pop %v1987
    %v2051 = vmul.f32 %v2050, 0.6931472
    %v2052 = vmul.f32 %v1702, %v529
    %v2053 = vmul.f32 %v1705, %v530
    %v2054 = vmul.f32 %v1708, %v531
    %v2055 = vmul.f32 %v1711, %v532
    %v2056 = vmul.f32 %v1714, %v533
    %v2057 = vmul.f32 %v1717, %v534
    %v2058 = vmul.f32 %v1720, %v535
    %v2059 = vmul.f32 %v1723, %v536
    %v2060 = vmul.f32 %v1726, %v537
    %v2061 = vmul.f32 %v1729, %v538
    %v2062 = vmul.f32 %v1732, %v539
    %v2063 = vmul.f32 %v1735, %v540
    %v2064 = vmul.f32 %v1738, %v541
    %v2065 = vmul.f32 %v1741, %v542
    %v2066 = vmul.f32 %v1744, %v543
    %v2067 = vmul.f32 %v1747, %v544
    %v2068 = vmul.f32 %v1750, %v545
    %v2069 = vmul.f32 %v1753, %v546
    %v2070 = vmul.f32 %v1756, %v547
    %v2071 = vmul.f32 %v1759, %v548
    %v2072 = vmul.f32 %v1762, %v549
    %v2073 = vmul.f32 %v1765, %v550
    %v2074 = vmul.f32 %v1768, %v551
    %v2075 = vmul.f32 %v1771, %v552
    %v2076 = vmul.f32 %v1774, %v553
    %v2077 = vmul.f32 %v1777, %v554
    %v2078 = vmul.f32 %v1780, %v555
    %v2079 = vmul.f32 %v1783, %v556
    %v2080 = vmul.f32 %v1786, %v557
    %v2081 = vmul.f32 %v1789, %v558
    %v2082 = vmul.f32 %v1792, %v559
    %v2083 = vmul.f32 %v1795, %v560
    %v2084 = vsub.f32 %v1989, %v2052
    %v2085 = vsub.f32 %v1991, %v2053
    %v2086 = vsub.f32 %v1993, %v2054
    %v2087 = vsub.f32 %v1995, %v2055
    %v2088 = vsub.f32 %v1997, %v2056
    %v2089 = vsub.f32 %v1999, %v2057
    %v2090 = vsub.f32 %v2001, %v2058
    %v2091 = vsub.f32 %v2003, %v2059
    %v2092 = vsub.f32 %v2005, %v2060
    %v2093 = vsub.f32 %v2007, %v2061
    %v2094 = vsub.f32 %v2009, %v2062
    %v2095 = vsub.f32 %v2011, %v2063
    %v2096 = vsub.f32 %v2013, %v2064
    %v2097 = vsub.f32 %v2015, %v2065
    %v2098 = vsub.f32 %v2017, %v2066
    %v2099 = vsub.f32 %v2019, %v2067
    %v2100 = vsub.f32 %v2021, %v2068
    %v2101 = vsub.f32 %v2023, %v2069
    %v2102 = vsub.f32 %v2025, %v2070
    %v2103 = vsub.f32 %v2027, %v2071
    %v2104 = vsub.f32 %v2029, %v2072
    %v2105 = vsub.f32 %v2031, %v2073
    %v2106 = vsub.f32 %v2033, %v2074
    %v2107 = vsub.f32 %v2035, %v2075
    %v2108 = vsub.f32 %v2037, %v2076
    %v2109 = vsub.f32 %v2039, %v2077
    %v2110 = vsub.f32 %v2041, %v2078
    %v2111 = vsub.f32 %v2043, %v2079
    %v2112 = vsub.f32 %v2045, %v2080
    %v2113 = vsub.f32 %v2047, %v2081
    %v2114 = vsub.f32 %v2049, %v2082
    %v2115 = vsub.f32 %v2051, %v2083
    %2116 = vrot.lane.b32.xlu0 %v529, 1
    %v2117 = vpop.permute.xlu0 %2116
    %2118 = vrot.lane.b32.xlu0 %v530, 1
    %v2119 = vpop.permute.xlu0 %2118
    %2120 = vrot.lane.b32.xlu0 %v531, 1
    %v2121 = vpop.permute.xlu0 %2120
    %2122 = vrot.lane.b32.xlu0 %v532, 1
    %v2123 = vpop.permute.xlu0 %2122
    %2124 = vrot.lane.b32.xlu0 %v533, 1
    %v2125 = vpop.permute.xlu0 %2124
    %2126 = vrot.lane.b32.xlu0 %v534, 1
    %v2127 = vpop.permute.xlu0 %2126
    %2128 = vrot.lane.b32.xlu0 %v535, 1
    %v2129 = vpop.permute.xlu0 %2128
    %2130 = vrot.lane.b32.xlu0 %v536, 1
    %v2131 = vpop.permute.xlu0 %2130
    %2132 = vrot.lane.b32.xlu0 %v537, 1
    %v2133 = vpop.permute.xlu0 %2132
    %2134 = vrot.lane.b32.xlu0 %v538, 1
    %v2135 = vpop.permute.xlu0 %2134
    %2136 = vrot.lane.b32.xlu0 %v539, 1
    %v2137 = vpop.permute.xlu0 %2136
    %2138 = vrot.lane.b32.xlu0 %v540, 1
    %v2139 = vpop.permute.xlu0 %2138
    %2140 = vrot.lane.b32.xlu0 %v541, 1
    %v2141 = vpop.permute.xlu0 %2140
    %2142 = vrot.lane.b32.xlu0 %v542, 1
    %v2143 = vpop.permute.xlu0 %2142
    %2144 = vrot.lane.b32.xlu0 %v543, 1
    %v2145 = vpop.permute.xlu0 %2144
    %2146 = vrot.lane.b32.xlu0 %v544, 1
    %v2147 = vpop.permute.xlu0 %2146
    %2148 = vrot.lane.b32.xlu0 %v545, 1
    %v2149 = vpop.permute.xlu0 %2148
    %2150 = vrot.lane.b32.xlu0 %v546, 1
    %v2151 = vpop.permute.xlu0 %2150
    %2152 = vrot.lane.b32.xlu0 %v547, 1
    %v2153 = vpop.permute.xlu0 %2152
    %2154 = vrot.lane.b32.xlu0 %v548, 1
    %v2155 = vpop.permute.xlu0 %2154
    %2156 = vrot.lane.b32.xlu0 %v549, 1
    %v2157 = vpop.permute.xlu0 %2156
    %2158 = vrot.lane.b32.xlu0 %v550, 1
    %v2159 = vpop.permute.xlu0 %2158
    %2160 = vrot.lane.b32.xlu0 %v551, 1
    %v2161 = vpop.permute.xlu0 %2160
    %2162 = vrot.lane.b32.xlu0 %v552, 1
    %v2163 = vpop.permute.xlu0 %2162
    %2164 = vrot.lane.b32.xlu0 %v553, 1
    %v2165 = vpop.permute.xlu0 %2164
    %2166 = vrot.lane.b32.xlu0 %v554, 1
    %v2167 = vpop.permute.xlu0 %2166
    %2168 = vrot.lane.b32.xlu0 %v555, 1
    %v2169 = vpop.permute.xlu0 %2168
    %2170 = vrot.lane.b32.xlu0 %v556, 1
    %v2171 = vpop.permute.xlu0 %2170
    %2172 = vrot.lane.b32.xlu0 %v557, 1
    %v2173 = vpop.permute.xlu0 %2172
    %2174 = vrot.lane.b32.xlu0 %v558, 1
    %v2175 = vpop.permute.xlu0 %2174
    %2176 = vrot.lane.b32.xlu0 %v559, 1
    %v2177 = vpop.permute.xlu0 %2176
    %2178 = vrot.lane.b32.xlu0 %v560, 1
    %v2179 = vpop.permute.xlu0 %2178
    %v2212 = vmul.f32 %v2084, %v2117
    %v2213 = vmul.f32 %v2085, %v2119
    %v2214 = vmul.f32 %v2086, %v2121
    %v2215 = vmul.f32 %v2087, %v2123
    %v2216 = vmul.f32 %v2088, %v2125
    %v2217 = vmul.f32 %v2089, %v2127
    %v2218 = vmul.f32 %v2090, %v2129
    %v2219 = vmul.f32 %v2091, %v2131
    %v2220 = vmul.f32 %v2092, %v2133
    %v2221 = vmul.f32 %v2093, %v2135
    %v2222 = vmul.f32 %v2094, %v2137
    %v2223 = vmul.f32 %v2095, %v2139
    %v2224 = vmul.f32 %v2096, %v2141
    %v2225 = vmul.f32 %v2097, %v2143
    %v2226 = vmul.f32 %v2098, %v2145
    %v2227 = vmul.f32 %v2099, %v2147
    %v2228 = vmul.f32 %v2100, %v2149
    %v2229 = vmul.f32 %v2101, %v2151
    %v2230 = vmul.f32 %v2102, %v2153
    %v2231 = vmul.f32 %v2103, %v2155
    %v2232 = vmul.f32 %v2104, %v2157
    %v2233 = vmul.f32 %v2105, %v2159
    %v2234 = vmul.f32 %v2106, %v2161
    %v2235 = vmul.f32 %v2107, %v2163
    %v2236 = vmul.f32 %v2108, %v2165
    %v2237 = vmul.f32 %v2109, %v2167
    %v2238 = vmul.f32 %v2110, %v2169
    %v2239 = vmul.f32 %v2111, %v2171
    %v2240 = vmul.f32 %v2112, %v2173
    %v2241 = vmul.f32 %v2113, %v2175
    %v2242 = vmul.f32 %v2114, %v2177
    %v2243 = vmul.f32 %v2115, %v2179
    %vm2244 = vcmp.eq.f32.partialorder %v529, 0.0
    %vm2245 = vcmp.eq.f32.partialorder %v530, 0.0
    %vm2246 = vcmp.eq.f32.partialorder %v531, 0.0
    %vm2247 = vcmp.eq.f32.partialorder %v532, 0.0
    %vm2248 = vcmp.eq.f32.partialorder %v533, 0.0
    %vm2249 = vcmp.eq.f32.partialorder %v534, 0.0
    %vm2250 = vcmp.eq.f32.partialorder %v535, 0.0
    %vm2251 = vcmp.eq.f32.partialorder %v536, 0.0
    %vm2252 = vcmp.eq.f32.partialorder %v537, 0.0
    %vm2253 = vcmp.eq.f32.partialorder %v538, 0.0
    %vm2254 = vcmp.eq.f32.partialorder %v539, 0.0
    %vm2255 = vcmp.eq.f32.partialorder %v540, 0.0
    %vm2256 = vcmp.eq.f32.partialorder %v541, 0.0
    %vm2257 = vcmp.eq.f32.partialorder %v542, 0.0
    %vm2258 = vcmp.eq.f32.partialorder %v543, 0.0
    %vm2259 = vcmp.eq.f32.partialorder %v544, 0.0
    %vm2260 = vcmp.eq.f32.partialorder %v545, 0.0
    %vm2261 = vcmp.eq.f32.partialorder %v546, 0.0
    %vm2262 = vcmp.eq.f32.partialorder %v547, 0.0
    %vm2263 = vcmp.eq.f32.partialorder %v548, 0.0
    %vm2264 = vcmp.eq.f32.partialorder %v549, 0.0
    %vm2265 = vcmp.eq.f32.partialorder %v550, 0.0
    %vm2266 = vcmp.eq.f32.partialorder %v551, 0.0
    %vm2267 = vcmp.eq.f32.partialorder %v552, 0.0
    %vm2268 = vcmp.eq.f32.partialorder %v553, 0.0
    %vm2269 = vcmp.eq.f32.partialorder %v554, 0.0
    %vm2270 = vcmp.eq.f32.partialorder %v555, 0.0
    %vm2271 = vcmp.eq.f32.partialorder %v556, 0.0
    %vm2272 = vcmp.eq.f32.partialorder %v557, 0.0
    %vm2273 = vcmp.eq.f32.partialorder %v558, 0.0
    %vm2274 = vcmp.eq.f32.partialorder %v559, 0.0
    %vm2275 = vcmp.eq.f32.partialorder %v560, 0.0
    %v2276 = vsel %vm2244, 1, 0
    %v2277 = vsel %vm2245, 1, 0
    %v2278 = vsel %vm2246, 1, 0
    %v2279 = vsel %vm2247, 1, 0
    %v2280 = vsel %vm2248, 1, 0
    %v2281 = vsel %vm2249, 1, 0
    %v2282 = vsel %vm2250, 1, 0
    %v2283 = vsel %vm2251, 1, 0
    %v2284 = vsel %vm2252, 1, 0
    %v2285 = vsel %vm2253, 1, 0
    %v2286 = vsel %vm2254, 1, 0
    %v2287 = vsel %vm2255, 1, 0
    %v2288 = vsel %vm2256, 1, 0
    %v2289 = vsel %vm2257, 1, 0
    %v2290 = vsel %vm2258, 1, 0
    %v2291 = vsel %vm2259, 1, 0
    %v2292 = vsel %vm2260, 1, 0
    %v2293 = vsel %vm2261, 1, 0
    %v2294 = vsel %vm2262, 1, 0
    %v2295 = vsel %vm2263, 1, 0
    %v2296 = vsel %vm2264, 1, 0
    %v2297 = vsel %vm2265, 1, 0
    %v2298 = vsel %vm2266, 1, 0
    %v2299 = vsel %vm2267, 1, 0
    %v2300 = vsel %vm2268, 1, 0
    %v2301 = vsel %vm2269, 1, 0
    %v2302 = vsel %vm2270, 1, 0
    %v2303 = vsel %vm2271, 1, 0
    %v2304 = vsel %vm2272, 1, 0
    %v2305 = vsel %vm2273, 1, 0
    %v2306 = vsel %vm2274, 1, 0
    %v2307 = vsel %vm2275, 1, 0
    %v2308 = vcvt.s32.f32 %v2276
    %v2309 = vcvt.s32.f32 %v2277
    %v2310 = vcvt.s32.f32 %v2278
    %v2311 = vcvt.s32.f32 %v2279
    %v2312 = vcvt.s32.f32 %v2280
    %v2313 = vcvt.s32.f32 %v2281
    %v2314 = vcvt.s32.f32 %v2282
    %v2315 = vcvt.s32.f32 %v2283
    %v2316 = vcvt.s32.f32 %v2284
    %v2317 = vcvt.s32.f32 %v2285
    %v2318 = vcvt.s32.f32 %v2286
    %v2319 = vcvt.s32.f32 %v2287
    %v2320 = vcvt.s32.f32 %v2288
    %v2321 = vcvt.s32.f32 %v2289
    %v2322 = vcvt.s32.f32 %v2290
    %v2323 = vcvt.s32.f32 %v2291
    %v2324 = vcvt.s32.f32 %v2292
    %v2325 = vcvt.s32.f32 %v2293
    %v2326 = vcvt.s32.f32 %v2294
    %v2327 = vcvt.s32.f32 %v2295
    %v2328 = vcvt.s32.f32 %v2296
    %v2329 = vcvt.s32.f32 %v2297
    %v2330 = vcvt.s32.f32 %v2298
    %v2331 = vcvt.s32.f32 %v2299
    %v2332 = vcvt.s32.f32 %v2300
    %v2333 = vcvt.s32.f32 %v2301
    %v2334 = vcvt.s32.f32 %v2302
    %v2335 = vcvt.s32.f32 %v2303
    %v2336 = vcvt.s32.f32 %v2304
    %v2337 = vcvt.s32.f32 %v2305
    %v2338 = vcvt.s32.f32 %v2306
    %v2339 = vcvt.s32.f32 %v2307
    %vm2340 = vcmp.eq.f32.partialorder %v529, 1.0
    %vm2341 = vcmp.eq.f32.partialorder %v530, 1.0
    %vm2342 = vcmp.eq.f32.partialorder %v531, 1.0
    %vm2343 = vcmp.eq.f32.partialorder %v532, 1.0
    %vm2344 = vcmp.eq.f32.partialorder %v533, 1.0
    %vm2345 = vcmp.eq.f32.partialorder %v534, 1.0
    %vm2346 = vcmp.eq.f32.partialorder %v535, 1.0
    %vm2347 = vcmp.eq.f32.partialorder %v536, 1.0
    %vm2348 = vcmp.eq.f32.partialorder %v537, 1.0
    %vm2349 = vcmp.eq.f32.partialorder %v538, 1.0
    %vm2350 = vcmp.eq.f32.partialorder %v539, 1.0
    %vm2351 = vcmp.eq.f32.partialorder %v540, 1.0
    %vm2352 = vcmp.eq.f32.partialorder %v541, 1.0
    %vm2353 = vcmp.eq.f32.partialorder %v542, 1.0
    %vm2354 = vcmp.eq.f32.partialorder %v543, 1.0
    %vm2355 = vcmp.eq.f32.partialorder %v544, 1.0
    %vm2356 = vcmp.eq.f32.partialorder %v545, 1.0
    %vm2357 = vcmp.eq.f32.partialorder %v546, 1.0
    %vm2358 = vcmp.eq.f32.partialorder %v547, 1.0
    %vm2359 = vcmp.eq.f32.partialorder %v548, 1.0
    %vm2360 = vcmp.eq.f32.partialorder %v549, 1.0
    %vm2361 = vcmp.eq.f32.partialorder %v550, 1.0
    %vm2362 = vcmp.eq.f32.partialorder %v551, 1.0
    %vm2363 = vcmp.eq.f32.partialorder %v552, 1.0
    %vm2364 = vcmp.eq.f32.partialorder %v553, 1.0
    %vm2365 = vcmp.eq.f32.partialorder %v554, 1.0
    %vm2366 = vcmp.eq.f32.partialorder %v555, 1.0
    %vm2367 = vcmp.eq.f32.partialorder %v556, 1.0
    %vm2368 = vcmp.eq.f32.partialorder %v557, 1.0
    %vm2369 = vcmp.eq.f32.partialorder %v558, 1.0
    %vm2370 = vcmp.eq.f32.partialorder %v559, 1.0
    %vm2371 = vcmp.eq.f32.partialorder %v560, 1.0
    %v2372 = vsel %vm2340, 1, 0
    %v2373 = vsel %vm2341, 1, 0
    %v2374 = vsel %vm2342, 1, 0
    %v2375 = vsel %vm2343, 1, 0
    %v2376 = vsel %vm2344, 1, 0
    %v2377 = vsel %vm2345, 1, 0
    %v2378 = vsel %vm2346, 1, 0
    %v2379 = vsel %vm2347, 1, 0
    %v2380 = vsel %vm2348, 1, 0
    %v2381 = vsel %vm2349, 1, 0
    %v2382 = vsel %vm2350, 1, 0
    %v2383 = vsel %vm2351, 1, 0
    %v2384 = vsel %vm2352, 1, 0
    %v2385 = vsel %vm2353, 1, 0
    %v2386 = vsel %vm2354, 1, 0
    %v2387 = vsel %vm2355, 1, 0
    %v2388 = vsel %vm2356, 1, 0
    %v2389 = vsel %vm2357, 1, 0
    %v2390 = vsel %vm2358, 1, 0
    %v2391 = vsel %vm2359, 1, 0
    %v2392 = vsel %vm2360, 1, 0
    %v2393 = vsel %vm2361, 1, 0
    %v2394 = vsel %vm2362, 1, 0
    %v2395 = vsel %vm2363, 1, 0
    %v2396 = vsel %vm2364, 1, 0
    %v2397 = vsel %vm2365, 1, 0
    %v2398 = vsel %vm2366, 1, 0
    %v2399 = vsel %vm2367, 1, 0
    %v2400 = vsel %vm2368, 1, 0
    %v2401 = vsel %vm2369, 1, 0
    %v2402 = vsel %vm2370, 1, 0
    %v2403 = vsel %vm2371, 1, 0
    %v2404 = vcvt.s32.f32 %v2372
    %v2405 = vcvt.s32.f32 %v2373
    %v2406 = vcvt.s32.f32 %v2374
    %v2407 = vcvt.s32.f32 %v2375
    %v2408 = vcvt.s32.f32 %v2376
    %v2409 = vcvt.s32.f32 %v2377
    %v2410 = vcvt.s32.f32 %v2378
    %v2411 = vcvt.s32.f32 %v2379
    %v2412 = vcvt.s32.f32 %v2380
    %v2413 = vcvt.s32.f32 %v2381
    %v2414 = vcvt.s32.f32 %v2382
    %v2415 = vcvt.s32.f32 %v2383
    %v2416 = vcvt.s32.f32 %v2384
    %v2417 = vcvt.s32.f32 %v2385
    %v2418 = vcvt.s32.f32 %v2386
    %v2419 = vcvt.s32.f32 %v2387
    %v2420 = vcvt.s32.f32 %v2388
    %v2421 = vcvt.s32.f32 %v2389
    %v2422 = vcvt.s32.f32 %v2390
    %v2423 = vcvt.s32.f32 %v2391
    %v2424 = vcvt.s32.f32 %v2392
    %v2425 = vcvt.s32.f32 %v2393
    %v2426 = vcvt.s32.f32 %v2394
    %v2427 = vcvt.s32.f32 %v2395
    %v2428 = vcvt.s32.f32 %v2396
    %v2429 = vcvt.s32.f32 %v2397
    %v2430 = vcvt.s32.f32 %v2398
    %v2431 = vcvt.s32.f32 %v2399
    %v2432 = vcvt.s32.f32 %v2400
    %v2433 = vcvt.s32.f32 %v2401
    %v2434 = vcvt.s32.f32 %v2402
    %v2435 = vcvt.s32.f32 %v2403
    %2468 = vrot.lane.b32.xlu0 %v2308, 4
    %v2469 = vpop.permute.xlu0 %2468
    %2470 = vrot.lane.b32.xlu0 %v2309, 4
    %v2471 = vpop.permute.xlu0 %2470
    %2472 = vrot.lane.b32.xlu0 %v2310, 4
    %v2473 = vpop.permute.xlu0 %2472
    %2474 = vrot.lane.b32.xlu0 %v2311, 4
    %v2475 = vpop.permute.xlu0 %2474
    %2476 = vrot.lane.b32.xlu0 %v2312, 4
    %v2477 = vpop.permute.xlu0 %2476
    %2478 = vrot.lane.b32.xlu0 %v2313, 4
    %v2479 = vpop.permute.xlu0 %2478
    %2480 = vrot.lane.b32.xlu0 %v2314, 4
    %v2481 = vpop.permute.xlu0 %2480
    %2482 = vrot.lane.b32.xlu0 %v2315, 4
    %v2483 = vpop.permute.xlu0 %2482
    %2484 = vrot.lane.b32.xlu0 %v2316, 4
    %v2485 = vpop.permute.xlu0 %2484
    %2486 = vrot.lane.b32.xlu0 %v2317, 4
    %v2487 = vpop.permute.xlu0 %2486
    %2488 = vrot.lane.b32.xlu0 %v2318, 4
    %v2489 = vpop.permute.xlu0 %2488
    %2490 = vrot.lane.b32.xlu0 %v2319, 4
    %v2491 = vpop.permute.xlu0 %2490
    %2492 = vrot.lane.b32.xlu0 %v2320, 4
    %v2493 = vpop.permute.xlu0 %2492
    %2494 = vrot.lane.b32.xlu0 %v2321, 4
    %v2495 = vpop.permute.xlu0 %2494
    %2496 = vrot.lane.b32.xlu0 %v2322, 4
    %v2497 = vpop.permute.xlu0 %2496
    %2498 = vrot.lane.b32.xlu0 %v2323, 4
    %v2499 = vpop.permute.xlu0 %2498
    %2500 = vrot.lane.b32.xlu0 %v2324, 4
    %v2501 = vpop.permute.xlu0 %2500
    %2502 = vrot.lane.b32.xlu0 %v2325, 4
    %v2503 = vpop.permute.xlu0 %2502
    %2504 = vrot.lane.b32.xlu0 %v2326, 4
    %v2505 = vpop.permute.xlu0 %2504
    %2506 = vrot.lane.b32.xlu0 %v2327, 4
    %v2507 = vpop.permute.xlu0 %2506
    %2508 = vrot.lane.b32.xlu0 %v2328, 4
    %v2509 = vpop.permute.xlu0 %2508
    %2510 = vrot.lane.b32.xlu0 %v2329, 4
    %v2511 = vpop.permute.xlu0 %2510
    %2512 = vrot.lane.b32.xlu0 %v2330, 4
    %v2513 = vpop.permute.xlu0 %2512
    %2514 = vrot.lane.b32.xlu0 %v2331, 4
    %v2515 = vpop.permute.xlu0 %2514
    %2516 = vrot.lane.b32.xlu0 %v2332, 4
    %v2517 = vpop.permute.xlu0 %2516
    %2518 = vrot.lane.b32.xlu0 %v2333, 4
    %v2519 = vpop.permute.xlu0 %2518
    %2520 = vrot.lane.b32.xlu0 %v2334, 4
    %v2521 = vpop.permute.xlu0 %2520
    %2522 = vrot.lane.b32.xlu0 %v2335, 4
    %v2523 = vpop.permute.xlu0 %2522
    %2524 = vrot.lane.b32.xlu0 %v2336, 4
    %v2525 = vpop.permute.xlu0 %2524
    %2526 = vrot.lane.b32.xlu0 %v2337, 4
    %v2527 = vpop.permute.xlu0 %2526
    %2528 = vrot.lane.b32.xlu0 %v2338, 4
    %v2529 = vpop.permute.xlu0 %2528
    %2530 = vrot.lane.b32.xlu0 %v2339, 4
    %v2531 = vpop.permute.xlu0 %2530
    %v2564 = vmul.f32 %v2212, %v2469
    %v2565 = vmul.f32 %v2213, %v2471
    %v2566 = vmul.f32 %v2214, %v2473
    %v2567 = vmul.f32 %v2215, %v2475
    %v2568 = vmul.f32 %v2216, %v2477
    %v2569 = vmul.f32 %v2217, %v2479
    %v2570 = vmul.f32 %v2218, %v2481
    %v2571 = vmul.f32 %v2219, %v2483
    %v2572 = vmul.f32 %v2220, %v2485
    %v2573 = vmul.f32 %v2221, %v2487
    %v2574 = vmul.f32 %v2222, %v2489
    %v2575 = vmul.f32 %v2223, %v2491
    %v2576 = vmul.f32 %v2224, %v2493
    %v2577 = vmul.f32 %v2225, %v2495
    %v2578 = vmul.f32 %v2226, %v2497
    %v2579 = vmul.f32 %v2227, %v2499
    %v2580 = vmul.f32 %v2228, %v2501
    %v2581 = vmul.f32 %v2229, %v2503
    %v2582 = vmul.f32 %v2230, %v2505
    %v2583 = vmul.f32 %v2231, %v2507
    %v2584 = vmul.f32 %v2232, %v2509
    %v2585 = vmul.f32 %v2233, %v2511
    %v2586 = vmul.f32 %v2234, %v2513
    %v2587 = vmul.f32 %v2235, %v2515
    %v2588 = vmul.f32 %v2236, %v2517
    %v2589 = vmul.f32 %v2237, %v2519
    %v2590 = vmul.f32 %v2238, %v2521
    %v2591 = vmul.f32 %v2239, %v2523
    %v2592 = vmul.f32 %v2240, %v2525
    %v2593 = vmul.f32 %v2241, %v2527
    %v2594 = vmul.f32 %v2242, %v2529
    %v2595 = vmul.f32 %v2243, %v2531
    %vm2596 = vcmask 39968
    %v2597 = vsel %vm2596, %v2564, 0.0
    %v2598 = vsel %vm2596, %v2565, 0.0
    %v2599 = vadd.f32 %v2597, %v2598
    %v2600 = vsel %vm2596, %v2566, 0.0
    %v2601 = vadd.f32 %v2599, %v2600
    %v2602 = vsel %vm2596, %v2567, 0.0
    %v2603 = vadd.f32 %v2601, %v2602
    %v2604 = vsel %vm2596, %v2568, 0.0
    %v2605 = vadd.f32 %v2603, %v2604
    %v2606 = vsel %vm2596, %v2569, 0.0
    %v2607 = vadd.f32 %v2605, %v2606
    %v2608 = vsel %vm2596, %v2570, 0.0
    %v2609 = vadd.f32 %v2607, %v2608
    %v2610 = vsel %vm2596, %v2571, 0.0
    %v2611 = vadd.f32 %v2609, %v2610
    %v2612 = vsel %vm2596, %v2572, 0.0
    %v2613 = vadd.f32 %v2611, %v2612
    %v2614 = vsel %vm2596, %v2573, 0.0
    %v2615 = vadd.f32 %v2613, %v2614
    %v2616 = vsel %vm2596, %v2574, 0.0
    %v2617 = vadd.f32 %v2615, %v2616
    %v2618 = vsel %vm2596, %v2575, 0.0
    %v2619 = vadd.f32 %v2617, %v2618
    %v2620 = vsel %vm2596, %v2576, 0.0
    %v2621 = vadd.f32 %v2619, %v2620
    %v2622 = vsel %vm2596, %v2577, 0.0
    %v2623 = vadd.f32 %v2621, %v2622
    %v2624 = vsel %vm2596, %v2578, 0.0
    %v2625 = vadd.f32 %v2623, %v2624
    %v2626 = vsel %vm2596, %v2579, 0.0
    %v2627 = vadd.f32 %v2625, %v2626
    %v2628 = vsel %vm2596, %v2580, 0.0
    %v2629 = vadd.f32 %v2627, %v2628
    %v2630 = vsel %vm2596, %v2581, 0.0
    %v2631 = vadd.f32 %v2629, %v2630
    %v2632 = vsel %vm2596, %v2582, 0.0
    %v2633 = vadd.f32 %v2631, %v2632
    %v2634 = vsel %vm2596, %v2583, 0.0
    %v2635 = vadd.f32 %v2633, %v2634
    %v2636 = vsel %vm2596, %v2584, 0.0
    %v2637 = vadd.f32 %v2635, %v2636
    %v2638 = vsel %vm2596, %v2585, 0.0
    %v2639 = vadd.f32 %v2637, %v2638
    %v2640 = vsel %vm2596, %v2586, 0.0
    %v2641 = vadd.f32 %v2639, %v2640
    %v2642 = vsel %vm2596, %v2587, 0.0
    %v2643 = vadd.f32 %v2641, %v2642
    %v2644 = vsel %vm2596, %v2588, 0.0
    %v2645 = vadd.f32 %v2643, %v2644
    %v2646 = vsel %vm2596, %v2589, 0.0
    %v2647 = vadd.f32 %v2645, %v2646
    %v2648 = vsel %vm2596, %v2590, 0.0
    %v2649 = vadd.f32 %v2647, %v2648
    %v2650 = vsel %vm2596, %v2591, 0.0
    %v2651 = vadd.f32 %v2649, %v2650
    %v2652 = vsel %vm2596, %v2592, 0.0
    %v2653 = vadd.f32 %v2651, %v2652
    %v2654 = vsel %vm2596, %v2593, 0.0
    %v2655 = vadd.f32 %v2653, %v2654
    %v2656 = vsel %vm2596, %v2594, 0.0
    %v2657 = vadd.f32 %v2655, %v2656
    %v2658 = vsel %vm2596, %v2595, 0.0
    %v2659 = vadd.f32 %v2657, %v2658
    %v2660 = vrot.slane %v2659, 4
    %v2661 = vadd.f32 %v2659, %v2660
    %v2662 = vrot.slane %v2661, 2
    %v2663 = vadd.f32 %v2661, %v2662
    %v2664 = vrot.slane %v2663, 1
    %v2665 = vadd.f32 %v2663, %v2664
    %2698 = vrot.lane.b32.xlu0 %v2404, 4
    %v2699 = vpop.permute.xlu0 %2698
    %2700 = vrot.lane.b32.xlu0 %v2405, 4
    %v2701 = vpop.permute.xlu0 %2700
    %2702 = vrot.lane.b32.xlu0 %v2406, 4
    %v2703 = vpop.permute.xlu0 %2702
    %2704 = vrot.lane.b32.xlu0 %v2407, 4
    %v2705 = vpop.permute.xlu0 %2704
    %2706 = vrot.lane.b32.xlu0 %v2408, 4
    %v2707 = vpop.permute.xlu0 %2706
    %2708 = vrot.lane.b32.xlu0 %v2409, 4
    %v2709 = vpop.permute.xlu0 %2708
    %2710 = vrot.lane.b32.xlu0 %v2410, 4
    %v2711 = vpop.permute.xlu0 %2710
    %2712 = vrot.lane.b32.xlu0 %v2411, 4
    %v2713 = vpop.permute.xlu0 %2712
    %2714 = vrot.lane.b32.xlu0 %v2412, 4
    %v2715 = vpop.permute.xlu0 %2714
    %2716 = vrot.lane.b32.xlu0 %v2413, 4
    %v2717 = vpop.permute.xlu0 %2716
    %2718 = vrot.lane.b32.xlu0 %v2414, 4
    %v2719 = vpop.permute.xlu0 %2718
    %2720 = vrot.lane.b32.xlu0 %v2415, 4
    %v2721 = vpop.permute.xlu0 %2720
    %2722 = vrot.lane.b32.xlu0 %v2416, 4
    %v2723 = vpop.permute.xlu0 %2722
    %2724 = vrot.lane.b32.xlu0 %v2417, 4
    %v2725 = vpop.permute.xlu0 %2724
    %2726 = vrot.lane.b32.xlu0 %v2418, 4
    %v2727 = vpop.permute.xlu0 %2726
    %2728 = vrot.lane.b32.xlu0 %v2419, 4
    %v2729 = vpop.permute.xlu0 %2728
    %2730 = vrot.lane.b32.xlu0 %v2420, 4
    %v2731 = vpop.permute.xlu0 %2730
    %2732 = vrot.lane.b32.xlu0 %v2421, 4
    %v2733 = vpop.permute.xlu0 %2732
    %2734 = vrot.lane.b32.xlu0 %v2422, 4
    %v2735 = vpop.permute.xlu0 %2734
    %2736 = vrot.lane.b32.xlu0 %v2423, 4
    %v2737 = vpop.permute.xlu0 %2736
    %2738 = vrot.lane.b32.xlu0 %v2424, 4
    %v2739 = vpop.permute.xlu0 %2738
    %2740 = vrot.lane.b32.xlu0 %v2425, 4
    %v2741 = vpop.permute.xlu0 %2740
    %2742 = vrot.lane.b32.xlu0 %v2426, 4
    %v2743 = vpop.permute.xlu0 %2742
    %2744 = vrot.lane.b32.xlu0 %v2427, 4
    %v2745 = vpop.permute.xlu0 %2744
    %2746 = vrot.lane.b32.xlu0 %v2428, 4
    %v2747 = vpop.permute.xlu0 %2746
    %2748 = vrot.lane.b32.xlu0 %v2429, 4
    %v2749 = vpop.permute.xlu0 %2748
    %2750 = vrot.lane.b32.xlu0 %v2430, 4
    %v2751 = vpop.permute.xlu0 %2750
    %2752 = vrot.lane.b32.xlu0 %v2431, 4
    %v2753 = vpop.permute.xlu0 %2752
    %2754 = vrot.lane.b32.xlu0 %v2432, 4
    %v2755 = vpop.permute.xlu0 %2754
    %2756 = vrot.lane.b32.xlu0 %v2433, 4
    %v2757 = vpop.permute.xlu0 %2756
    %2758 = vrot.lane.b32.xlu0 %v2434, 4
    %v2759 = vpop.permute.xlu0 %2758
    %2760 = vrot.lane.b32.xlu0 %v2435, 4
    %v2761 = vpop.permute.xlu0 %2760
    %v2794 = vmul.f32 %v2212, %v2699
    %v2795 = vmul.f32 %v2213, %v2701
    %v2796 = vmul.f32 %v2214, %v2703
    %v2797 = vmul.f32 %v2215, %v2705
    %v2798 = vmul.f32 %v2216, %v2707
    %v2799 = vmul.f32 %v2217, %v2709
    %v2800 = vmul.f32 %v2218, %v2711
    %v2801 = vmul.f32 %v2219, %v2713
    %v2802 = vmul.f32 %v2220, %v2715
    %v2803 = vmul.f32 %v2221, %v2717
    %v2804 = vmul.f32 %v2222, %v2719
    %v2805 = vmul.f32 %v2223, %v2721
    %v2806 = vmul.f32 %v2224, %v2723
    %v2807 = vmul.f32 %v2225, %v2725
    %v2808 = vmul.f32 %v2226, %v2727
    %v2809 = vmul.f32 %v2227, %v2729
    %v2810 = vmul.f32 %v2228, %v2731
    %v2811 = vmul.f32 %v2229, %v2733
    %v2812 = vmul.f32 %v2230, %v2735
    %v2813 = vmul.f32 %v2231, %v2737
    %v2814 = vmul.f32 %v2232, %v2739
    %v2815 = vmul.f32 %v2233, %v2741
    %v2816 = vmul.f32 %v2234, %v2743
    %v2817 = vmul.f32 %v2235, %v2745
    %v2818 = vmul.f32 %v2236, %v2747
    %v2819 = vmul.f32 %v2237, %v2749
    %v2820 = vmul.f32 %v2238, %v2751
    %v2821 = vmul.f32 %v2239, %v2753
    %v2822 = vmul.f32 %v2240, %v2755
    %v2823 = vmul.f32 %v2241, %v2757
    %v2824 = vmul.f32 %v2242, %v2759
    %v2825 = vmul.f32 %v2243, %v2761
    %v2826 = vsel %vm2596, %v2794, 0.0
    %v2827 = vsel %vm2596, %v2795, 0.0
    %v2828 = vadd.f32 %v2826, %v2827
    %v2829 = vsel %vm2596, %v2796, 0.0
    %v2830 = vadd.f32 %v2828, %v2829
    %v2831 = vsel %vm2596, %v2797, 0.0
    %v2832 = vadd.f32 %v2830, %v2831
    %v2833 = vsel %vm2596, %v2798, 0.0
    %v2834 = vadd.f32 %v2832, %v2833
    %v2835 = vsel %vm2596, %v2799, 0.0
    %v2836 = vadd.f32 %v2834, %v2835
    %v2837 = vsel %vm2596, %v2800, 0.0
    %v2838 = vadd.f32 %v2836, %v2837
    %v2839 = vsel %vm2596, %v2801, 0.0
    %v2840 = vadd.f32 %v2838, %v2839
    %v2841 = vsel %vm2596, %v2802, 0.0
    %v2842 = vadd.f32 %v2840, %v2841
    %v2843 = vsel %vm2596, %v2803, 0.0
    %v2844 = vadd.f32 %v2842, %v2843
    %v2845 = vsel %vm2596, %v2804, 0.0
    %v2846 = vadd.f32 %v2844, %v2845
    %v2847 = vsel %vm2596, %v2805, 0.0
    %v2848 = vadd.f32 %v2846, %v2847
    %v2849 = vsel %vm2596, %v2806, 0.0
    %v2850 = vadd.f32 %v2848, %v2849
    %v2851 = vsel %vm2596, %v2807, 0.0
    %v2852 = vadd.f32 %v2850, %v2851
    %v2853 = vsel %vm2596, %v2808, 0.0
    %v2854 = vadd.f32 %v2852, %v2853
    %v2855 = vsel %vm2596, %v2809, 0.0
    %v2856 = vadd.f32 %v2854, %v2855
    %v2857 = vsel %vm2596, %v2810, 0.0
    %v2858 = vadd.f32 %v2856, %v2857
    %v2859 = vsel %vm2596, %v2811, 0.0
    %v2860 = vadd.f32 %v2858, %v2859
    %v2861 = vsel %vm2596, %v2812, 0.0
    %v2862 = vadd.f32 %v2860, %v2861
    %v2863 = vsel %vm2596, %v2813, 0.0
    %v2864 = vadd.f32 %v2862, %v2863
    %v2865 = vsel %vm2596, %v2814, 0.0
    %v2866 = vadd.f32 %v2864, %v2865
    %v2867 = vsel %vm2596, %v2815, 0.0
    %v2868 = vadd.f32 %v2866, %v2867
    %v2869 = vsel %vm2596, %v2816, 0.0
    %v2870 = vadd.f32 %v2868, %v2869
    %v2871 = vsel %vm2596, %v2817, 0.0
    %v2872 = vadd.f32 %v2870, %v2871
    %v2873 = vsel %vm2596, %v2818, 0.0
    %v2874 = vadd.f32 %v2872, %v2873
    %v2875 = vsel %vm2596, %v2819, 0.0
    %v2876 = vadd.f32 %v2874, %v2875
    %v2877 = vsel %vm2596, %v2820, 0.0
    %v2878 = vadd.f32 %v2876, %v2877
    %v2879 = vsel %vm2596, %v2821, 0.0
    %v2880 = vadd.f32 %v2878, %v2879
    %v2881 = vsel %vm2596, %v2822, 0.0
    %v2882 = vadd.f32 %v2880, %v2881
    %v2883 = vsel %vm2596, %v2823, 0.0
    %v2884 = vadd.f32 %v2882, %v2883
    %v2885 = vsel %vm2596, %v2824, 0.0
    %v2886 = vadd.f32 %v2884, %v2885
    %v2887 = vsel %vm2596, %v2825, 0.0
    %v2888 = vadd.f32 %v2886, %v2887
    %v2889 = vrot.slane %v2888, 4
    %v2890 = vadd.f32 %v2888, %v2889
    %v2891 = vrot.slane %v2890, 2
    %v2892 = vadd.f32 %v2890, %v2891
    %v2893 = vrot.slane %v2892, 1
    %v2894 = vadd.f32 %v2892, %v2893
    %vm2895 = vcmp.eq.f32.partialorder %v561, 1.0
    %2896 = vset.pattern.permute.xlu0 0
    %2897 = vperm.xlu0 %2896, %v2276
    %v2898 = vpop.permute.xlu0 %2897
    %2899 = vset.pattern.permute.xlu0 0
    %2900 = vperm.xlu0 %2899, %v2277
    %v2901 = vpop.permute.xlu0 %2900
    %2902 = vset.pattern.permute.xlu0 0
    %2903 = vperm.xlu0 %2902, %v2278
    %v2904 = vpop.permute.xlu0 %2903
    %2905 = vset.pattern.permute.xlu0 0
    %2906 = vperm.xlu0 %2905, %v2279
    %v2907 = vpop.permute.xlu0 %2906
    %2908 = vset.pattern.permute.xlu0 0
    %2909 = vperm.xlu0 %2908, %v2280
    %v2910 = vpop.permute.xlu0 %2909
    %2911 = vset.pattern.permute.xlu0 0
    %2912 = vperm.xlu0 %2911, %v2281
    %v2913 = vpop.permute.xlu0 %2912
    %2914 = vset.pattern.permute.xlu0 0
    %2915 = vperm.xlu0 %2914, %v2282
    %v2916 = vpop.permute.xlu0 %2915
    %2917 = vset.pattern.permute.xlu0 0
    %2918 = vperm.xlu0 %2917, %v2283
    %v2919 = vpop.permute.xlu0 %2918
    %2920 = vset.pattern.permute.xlu0 0
    %2921 = vperm.xlu0 %2920, %v2284
    %v2922 = vpop.permute.xlu0 %2921
    %2923 = vset.pattern.permute.xlu0 0
    %2924 = vperm.xlu0 %2923, %v2285
    %v2925 = vpop.permute.xlu0 %2924
    %2926 = vset.pattern.permute.xlu0 0
    %2927 = vperm.xlu0 %2926, %v2286
    %v2928 = vpop.permute.xlu0 %2927
    %2929 = vset.pattern.permute.xlu0 0
    %2930 = vperm.xlu0 %2929, %v2287
    %v2931 = vpop.permute.xlu0 %2930
    %2932 = vset.pattern.permute.xlu0 0
    %2933 = vperm.xlu0 %2932, %v2288
    %v2934 = vpop.permute.xlu0 %2933
    %2935 = vset.pattern.permute.xlu0 0
    %2936 = vperm.xlu0 %2935, %v2289
    %v2937 = vpop.permute.xlu0 %2936
    %2938 = vset.pattern.permute.xlu0 0
    %2939 = vperm.xlu0 %2938, %v2290
    %v2940 = vpop.permute.xlu0 %2939
    %2941 = vset.pattern.permute.xlu0 0
    %2942 = vperm.xlu0 %2941, %v2291
    %v2943 = vpop.permute.xlu0 %2942
    %2944 = vset.pattern.permute.xlu0 0
    %2945 = vperm.xlu0 %2944, %v2292
    %v2946 = vpop.permute.xlu0 %2945
    %2947 = vset.pattern.permute.xlu0 0
    %2948 = vperm.xlu0 %2947, %v2293
    %v2949 = vpop.permute.xlu0 %2948
    %2950 = vset.pattern.permute.xlu0 0
    %2951 = vperm.xlu0 %2950, %v2294
    %v2952 = vpop.permute.xlu0 %2951
    %2953 = vset.pattern.permute.xlu0 0
    %2954 = vperm.xlu0 %2953, %v2295
    %v2955 = vpop.permute.xlu0 %2954
    %2956 = vset.pattern.permute.xlu0 0
    %2957 = vperm.xlu0 %2956, %v2296
    %v2958 = vpop.permute.xlu0 %2957
    %2959 = vset.pattern.permute.xlu0 0
    %2960 = vperm.xlu0 %2959, %v2297
    %v2961 = vpop.permute.xlu0 %2960
    %2962 = vset.pattern.permute.xlu0 0
    %2963 = vperm.xlu0 %2962, %v2298
    %v2964 = vpop.permute.xlu0 %2963
    %2965 = vset.pattern.permute.xlu0 0
    %2966 = vperm.xlu0 %2965, %v2299
    %v2967 = vpop.permute.xlu0 %2966
    %2968 = vset.pattern.permute.xlu0 0
    %2969 = vperm.xlu0 %2968, %v2300
    %v2970 = vpop.permute.xlu0 %2969
    %2971 = vset.pattern.permute.xlu0 0
    %2972 = vperm.xlu0 %2971, %v2301
    %v2973 = vpop.permute.xlu0 %2972
    %2974 = vset.pattern.permute.xlu0 0
    %2975 = vperm.xlu0 %2974, %v2302
    %v2976 = vpop.permute.xlu0 %2975
    %2977 = vset.pattern.permute.xlu0 0
    %2978 = vperm.xlu0 %2977, %v2303
    %v2979 = vpop.permute.xlu0 %2978
    %2980 = vset.pattern.permute.xlu0 0
    %2981 = vperm.xlu0 %2980, %v2304
    %v2982 = vpop.permute.xlu0 %2981
    %2983 = vset.pattern.permute.xlu0 0
    %2984 = vperm.xlu0 %2983, %v2305
    %v2985 = vpop.permute.xlu0 %2984
    %2986 = vset.pattern.permute.xlu0 0
    %2987 = vperm.xlu0 %2986, %v2306
    %v2988 = vpop.permute.xlu0 %2987
    %2989 = vset.pattern.permute.xlu0 0
    %2990 = vperm.xlu0 %2989, %v2307
    %v2991 = vpop.permute.xlu0 %2990
    %vm2992 = vcmp.eq.s32.totalorder %v2898, 1
    %vm2993 = vcmp.eq.s32.totalorder %v2901, 1
    %vm2994 = vcmp.eq.s32.totalorder %v2904, 1
    %vm2995 = vcmp.eq.s32.totalorder %v2907, 1
    %vm2996 = vcmp.eq.s32.totalorder %v2910, 1
    %vm2997 = vcmp.eq.s32.totalorder %v2913, 1
    %vm2998 = vcmp.eq.s32.totalorder %v2916, 1
    %vm2999 = vcmp.eq.s32.totalorder %v2919, 1
    %vm3000 = vcmp.eq.s32.totalorder %v2922, 1
    %vm3001 = vcmp.eq.s32.totalorder %v2925, 1
    %vm3002 = vcmp.eq.s32.totalorder %v2928, 1
    %vm3003 = vcmp.eq.s32.totalorder %v2931, 1
    %vm3004 = vcmp.eq.s32.totalorder %v2934, 1
    %vm3005 = vcmp.eq.s32.totalorder %v2937, 1
    %vm3006 = vcmp.eq.s32.totalorder %v2940, 1
    %vm3007 = vcmp.eq.s32.totalorder %v2943, 1
    %vm3008 = vcmp.eq.s32.totalorder %v2946, 1
    %vm3009 = vcmp.eq.s32.totalorder %v2949, 1
    %vm3010 = vcmp.eq.s32.totalorder %v2952, 1
    %vm3011 = vcmp.eq.s32.totalorder %v2955, 1
    %vm3012 = vcmp.eq.s32.totalorder %v2958, 1
    %vm3013 = vcmp.eq.s32.totalorder %v2961, 1
    %vm3014 = vcmp.eq.s32.totalorder %v2964, 1
    %vm3015 = vcmp.eq.s32.totalorder %v2967, 1
    %vm3016 = vcmp.eq.s32.totalorder %v2970, 1
    %vm3017 = vcmp.eq.s32.totalorder %v2973, 1
    %vm3018 = vcmp.eq.s32.totalorder %v2976, 1
    %vm3019 = vcmp.eq.s32.totalorder %v2979, 1
    %vm3020 = vcmp.eq.s32.totalorder %v2982, 1
    %vm3021 = vcmp.eq.s32.totalorder %v2985, 1
    %vm3022 = vcmp.eq.s32.totalorder %v2988, 1
    %vm3023 = vcmp.eq.s32.totalorder %v2991, 1
    %v3024 = vsel %vm2895, 1, 0
    %v3025 = vperm.slane %v3024, 0
    %v3026 = vperm.slane %v3024, 1
    %vm3027 = vcmp.eq.s32.totalorder %v3025, 1
    %vm3028 = vcmp.eq.s32.totalorder %v3026, 1
    %vm3029 = vmand %vm2992, %vm3027
    %vm3030 = vmand %vm2992, %vm3028
    %vm3031 = vmand %vm2993, %vm3027
    %vm3032 = vmand %vm2993, %vm3028
    %vm3033 = vmand %vm2994, %vm3027
    %vm3034 = vmand %vm2994, %vm3028
    %vm3035 = vmand %vm2995, %vm3027
    %vm3036 = vmand %vm2995, %vm3028
    %vm3037 = vmand %vm2996, %vm3027
    %vm3038 = vmand %vm2996, %vm3028
    %vm3039 = vmand %vm2997, %vm3027
    %vm3040 = vmand %vm2997, %vm3028
    %vm3041 = vmand %vm2998, %vm3027
    %vm3042 = vmand %vm2998, %vm3028
    %vm3043 = vmand %vm2999, %vm3027
    %vm3044 = vmand %vm2999, %vm3028
    %vm3045 = vmand %vm3000, %vm3027
    %vm3046 = vmand %vm3000, %vm3028
    %vm3047 = vmand %vm3001, %vm3027
    %vm3048 = vmand %vm3001, %vm3028
    %vm3049 = vmand %vm3002, %vm3027
    %vm3050 = vmand %vm3002, %vm3028
    %vm3051 = vmand %vm3003, %vm3027
    %vm3052 = vmand %vm3003, %vm3028
    %vm3053 = vmand %vm3004, %vm3027
    %vm3054 = vmand %vm3004, %vm3028
    %vm3055 = vmand %vm3005, %vm3027
    %vm3056 = vmand %vm3005, %vm3028
    %vm3057 = vmand %vm3006, %vm3027
    %vm3058 = vmand %vm3006, %vm3028
    %vm3059 = vmand %vm3007, %vm3027
    %vm3060 = vmand %vm3007, %vm3028
    %vm3061 = vmand %vm3008, %vm3027
    %vm3062 = vmand %vm3008, %vm3028
    %vm3063 = vmand %vm3009, %vm3027
    %vm3064 = vmand %vm3009, %vm3028
    %vm3065 = vmand %vm3010, %vm3027
    %vm3066 = vmand %vm3010, %vm3028
    %vm3067 = vmand %vm3011, %vm3027
    %vm3068 = vmand %vm3011, %vm3028
    %vm3069 = vmand %vm3012, %vm3027
    %vm3070 = vmand %vm3012, %vm3028
    %vm3071 = vmand %vm3013, %vm3027
    %vm3072 = vmand %vm3013, %vm3028
    %vm3073 = vmand %vm3014, %vm3027
    %vm3074 = vmand %vm3014, %vm3028
    %vm3075 = vmand %vm3015, %vm3027
    %vm3076 = vmand %vm3015, %vm3028
    %vm3077 = vmand %vm3016, %vm3027
    %vm3078 = vmand %vm3016, %vm3028
    %vm3079 = vmand %vm3017, %vm3027
    %vm3080 = vmand %vm3017, %vm3028
    %vm3081 = vmand %vm3018, %vm3027
    %vm3082 = vmand %vm3018, %vm3028
    %vm3083 = vmand %vm3019, %vm3027
    %vm3084 = vmand %vm3019, %vm3028
    %vm3085 = vmand %vm3020, %vm3027
    %vm3086 = vmand %vm3020, %vm3028
    %vm3087 = vmand %vm3021, %vm3027
    %vm3088 = vmand %vm3021, %vm3028
    %vm3089 = vmand %vm3022, %vm3027
    %vm3090 = vmand %vm3022, %vm3028
    %vm3091 = vmand %vm3023, %vm3027
    %vm3092 = vmand %vm3023, %vm3028
    %v3093 = vsel %vm3029, %v337, -1e+30
    %v3094 = vsel %vm3030, %v338, -1e+30
    %v3095 = vsel %vm3031, %v339, -1e+30
    %v3096 = vsel %vm3032, %v340, -1e+30
    %v3097 = vsel %vm3033, %v341, -1e+30
    %v3098 = vsel %vm3034, %v342, -1e+30
    %v3099 = vsel %vm3035, %v343, -1e+30
    %v3100 = vsel %vm3036, %v344, -1e+30
    %v3101 = vsel %vm3037, %v345, -1e+30
    %v3102 = vsel %vm3038, %v346, -1e+30
    %v3103 = vsel %vm3039, %v347, -1e+30
    %v3104 = vsel %vm3040, %v348, -1e+30
    %v3105 = vsel %vm3041, %v349, -1e+30
    %v3106 = vsel %vm3042, %v350, -1e+30
    %v3107 = vsel %vm3043, %v351, -1e+30
    %v3108 = vsel %vm3044, %v352, -1e+30
    %v3109 = vsel %vm3045, %v353, -1e+30
    %v3110 = vsel %vm3046, %v354, -1e+30
    %v3111 = vsel %vm3047, %v355, -1e+30
    %v3112 = vsel %vm3048, %v356, -1e+30
    %v3113 = vsel %vm3049, %v357, -1e+30
    %v3114 = vsel %vm3050, %v358, -1e+30
    %v3115 = vsel %vm3051, %v359, -1e+30
    %v3116 = vsel %vm3052, %v360, -1e+30
    %v3117 = vsel %vm3053, %v361, -1e+30
    %v3118 = vsel %vm3054, %v362, -1e+30
    %v3119 = vsel %vm3055, %v363, -1e+30
    %v3120 = vsel %vm3056, %v364, -1e+30
    %v3121 = vsel %vm3057, %v365, -1e+30
    %v3122 = vsel %vm3058, %v366, -1e+30
    %v3123 = vsel %vm3059, %v367, -1e+30
    %v3124 = vsel %vm3060, %v368, -1e+30
    %v3125 = vsel %vm3061, %v369, -1e+30
    %v3126 = vsel %vm3062, %v370, -1e+30
    %v3127 = vsel %vm3063, %v371, -1e+30
    %v3128 = vsel %vm3064, %v372, -1e+30
    %v3129 = vsel %vm3065, %v373, -1e+30
    %v3130 = vsel %vm3066, %v374, -1e+30
    %v3131 = vsel %vm3067, %v375, -1e+30
    %v3132 = vsel %vm3068, %v376, -1e+30
    %v3133 = vsel %vm3069, %v377, -1e+30
    %v3134 = vsel %vm3070, %v378, -1e+30
    %v3135 = vsel %vm3071, %v379, -1e+30
    %v3136 = vsel %vm3072, %v380, -1e+30
    %v3137 = vsel %vm3073, %v381, -1e+30
    %v3138 = vsel %vm3074, %v382, -1e+30
    %v3139 = vsel %vm3075, %v383, -1e+30
    %v3140 = vsel %vm3076, %v384, -1e+30
    %v3141 = vsel %vm3077, %v385, -1e+30
    %v3142 = vsel %vm3078, %v386, -1e+30
    %v3143 = vsel %vm3079, %v387, -1e+30
    %v3144 = vsel %vm3080, %v388, -1e+30
    %v3145 = vsel %vm3081, %v389, -1e+30
    %v3146 = vsel %vm3082, %v390, -1e+30
    %v3147 = vsel %vm3083, %v391, -1e+30
    %v3148 = vsel %vm3084, %v392, -1e+30
    %v3149 = vsel %vm3085, %v393, -1e+30
    %v3150 = vsel %vm3086, %v394, -1e+30
    %v3151 = vsel %vm3087, %v395, -1e+30
    %v3152 = vsel %vm3088, %v396, -1e+30
    %v3153 = vsel %vm3089, %v397, -1e+30
    %v3154 = vsel %vm3090, %v398, -1e+30
    %v3155 = vsel %vm3091, %v399, -1e+30
    %v3156 = vsel %vm3092, %v400, -1e+30
    %v3157 = vmax.f32 %v3093, %v3094
    %3158 = vmax.xlane.f32.xlu0 %v3157
    %v3159 = vpop.xlane.xlu0 %3158
    %v3160 = vmax.f32 %v3095, %v3096
    %3161 = vmax.xlane.f32.xlu0 %v3160
    %v3162 = vpop.xlane.xlu0 %3161
    %v3163 = vmax.f32 %v3097, %v3098
    %3164 = vmax.xlane.f32.xlu0 %v3163
    %v3165 = vpop.xlane.xlu0 %3164
    %v3166 = vmax.f32 %v3099, %v3100
    %3167 = vmax.xlane.f32.xlu0 %v3166
    %v3168 = vpop.xlane.xlu0 %3167
    %v3169 = vmax.f32 %v3101, %v3102
    %3170 = vmax.xlane.f32.xlu0 %v3169
    %v3171 = vpop.xlane.xlu0 %3170
    %v3172 = vmax.f32 %v3103, %v3104
    %3173 = vmax.xlane.f32.xlu0 %v3172
    %v3174 = vpop.xlane.xlu0 %3173
    %v3175 = vmax.f32 %v3105, %v3106
    %3176 = vmax.xlane.f32.xlu0 %v3175
    %v3177 = vpop.xlane.xlu0 %3176
    %v3178 = vmax.f32 %v3107, %v3108
    %3179 = vmax.xlane.f32.xlu0 %v3178
    %v3180 = vpop.xlane.xlu0 %3179
    %v3181 = vmax.f32 %v3109, %v3110
    %3182 = vmax.xlane.f32.xlu0 %v3181
    %v3183 = vpop.xlane.xlu0 %3182
    %v3184 = vmax.f32 %v3111, %v3112
    %3185 = vmax.xlane.f32.xlu0 %v3184
    %v3186 = vpop.xlane.xlu0 %3185
    %v3187 = vmax.f32 %v3113, %v3114
    %3188 = vmax.xlane.f32.xlu0 %v3187
    %v3189 = vpop.xlane.xlu0 %3188
    %v3190 = vmax.f32 %v3115, %v3116
    %3191 = vmax.xlane.f32.xlu0 %v3190
    %v3192 = vpop.xlane.xlu0 %3191
    %v3193 = vmax.f32 %v3117, %v3118
    %3194 = vmax.xlane.f32.xlu0 %v3193
    %v3195 = vpop.xlane.xlu0 %3194
    %v3196 = vmax.f32 %v3119, %v3120
    %3197 = vmax.xlane.f32.xlu0 %v3196
    %v3198 = vpop.xlane.xlu0 %3197
    %v3199 = vmax.f32 %v3121, %v3122
    %3200 = vmax.xlane.f32.xlu0 %v3199
    %v3201 = vpop.xlane.xlu0 %3200
    %v3202 = vmax.f32 %v3123, %v3124
    %3203 = vmax.xlane.f32.xlu0 %v3202
    %v3204 = vpop.xlane.xlu0 %3203
    %v3205 = vmax.f32 %v3125, %v3126
    %3206 = vmax.xlane.f32.xlu0 %v3205
    %v3207 = vpop.xlane.xlu0 %3206
    %v3208 = vmax.f32 %v3127, %v3128
    %3209 = vmax.xlane.f32.xlu0 %v3208
    %v3210 = vpop.xlane.xlu0 %3209
    %v3211 = vmax.f32 %v3129, %v3130
    %3212 = vmax.xlane.f32.xlu0 %v3211
    %v3213 = vpop.xlane.xlu0 %3212
    %v3214 = vmax.f32 %v3131, %v3132
    %3215 = vmax.xlane.f32.xlu0 %v3214
    %v3216 = vpop.xlane.xlu0 %3215
    %v3217 = vmax.f32 %v3133, %v3134
    %3218 = vmax.xlane.f32.xlu0 %v3217
    %v3219 = vpop.xlane.xlu0 %3218
    %v3220 = vmax.f32 %v3135, %v3136
    %3221 = vmax.xlane.f32.xlu0 %v3220
    %v3222 = vpop.xlane.xlu0 %3221
    %v3223 = vmax.f32 %v3137, %v3138
    %3224 = vmax.xlane.f32.xlu0 %v3223
    %v3225 = vpop.xlane.xlu0 %3224
    %v3226 = vmax.f32 %v3139, %v3140
    %3227 = vmax.xlane.f32.xlu0 %v3226
    %v3228 = vpop.xlane.xlu0 %3227
    %v3229 = vmax.f32 %v3141, %v3142
    %3230 = vmax.xlane.f32.xlu0 %v3229
    %v3231 = vpop.xlane.xlu0 %3230
    %v3232 = vmax.f32 %v3143, %v3144
    %3233 = vmax.xlane.f32.xlu0 %v3232
    %v3234 = vpop.xlane.xlu0 %3233
    %v3235 = vmax.f32 %v3145, %v3146
    %3236 = vmax.xlane.f32.xlu0 %v3235
    %v3237 = vpop.xlane.xlu0 %3236
    %v3238 = vmax.f32 %v3147, %v3148
    %3239 = vmax.xlane.f32.xlu0 %v3238
    %v3240 = vpop.xlane.xlu0 %3239
    %v3241 = vmax.f32 %v3149, %v3150
    %3242 = vmax.xlane.f32.xlu0 %v3241
    %v3243 = vpop.xlane.xlu0 %3242
    %v3244 = vmax.f32 %v3151, %v3152
    %3245 = vmax.xlane.f32.xlu0 %v3244
    %v3246 = vpop.xlane.xlu0 %3245
    %v3247 = vmax.f32 %v3153, %v3154
    %3248 = vmax.xlane.f32.xlu0 %v3247
    %v3249 = vpop.xlane.xlu0 %3248
    %v3250 = vmax.f32 %v3155, %v3156
    %3251 = vmax.xlane.f32.xlu0 %v3250
    %v3252 = vpop.xlane.xlu0 %3251
    %v3253 = vmax.f32 %v3159, %v3171
    %v3254 = vmax.f32 %v3162, %v3174
    %v3255 = vmax.f32 %v3165, %v3177
    %v3256 = vmax.f32 %v3168, %v3180
    %v3257 = vmax.f32 %v3253, %v3183
    %v3258 = vmax.f32 %v3254, %v3186
    %v3259 = vmax.f32 %v3255, %v3189
    %v3260 = vmax.f32 %v3256, %v3192
    %v3261 = vmax.f32 %v3257, %v3195
    %v3262 = vmax.f32 %v3258, %v3198
    %v3263 = vmax.f32 %v3259, %v3201
    %v3264 = vmax.f32 %v3260, %v3204
    %v3265 = vmax.f32 %v3261, %v3207
    %v3266 = vmax.f32 %v3262, %v3210
    %v3267 = vmax.f32 %v3263, %v3213
    %v3268 = vmax.f32 %v3264, %v3216
    %v3269 = vmax.f32 %v3265, %v3219
    %v3270 = vmax.f32 %v3266, %v3222
    %v3271 = vmax.f32 %v3267, %v3225
    %v3272 = vmax.f32 %v3268, %v3228
    %v3273 = vmax.f32 %v3269, %v3231
    %v3274 = vmax.f32 %v3270, %v3234
    %v3275 = vmax.f32 %v3271, %v3237
    %v3276 = vmax.f32 %v3272, %v3240
    %v3277 = vmax.f32 %v3273, %v3243
    %v3278 = vmax.f32 %v3274, %v3246
    %v3279 = vmax.f32 %v3275, %v3249
    %v3280 = vmax.f32 %v3276, %v3252
    %v3281 = vmax.f32 %v3277, %v3278
    %v3282 = vmax.f32 %v3279, %v3280
    %v3283 = vmax.f32 %v3281, %v3282
    %v3284 = vrot.slane %v3283, 4
    %v3285 = vmax.f32 %v3283, %v3284
    %v3286 = vrot.slane %v3285, 2
    %v3287 = vmax.f32 %v3285, %v3286
    %v3288 = vrot.slane %v3287, 1
    %v3289 = vmax.f32 %v3287, %v3288
    %vm3290 = vcmp.eq.s32.totalorder %v632, 0
    %3292 = vset.pattern.permute.xlu0 4
    %3293 = vperm.xlu0 %3292, %v2665
    %v3294 = vpop.permute.xlu0 %3293
    %v3296 = vsel %vm3290, %v3294, 0.0
    %vm3297 = vcmp.eq.s32.totalorder %v632, 1
    %3299 = vset.pattern.permute.xlu0 4
    %3300 = vperm.xlu0 %3299, %v2894
    %v3301 = vpop.permute.xlu0 %3300
    %v3303 = vsel %vm3297, %v3301, 0.0
    %v3304 = vadd.f32 %v3296, %v3303
    %vm3305 = vcmp.eq.s32.totalorder %v632, 2
    %v3306 = vsel %vm3305, %v3289, 0.0
    %v3307 = vadd.f32 %v3304, %v3306
    %3308 = vst [vmem:[%s4] sm:$0xff] %v3307
    // Predicated region
    $region26: #{_device_forward.3} parent=1 // pred_check
      _
    $region27: #{_device_forward.3} parent=1 // pred_check_branch
      %3310 = sbr.rel (0) target = $region29
    $region28: #{_device_forward.3} parent=1 // pred_region
      _
    $region29: #{_device_forward.3} parent=1 // pred_fallthru
      _
    // Predicated region
    $region30: #{_device_forward.3} parent=1 // pred_check
      _
    $region31: #{_device_forward.3} parent=1 // pred_check_branch
      %3312 = sbr.rel (0) target = $region33
    $region32: #{_device_forward.3} parent=1 // pred_region
      _
    $region33: #{_device_forward.3} parent=1 // pred_fallthru
      _
    %3313 = vsyncpa [#allocation3], 1
    %3314 = vsyncpa [#allocation5], 1

</llo_original>
